<compile_context>
chip_gen: v5e
topology: v5e:2x2
jax: 0.10.0
libtpu: 0.0.40
codegen_flags: <defaults>
</compile_context>

<pallas_src>
import functools
import math

import jax
import jax.numpy as jnp
from jax.experimental import pallas as pl
from jax.experimental.pallas import tpu as pltpu


# -----------------------------------------------------------------------------
# Fused all-layers encoder kernel.
# Grid: (num_layers,). Activations (N=B*S, C) are carried in the resident
# output block; per-layer weights are streamed via layer-indexed BlockSpecs.
# -----------------------------------------------------------------------------
def _encoder_stack_kernel(x_ref, pos_ref, mb_ref,
                          wqk_ref, bqk_ref, wv_ref, bv_ref,
                          wo_ref, bo_ref,
                          w1_ref, b1_ref, w2_ref, b2_ref,
                          g1_ref, be1_ref, g2_ref, be2_ref,
                          o_ref, *, nhead, batch, ff_chunk):
    layer = pl.program_id(0)
    N, C = o_ref.shape
    S = N // batch
    Dh = C // nhead
    f32 = jnp.float32
    bf16 = jnp.bfloat16

    # Seed the resident carry at the first layer (output block index is
    # constant, so this buffer persists across grid steps).
    @pl.when(layer == 0)
    def _():
        o_ref[...] = x_ref[...]

    x = o_ref[...]                        # (N, C) f32 residual stream (carry)
    pos = pos_ref[...]                    # (N, C) f32 positional embedding
    mb = mb_ref[...]                      # (B, 1, S) f32 additive key-pad bias

    # ---------------- self-attention (q = k = src + pos, v = src) -----------
    xp = (x + pos).astype(bf16)
    xv = x.astype(bf16)

    # Fused Q/K projection: one (N, 2C) matmul; weights pre-transposed, bf16.
    qk = jnp.dot(xp, wqk_ref[0], preferred_element_type=f32) + bqk_ref[0]
    q = qk[:, :C] * (1.0 / math.sqrt(Dh))          # scale q (as PyTorch MHA)
    k = qk[:, C:]
    v = jnp.dot(xv, wv_ref[0], preferred_element_type=f32) + bv_ref[0]

    wo_t = wo_ref[0]                      # (C, C) bf16  == out_proj.weight.T

    per_batch = []
    for b in range(batch):                # static unroll over (small) batch
        r0 = b * S
        qb = q[r0:r0 + S]                 # (S, C) f32
        kb = k[r0:r0 + S]
        vb = v[r0:r0 + S]
        mb_b = mb[b]                      # (1, S)

        acc = None
        for hh in range(nhead):           # accumulate heads into output proj
            h0 = hh * Dh
            qh = qb[:, h0:h0 + Dh].astype(bf16)
            kh = kb[:, h0:h0 + Dh].astype(bf16)
            vh = vb[:, h0:h0 + Dh].astype(bf16)

            # logits = q_h @ k_h^T  (nt-form dot_general: no explicit transpose)
            s = jax.lax.dot_general(qh, kh, (((1,), (1,)), ((), ())),
                                    preferred_element_type=f32)      # (S, S)
            # NOTE: fully-masked rows give a uniform distribution here instead
            # of PyTorch's NaN -- deliberate, documented divergence.
            s = s + mb_b                                             # f32 mask
            s = s - jnp.max(s, axis=-1, keepdims=True)               # f32
            e = jnp.exp(s)
            p = e * pl.reciprocal(jnp.sum(e, axis=-1, keepdims=True),
                                  approx=True)

            ctx = jnp.dot(p.astype(bf16), vh,
                          preferred_element_type=f32)                # (S, Dh)
            # Project this head straight into the C output features: no concat.
            oh = jnp.dot(ctx.astype(bf16), wo_t[h0:h0 + Dh, :],
                         preferred_element_type=f32)                 # (S, C)
            acc = oh if acc is None else acc + oh
        per_batch.append(acc)

    attn = jnp.concatenate(per_batch, axis=0) + bo_ref[0]            # (N, C)

    # ---------------- residual + LayerNorm1 (post-norm) ---------------------
    y = x + attn
    mu = jnp.mean(y, axis=-1, keepdims=True)
    var = jnp.mean((y - mu) ** 2, axis=-1, keepdims=True)
    y = (y - mu) * jax.lax.rsqrt(var + 1e-5) * g1_ref[0] + be1_ref[0]

    # ---------------- feed-forward (relu), FF-chunked ------------------------
    yb = y.astype(bf16)
    FF = w1_ref.shape[-1]
    h2 = jnp.zeros((N, C), f32)
    for c0 in range(0, FF, ff_chunk):
        c1 = min(c0 + ff_chunk, FF)
        h1c = (jnp.dot(yb, w1_ref[0, :, c0:c1], preferred_element_type=f32)
               + b1_ref[0, :, c0:c1])
        h1c = jnp.maximum(h1c, 0.0).astype(bf16)
        h2 = h2 + jnp.dot(h1c, w2_ref[0, c0:c1, :], preferred_element_type=f32)
    h2 = h2 + b2_ref[0]

    # ---------------- residual + LayerNorm2 ----------------------------------
    z = y + h2
    mu2 = jnp.mean(z, axis=-1, keepdims=True)
    var2 = jnp.mean((z - mu2) ** 2, axis=-1, keepdims=True)
    z = (z - mu2) * jax.lax.rsqrt(var2 + 1e-5) * g2_ref[0] + be2_ref[0]

    o_ref[...] = z                        # carry for next layer / final output


# -----------------------------------------------------------------------------
# Parameter construction (PyTorch layout) and kernel-layout preparation.
# -----------------------------------------------------------------------------
def _xavier(key, shape):
    fan_out, fan_in = shape
    limit = math.sqrt(6.0 / (fan_in + fan_out))
    return jax.random.uniform(key, shape, jnp.float32, -limit, limit)


def make_params(key, d_model, nhead, num_layers, dim_feedforward):
    """Per-layer params in PyTorch layout (xavier for dim>1, zero biases)."""
    params = []
    for _ in range(num_layers):
        key, *ks = jax.random.split(key, 5)
        params.append({
            "in_w": _xavier(ks[0], (3 * d_model, d_model)),
            "in_b": jnp.zeros((1, 3 * d_model), jnp.float32),
            "out_w": _xavier(ks[1], (d_model, d_model)),
            "out_b": jnp.zeros((1, d_model), jnp.float32),
            "l1_w": _xavier(ks[2], (dim_feedforward, d_model)),
            "l1_b": jnp.zeros((1, dim_feedforward), jnp.float32),
            "l2_w": _xavier(ks[3], (d_model, dim_feedforward)),
            "l2_b": jnp.zeros((1, d_model), jnp.float32),
            "n1_g": jnp.ones((1, d_model), jnp.float32),
            "n1_b": jnp.zeros((1, d_model), jnp.float32),
            "n2_g": jnp.ones((1, d_model), jnp.float32),
            "n2_b": jnp.zeros((1, d_model), jnp.float32),
        })
    return params


def prepare_params(params, d_model):
    """Stack layers and pre-transpose weights into kernel layout (bf16 weights,
    f32 biases / norm params). No `.T` is ever executed inside the kernel."""
    C = d_model
    bf16, f32 = jnp.bfloat16, jnp.float32
    w_qk = jnp.stack([p["in_w"][:2 * C, :].T for p in params]).astype(bf16)   # (L,C,2C)
    b_qk = jnp.stack([p["in_b"][:, :2 * C] for p in params]).astype(f32)      # (L,1,2C)
    w_v = jnp.stack([p["in_w"][2 * C:, :].T for p in params]).astype(bf16)    # (L,C,C)
    b_v = jnp.stack([p["in_b"][:, 2 * C:] for p in params]).astype(f32)       # (L,1,C)
    w_o = jnp.stack([p["out_w"].T for p in params]).astype(bf16)              # (L,C,C)
    b_o = jnp.stack([p["out_b"] for p in params]).astype(f32)                 # (L,1,C)
    w1 = jnp.stack([p["l1_w"].T for p in params]).astype(bf16)                # (L,C,FF)
    b1 = jnp.stack([p["l1_b"] for p in params]).astype(f32)                   # (L,1,FF)
    w2 = jnp.stack([p["l2_w"].T for p in params]).astype(bf16)                # (L,FF,C)
    b2 = jnp.stack([p["l2_b"] for p in params]).astype(f32)                   # (L,1,C)
    g1 = jnp.stack([p["n1_g"] for p in params]).astype(f32)
    be1 = jnp.stack([p["n1_b"] for p in params]).astype(f32)
    g2 = jnp.stack([p["n2_g"] for p in params]).astype(f32)
    be2 = jnp.stack([p["n2_b"] for p in params]).astype(f32)
    return (w_qk, b_qk, w_v, b_v, w_o, b_o, w1, b1, w2, b2, g1, be1, g2, be2)


# -----------------------------------------------------------------------------
# Full module forward: TransformerEncoderOnly.forward(src, mask, pos_embed)
# -----------------------------------------------------------------------------
def transformer_encoder_only(src_nchw, mask_bhw, pos_nchw, stacked, nhead,
                             *, ff_chunk=512):
    bs, c, h, w = src_nchw.shape
    S = h * w
    N = bs * S
    L = stacked[0].shape[0]

    # src.flatten(2).permute(2,0,1) -> (S,B,C) in torch; here a lane-dense
    # (B*S, C) slab (tokens on sublanes, d_model on lanes).
    x = jnp.transpose(src_nchw.reshape(bs, c, S), (0, 2, 1)).reshape(N, c)
    x = x.astype(jnp.float32)
    pos = jnp.transpose(pos_nchw.reshape(bs, c, S), (0, 2, 1)).reshape(N, c)
    pos = pos.astype(jnp.float32)

    if mask_bhw is not None:
        mflat = mask_bhw.reshape(bs, S)
        # key_padding_mask: True -> key ignored (large negative bias, f32)
        mbias = jnp.where(mflat, jnp.float32(-1e9),
                          jnp.float32(0.0)).reshape(bs, 1, S)
    else:
        mbias = jnp.zeros((bs, 1, S), jnp.float32)

    def const_spec(shape):
        nd = len(shape)
        return pl.BlockSpec(tuple(shape), lambda l, _n=nd: (0,) * _n)

    def layer_spec(shape):
        nd = len(shape)
        return pl.BlockSpec((1,) + tuple(shape[1:]),
                            lambda l, _n=nd: (l,) + (0,) * (_n - 1))

    in_specs = [const_spec(x.shape), const_spec(pos.shape),
                const_spec(mbias.shape)]
    in_specs += [layer_spec(a.shape) for a in stacked]

    kernel = functools.partial(_encoder_stack_kernel, nhead=nhead, batch=bs,
                               ff_chunk=ff_chunk)

    out_flat = pl.pallas_call(
        kernel,
        out_shape=jax.ShapeDtypeStruct((N, c), jnp.float32),
        grid=(L,),
        in_specs=in_specs,
        out_specs=const_spec((N, c)),
        compiler_params=pltpu.CompilerParams(
            dimension_semantics=("arbitrary",),      # layers carry state
            vmem_limit_bytes=64 * 1024 * 1024),
    )(x, pos, mbias, *stacked)

    # memory.permute(1, 2, 0).view(bs, c, h, w)
    return jnp.transpose(out_flat.reshape(bs, S, c), (0, 2, 1)).reshape(bs, c, h, w)


if __name__ == "__main__":
    # Small, forward-consistent shapes (channels must equal d_model).
    # d_model=128 keeps the last dim lane-dense; Dh=32 matches real DETR heads.
    d_model, nhead, num_layers, dim_ff = 128, 4, 2, 256
    bs, h, w = 2, 8, 8

    root = jax.random.PRNGKey(0)
    k_src, k_pos, k_par = jax.random.split(root, 3)

    src = jax.random.normal(k_src, (bs, d_model, h, w), jnp.float32)
    pos_embed = jax.random.normal(k_pos, (bs, d_model, h, w), jnp.float32)
    # Key padding mask (bs, h, w): True = padded token. Pad last column of batch 1.
    mask = jnp.zeros((bs, h, w), jnp.bool_).at[1, :, -1].set(True)

    params = make_params(k_par, d_model, nhead, num_layers, dim_ff)
    stacked = prepare_params(params, d_model)

    out = transformer_encoder_only(src, mask, pos_embed, stacked, nhead)
    out = jax.block_until_ready(out)
    assert out.shape == (bs, d_model, h, w)
    assert bool(jnp.all(jnp.isfinite(out)))
    print("KERNEL_OK")
</pallas_src>

<mosaic_0001>
module attributes {stable_mosaic.version = 11 : i64} {
  func.func @_encoder_stack_kernel(%arg0: i32, %arg1: memref<128x128xf32, #tpu.memory_space<vmem>>, %arg2: memref<128x128xf32, #tpu.memory_space<vmem>>, %arg3: memref<2x1x64xf32, #tpu.memory_space<vmem>>, %arg4: memref<1x128x256xbf16, #tpu.memory_space<vmem>>, %arg5: memref<1x1x256xf32, #tpu.memory_space<vmem>>, %arg6: memref<1x128x128xbf16, #tpu.memory_space<vmem>>, %arg7: memref<1x1x128xf32, #tpu.memory_space<vmem>>, %arg8: memref<1x128x128xbf16, #tpu.memory_space<vmem>>, %arg9: memref<1x1x128xf32, #tpu.memory_space<vmem>>, %arg10: memref<1x128x256xbf16, #tpu.memory_space<vmem>>, %arg11: memref<1x1x256xf32, #tpu.memory_space<vmem>>, %arg12: memref<1x256x128xbf16, #tpu.memory_space<vmem>>, %arg13: memref<1x1x128xf32, #tpu.memory_space<vmem>>, %arg14: memref<1x1x128xf32, #tpu.memory_space<vmem>>, %arg15: memref<1x1x128xf32, #tpu.memory_space<vmem>>, %arg16: memref<1x1x128xf32, #tpu.memory_space<vmem>>, %arg17: memref<1x1x128xf32, #tpu.memory_space<vmem>>, %arg18: memref<128x128xf32, #tpu.memory_space<vmem>>) attributes {dimension_semantics = [#tpu.dimension_semantics<arbitrary>], iteration_bounds = array<i64: 2>, scalar_prefetch = 0 : i64, scratch_operands = 0 : i64, tpu.core_type = #tpu.core_type<tc>, window_params = [{pipeline_mode = #tpu.pipeline_mode<synchronous>, transform_indices = @transform_0, window_bounds = array<i64: 128, 128>}, {pipeline_mode = #tpu.pipeline_mode<synchronous>, transform_indices = @transform_1, window_bounds = array<i64: 128, 128>}, {pipeline_mode = #tpu.pipeline_mode<synchronous>, transform_indices = @transform_2, window_bounds = array<i64: 2, 1, 64>}, {transform_indices = @transform_3, window_bounds = array<i64: 1, 128, 256>}, {transform_indices = @transform_4, window_bounds = array<i64: 1, 1, 256>}, {transform_indices = @transform_5, window_bounds = array<i64: 1, 128, 128>}, {transform_indices = @transform_6, window_bounds = array<i64: 1, 1, 128>}, {transform_indices = @transform_7, window_bounds = array<i64: 1, 128, 128>}, {transform_indices = @transform_8, window_bounds = array<i64: 1, 1, 128>}, {transform_indices = @transform_9, window_bounds = array<i64: 1, 128, 256>}, {transform_indices = @transform_10, window_bounds = array<i64: 1, 1, 256>}, {transform_indices = @transform_11, window_bounds = array<i64: 1, 256, 128>}, {transform_indices = @transform_12, window_bounds = array<i64: 1, 1, 128>}, {transform_indices = @transform_13, window_bounds = array<i64: 1, 1, 128>}, {transform_indices = @transform_14, window_bounds = array<i64: 1, 1, 128>}, {transform_indices = @transform_15, window_bounds = array<i64: 1, 1, 128>}, {transform_indices = @transform_16, window_bounds = array<i64: 1, 1, 128>}, {pipeline_mode = #tpu.pipeline_mode<synchronous>, transform_indices = @transform_17, window_bounds = array<i64: 128, 128>}]} {
    %c0_i32 = arith.constant 0 : i32
    %0 = arith.cmpi eq, %arg0, %c0_i32 : i32
    %1 = arith.extui %0 : i1 to i32
    %c0_i32_0 = arith.constant 0 : i32
    %2 = arith.cmpi ne, %1, %c0_i32_0 : i32
    scf.if %2 {
      %c0_107 = arith.constant 0 : index
      %c0_108 = arith.constant 0 : index
      %317 = vector.load %arg1[%c0_107, %c0_108] : memref<128x128xf32, #tpu.memory_space<vmem>>, vector<128x128xf32>
      %c0_109 = arith.constant 0 : index
      %c0_110 = arith.constant 0 : index
      %318 = vector.load %arg18[%c0_109, %c0_110] : memref<128x128xf32, #tpu.memory_space<vmem>>, vector<128x128xf32>
      tpu.vector_store %arg18[%c0_109, %c0_110], %317 {strides = array<i32>} : memref<128x128xf32, #tpu.memory_space<vmem>>, vector<128x128xf32>,
    } else {
    }
    %c0 = arith.constant 0 : index
    %c0_1 = arith.constant 0 : index
    %3 = vector.load %arg18[%c0, %c0_1] : memref<128x128xf32, #tpu.memory_space<vmem>>, vector<128x128xf32>
    %c0_2 = arith.constant 0 : index
    %c0_3 = arith.constant 0 : index
    %4 = vector.load %arg2[%c0_2, %c0_3] : memref<128x128xf32, #tpu.memory_space<vmem>>, vector<128x128xf32>
    %c0_4 = arith.constant 0 : index
    %c0_5 = arith.constant 0 : index
    %c0_6 = arith.constant 0 : index
    %5 = vector.load %arg3[%c0_4, %c0_5, %c0_6] : memref<2x1x64xf32, #tpu.memory_space<vmem>>, vector<2x1x64xf32>
    %6 = arith.addf %3, %4 : vector<128x128xf32>
    %7 = arith.truncf %6 : vector<128x128xf32> to vector<128x128xbf16>
    %8 = arith.truncf %3 : vector<128x128xf32> to vector<128x128xbf16>
    %c0_7 = arith.constant 0 : index
    %c0_8 = arith.constant 0 : index
    %c0_9 = arith.constant 0 : index
    %9 = vector.load %arg4[%c0_7, %c0_8, %c0_9] : memref<1x128x256xbf16, #tpu.memory_space<vmem>>, vector<1x128x256xbf16>
    %10 = vector.shape_cast %9 : vector<1x128x256xbf16> to vector<128x256xbf16>
    %cst = arith.constant dense<0.000000e+00> : vector<128x256xf32>
    %11 = tpu.matmul %7, %10, %cst {dimension_numbers = #tpu.dot_dimension_numbers<[1], [0], [0], [1], [0, 0, 1, 1], [], []>} : vector<128x128xbf16>, vector<128x256xbf16>, vector<128x256xf32> -> vector<128x256xf32>
    %c0_10 = arith.constant 0 : index
    %c0_11 = arith.constant 0 : index
    %c0_12 = arith.constant 0 : index
    %12 = vector.load %arg5[%c0_10, %c0_11, %c0_12] : memref<1x1x256xf32, #tpu.memory_space<vmem>>, vector<1x1x256xf32>
    %13 = vector.shape_cast %12 : vector<1x1x256xf32> to vector<1x256xf32>
    %14 = vector.broadcast %13 : vector<1x256xf32> to vector<128x256xf32>
    %15 = arith.addf %11, %14 : vector<128x256xf32>
    %16 = vector.extract_strided_slice %15 {offsets = [0, 0], sizes = [128, 128], strides = [1, 1]} : vector<128x256xf32> to vector<128x128xf32>
    %cst_13 = arith.constant 0.176776692 : f32
    %17 = vector.broadcast %cst_13 : f32 to vector<128x128xf32>
    %18 = arith.mulf %16, %17 : vector<128x128xf32>
    %19 = vector.extract_strided_slice %15 {offsets = [0, 128], sizes = [128, 128], strides = [1, 1]} : vector<128x256xf32> to vector<128x128xf32>
    %c0_14 = arith.constant 0 : index
    %c0_15 = arith.constant 0 : index
    %c0_16 = arith.constant 0 : index
    %20 = vector.load %arg6[%c0_14, %c0_15, %c0_16] : memref<1x128x128xbf16, #tpu.memory_space<vmem>>, vector<1x128x128xbf16>
    %21 = vector.shape_cast %20 : vector<1x128x128xbf16> to vector<128x128xbf16>
    %cst_17 = arith.constant dense<0.000000e+00> : vector<128x128xf32>
    %22 = tpu.matmul %8, %21, %cst_17 {dimension_numbers = #tpu.dot_dimension_numbers<[1], [0], [0], [1], [0, 0, 1, 1], [], []>} : vector<128x128xbf16>, vector<128x128xbf16>, vector<128x128xf32> -> vector<128x128xf32>
    %c0_18 = arith.constant 0 : index
    %c0_19 = arith.constant 0 : index
    %c0_20 = arith.constant 0 : index
    %23 = vector.load %arg7[%c0_18, %c0_19, %c0_20] : memref<1x1x128xf32, #tpu.memory_space<vmem>>, vector<1x1x128xf32>
    %24 = vector.shape_cast %23 : vector<1x1x128xf32> to vector<1x128xf32>
    %25 = vector.broadcast %24 : vector<1x128xf32> to vector<128x128xf32>
    %26 = arith.addf %22, %25 : vector<128x128xf32>
    %c0_21 = arith.constant 0 : index
    %c0_22 = arith.constant 0 : index
    %c0_23 = arith.constant 0 : index
    %27 = vector.load %arg8[%c0_21, %c0_22, %c0_23] : memref<1x128x128xbf16, #tpu.memory_space<vmem>>, vector<1x128x128xbf16>
    %28 = vector.shape_cast %27 : vector<1x128x128xbf16> to vector<128x128xbf16>
    %29 = vector.extract_strided_slice %18 {offsets = [0, 0], sizes = [64, 128], strides = [1, 1]} : vector<128x128xf32> to vector<64x128xf32>
    %30 = vector.extract_strided_slice %19 {offsets = [0, 0], sizes = [64, 128], strides = [1, 1]} : vector<128x128xf32> to vector<64x128xf32>
    %31 = vector.extract_strided_slice %26 {offsets = [0, 0], sizes = [64, 128], strides = [1, 1]} : vector<128x128xf32> to vector<64x128xf32>
    %32 = vector.extract_strided_slice %5 {offsets = [0, 0, 0], sizes = [1, 1, 64], strides = [1, 1, 1]} : vector<2x1x64xf32> to vector<1x1x64xf32>
    %33 = vector.shape_cast %32 : vector<1x1x64xf32> to vector<1x64xf32>
    %34 = vector.extract_strided_slice %29 {offsets = [0, 0], sizes = [64, 32], strides = [1, 1]} : vector<64x128xf32> to vector<64x32xf32>
    %35 = arith.truncf %34 : vector<64x32xf32> to vector<64x32xbf16>
    %36 = vector.extract_strided_slice %30 {offsets = [0, 0], sizes = [64, 32], strides = [1, 1]} : vector<64x128xf32> to vector<64x32xf32>
    %37 = arith.truncf %36 : vector<64x32xf32> to vector<64x32xbf16>
    %38 = vector.extract_strided_slice %31 {offsets = [0, 0], sizes = [64, 32], strides = [1, 1]} : vector<64x128xf32> to vector<64x32xf32>
    %39 = arith.truncf %38 : vector<64x32xf32> to vector<64x32xbf16>
    %cst_24 = arith.constant dense<0.000000e+00> : vector<64x64xf32>
    %40 = tpu.matmul %35, %37, %cst_24 {dimension_numbers = #tpu.dot_dimension_numbers<[1], [1], [0], [0], [0, 0, 1, 0], [], []>} : vector<64x32xbf16>, vector<64x32xbf16>, vector<64x64xf32> -> vector<64x64xf32>
    %41 = vector.broadcast %33 : vector<1x64xf32> to vector<64x64xf32>
    %42 = arith.addf %40, %41 : vector<64x64xf32>
    %cst_25 = arith.constant dense<0xFF800000> : vector<64xf32>
    %43 = vector.multi_reduction <maximumf>, %42, %cst_25 [1] : vector<64x64xf32> to vector<64xf32>
    %44 = vector.shape_cast %43 : vector<64xf32> to vector<64x1xf32>
    %45 = vector.broadcast %44 : vector<64x1xf32> to vector<64x64xf32>
    %46 = arith.subf %42, %45 : vector<64x64xf32>
    %47 = math.exp %46 : vector<64x64xf32>
    %cst_26 = arith.constant dense<0.000000e+00> : vector<64xf32>
    %48 = vector.multi_reduction <add>, %47, %cst_26 [1] : vector<64x64xf32> to vector<64xf32>
    %49 = vector.shape_cast %48 : vector<64xf32> to vector<64x1xf32>
    %50 = tpu.reciprocal %49 {approx = true} : vector<64x1xf32> -> vector<64x1xf32>
    %51 = vector.broadcast %50 : vector<64x1xf32> to vector<64x64xf32>
    %52 = arith.mulf %47, %51 : vector<64x64xf32>
    %53 = arith.truncf %52 : vector<64x64xf32> to vector<64x64xbf16>
    %cst_27 = arith.constant dense<0.000000e+00> : vector<64x32xf32>
    %54 = tpu.matmul %53, %39, %cst_27 {dimension_numbers = #tpu.dot_dimension_numbers<[1], [0], [0], [1], [0, 0, 1, 1], [], []>} : vector<64x64xbf16>, vector<64x32xbf16>, vector<64x32xf32> -> vector<64x32xf32>
    %55 = arith.truncf %54 : vector<64x32xf32> to vector<64x32xbf16>
    %56 = vector.extract_strided_slice %28 {offsets = [0, 0], sizes = [32, 128], strides = [1, 1]} : vector<128x128xbf16> to vector<32x128xbf16>
    %cst_28 = arith.constant dense<0.000000e+00> : vector<64x128xf32>
    %57 = tpu.matmul %55, %56, %cst_28 {dimension_numbers = #tpu.dot_dimension_numbers<[1], [0], [0], [1], [0, 0, 1, 1], [], []>} : vector<64x32xbf16>, vector<32x128xbf16>, vector<64x128xf32> -> vector<64x128xf32>
    %58 = vector.extract_strided_slice %29 {offsets = [0, 32], sizes = [64, 32], strides = [1, 1]} : vector<64x128xf32> to vector<64x32xf32>
    %59 = arith.truncf %58 : vector<64x32xf32> to vector<64x32xbf16>
    %60 = vector.extract_strided_slice %30 {offsets = [0, 32], sizes = [64, 32], strides = [1, 1]} : vector<64x128xf32> to vector<64x32xf32>
    %61 = arith.truncf %60 : vector<64x32xf32> to vector<64x32xbf16>
    %62 = vector.extract_strided_slice %31 {offsets = [0, 32], sizes = [64, 32], strides = [1, 1]} : vector<64x128xf32> to vector<64x32xf32>
    %63 = arith.truncf %62 : vector<64x32xf32> to vector<64x32xbf16>
    %cst_29 = arith.constant dense<0.000000e+00> : vector<64x64xf32>
    %64 = tpu.matmul %59, %61, %cst_29 {dimension_numbers = #tpu.dot_dimension_numbers<[1], [1], [0], [0], [0, 0, 1, 0], [], []>} : vector<64x32xbf16>, vector<64x32xbf16>, vector<64x64xf32> -> vector<64x64xf32>
    %65 = vector.broadcast %33 : vector<1x64xf32> to vector<64x64xf32>
    %66 = arith.addf %64, %65 : vector<64x64xf32>
    %cst_30 = arith.constant dense<0xFF800000> : vector<64xf32>
    %67 = vector.multi_reduction <maximumf>, %66, %cst_30 [1] : vector<64x64xf32> to vector<64xf32>
    %68 = vector.shape_cast %67 : vector<64xf32> to vector<64x1xf32>
    %69 = vector.broadcast %68 : vector<64x1xf32> to vector<64x64xf32>
    %70 = arith.subf %66, %69 : vector<64x64xf32>
    %71 = math.exp %70 : vector<64x64xf32>
    %cst_31 = arith.constant dense<0.000000e+00> : vector<64xf32>
    %72 = vector.multi_reduction <add>, %71, %cst_31 [1] : vector<64x64xf32> to vector<64xf32>
    %73 = vector.shape_cast %72 : vector<64xf32> to vector<64x1xf32>
    %74 = tpu.reciprocal %73 {approx = true} : vector<64x1xf32> -> vector<64x1xf32>
    %75 = vector.broadcast %74 : vector<64x1xf32> to vector<64x64xf32>
    %76 = arith.mulf %71, %75 : vector<64x64xf32>
    %77 = arith.truncf %76 : vector<64x64xf32> to vector<64x64xbf16>
    %cst_32 = arith.constant dense<0.000000e+00> : vector<64x32xf32>
    %78 = tpu.matmul %77, %63, %cst_32 {dimension_numbers = #tpu.dot_dimension_numbers<[1], [0], [0], [1], [0, 0, 1, 1], [], []>} : vector<64x64xbf16>, vector<64x32xbf16>, vector<64x32xf32> -> vector<64x32xf32>
    %79 = arith.truncf %78 : vector<64x32xf32> to vector<64x32xbf16>
    %80 = vector.extract_strided_slice %28 {offsets = [32, 0], sizes = [32, 128], strides = [1, 1]} : vector<128x128xbf16> to vector<32x128xbf16>
    %cst_33 = arith.constant dense<0.000000e+00> : vector<64x128xf32>
    %81 = tpu.matmul %79, %80, %cst_33 {dimension_numbers = #tpu.dot_dimension_numbers<[1], [0], [0], [1], [0, 0, 1, 1], [], []>} : vector<64x32xbf16>, vector<32x128xbf16>, vector<64x128xf32> -> vector<64x128xf32>
    %82 = arith.addf %57, %81 : vector<64x128xf32>
    %83 = vector.extract_strided_slice %29 {offsets = [0, 64], sizes = [64, 32], strides = [1, 1]} : vector<64x128xf32> to vector<64x32xf32>
    %84 = arith.truncf %83 : vector<64x32xf32> to vector<64x32xbf16>
    %85 = vector.extract_strided_slice %30 {offsets = [0, 64], sizes = [64, 32], strides = [1, 1]} : vector<64x128xf32> to vector<64x32xf32>
    %86 = arith.truncf %85 : vector<64x32xf32> to vector<64x32xbf16>
    %87 = vector.extract_strided_slice %31 {offsets = [0, 64], sizes = [64, 32], strides = [1, 1]} : vector<64x128xf32> to vector<64x32xf32>
    %88 = arith.truncf %87 : vector<64x32xf32> to vector<64x32xbf16>
    %cst_34 = arith.constant dense<0.000000e+00> : vector<64x64xf32>
    %89 = tpu.matmul %84, %86, %cst_34 {dimension_numbers = #tpu.dot_dimension_numbers<[1], [1], [0], [0], [0, 0, 1, 0], [], []>} : vector<64x32xbf16>, vector<64x32xbf16>, vector<64x64xf32> -> vector<64x64xf32>
    %90 = vector.broadcast %33 : vector<1x64xf32> to vector<64x64xf32>
    %91 = arith.addf %89, %90 : vector<64x64xf32>
    %cst_35 = arith.constant dense<0xFF800000> : vector<64xf32>
    %92 = vector.multi_reduction <maximumf>, %91, %cst_35 [1] : vector<64x64xf32> to vector<64xf32>
    %93 = vector.shape_cast %92 : vector<64xf32> to vector<64x1xf32>
    %94 = vector.broadcast %93 : vector<64x1xf32> to vector<64x64xf32>
    %95 = arith.subf %91, %94 : vector<64x64xf32>
    %96 = math.exp %95 : vector<64x64xf32>
    %cst_36 = arith.constant dense<0.000000e+00> : vector<64xf32>
    %97 = vector.multi_reduction <add>, %96, %cst_36 [1] : vector<64x64xf32> to vector<64xf32>
    %98 = vector.shape_cast %97 : vector<64xf32> to vector<64x1xf32>
    %99 = tpu.reciprocal %98 {approx = true} : vector<64x1xf32> -> vector<64x1xf32>
    %100 = vector.broadcast %99 : vector<64x1xf32> to vector<64x64xf32>
    %101 = arith.mulf %96, %100 : vector<64x64xf32>
    %102 = arith.truncf %101 : vector<64x64xf32> to vector<64x64xbf16>
    %cst_37 = arith.constant dense<0.000000e+00> : vector<64x32xf32>
    %103 = tpu.matmul %102, %88, %cst_37 {dimension_numbers = #tpu.dot_dimension_numbers<[1], [0], [0], [1], [0, 0, 1, 1], [], []>} : vector<64x64xbf16>, vector<64x32xbf16>, vector<64x32xf32> -> vector<64x32xf32>
    %104 = arith.truncf %103 : vector<64x32xf32> to vector<64x32xbf16>
    %105 = vector.extract_strided_slice %28 {offsets = [64, 0], sizes = [32, 128], strides = [1, 1]} : vector<128x128xbf16> to vector<32x128xbf16>
    %cst_38 = arith.constant dense<0.000000e+00> : vector<64x128xf32>
    %106 = tpu.matmul %104, %105, %cst_38 {dimension_numbers = #tpu.dot_dimension_numbers<[1], [0], [0], [1], [0, 0, 1, 1], [], []>} : vector<64x32xbf16>, vector<32x128xbf16>, vector<64x128xf32> -> vector<64x128xf32>
    %107 = arith.addf %82, %106 : vector<64x128xf32>
    %108 = vector.extract_strided_slice %29 {offsets = [0, 96], sizes = [64, 32], strides = [1, 1]} : vector<64x128xf32> to vector<64x32xf32>
    %109 = arith.truncf %108 : vector<64x32xf32> to vector<64x32xbf16>
    %110 = vector.extract_strided_slice %30 {offsets = [0, 96], sizes = [64, 32], strides = [1, 1]} : vector<64x128xf32> to vector<64x32xf32>
    %111 = arith.truncf %110 : vector<64x32xf32> to vector<64x32xbf16>
    %112 = vector.extract_strided_slice %31 {offsets = [0, 96], sizes = [64, 32], strides = [1, 1]} : vector<64x128xf32> to vector<64x32xf32>
    %113 = arith.truncf %112 : vector<64x32xf32> to vector<64x32xbf16>
    %cst_39 = arith.constant dense<0.000000e+00> : vector<64x64xf32>
    %114 = tpu.matmul %109, %111, %cst_39 {dimension_numbers = #tpu.dot_dimension_numbers<[1], [1], [0], [0], [0, 0, 1, 0], [], []>} : vector<64x32xbf16>, vector<64x32xbf16>, vector<64x64xf32> -> vector<64x64xf32>
    %115 = vector.broadcast %33 : vector<1x64xf32> to vector<64x64xf32>
    %116 = arith.addf %114, %115 : vector<64x64xf32>
    %cst_40 = arith.constant dense<0xFF800000> : vector<64xf32>
    %117 = vector.multi_reduction <maximumf>, %116, %cst_40 [1] : vector<64x64xf32> to vector<64xf32>
    %118 = vector.shape_cast %117 : vector<64xf32> to vector<64x1xf32>
    %119 = vector.broadcast %118 : vector<64x1xf32> to vector<64x64xf32>
    %120 = arith.subf %116, %119 : vector<64x64xf32>
    %121 = math.exp %120 : vector<64x64xf32>
    %cst_41 = arith.constant dense<0.000000e+00> : vector<64xf32>
    %122 = vector.multi_reduction <add>, %121, %cst_41 [1] : vector<64x64xf32> to vector<64xf32>
    %123 = vector.shape_cast %122 : vector<64xf32> to vector<64x1xf32>
    %124 = tpu.reciprocal %123 {approx = true} : vector<64x1xf32> -> vector<64x1xf32>
    %125 = vector.broadcast %124 : vector<64x1xf32> to vector<64x64xf32>
    %126 = arith.mulf %121, %125 : vector<64x64xf32>
    %127 = arith.truncf %126 : vector<64x64xf32> to vector<64x64xbf16>
    %cst_42 = arith.constant dense<0.000000e+00> : vector<64x32xf32>
    %128 = tpu.matmul %127, %113, %cst_42 {dimension_numbers = #tpu.dot_dimension_numbers<[1], [0], [0], [1], [0, 0, 1, 1], [], []>} : vector<64x64xbf16>, vector<64x32xbf16>, vector<64x32xf32> -> vector<64x32xf32>
    %129 = arith.truncf %128 : vector<64x32xf32> to vector<64x32xbf16>
    %130 = vector.extract_strided_slice %28 {offsets = [96, 0], sizes = [32, 128], strides = [1, 1]} : vector<128x128xbf16> to vector<32x128xbf16>
    %cst_43 = arith.constant dense<0.000000e+00> : vector<64x128xf32>
    %131 = tpu.matmul %129, %130, %cst_43 {dimension_numbers = #tpu.dot_dimension_numbers<[1], [0], [0], [1], [0, 0, 1, 1], [], []>} : vector<64x32xbf16>, vector<32x128xbf16>, vector<64x128xf32> -> vector<64x128xf32>
    %132 = arith.addf %107, %131 : vector<64x128xf32>
    %133 = vector.extract_strided_slice %18 {offsets = [64, 0], sizes = [64, 128], strides = [1, 1]} : vector<128x128xf32> to vector<64x128xf32>
    %134 = vector.extract_strided_slice %19 {offsets = [64, 0], sizes = [64, 128], strides = [1, 1]} : vector<128x128xf32> to vector<64x128xf32>
    %135 = vector.extract_strided_slice %26 {offsets = [64, 0], sizes = [64, 128], strides = [1, 1]} : vector<128x128xf32> to vector<64x128xf32>
    %136 = vector.extract_strided_slice %5 {offsets = [1, 0, 0], sizes = [1, 1, 64], strides = [1, 1, 1]} : vector<2x1x64xf32> to vector<1x1x64xf32>
    %137 = vector.shape_cast %136 : vector<1x1x64xf32> to vector<1x64xf32>
    %138 = vector.extract_strided_slice %133 {offsets = [0, 0], sizes = [64, 32], strides = [1, 1]} : vector<64x128xf32> to vector<64x32xf32>
    %139 = arith.truncf %138 : vector<64x32xf32> to vector<64x32xbf16>
    %140 = vector.extract_strided_slice %134 {offsets = [0, 0], sizes = [64, 32], strides = [1, 1]} : vector<64x128xf32> to vector<64x32xf32>
    %141 = arith.truncf %140 : vector<64x32xf32> to vector<64x32xbf16>
    %142 = vector.extract_strided_slice %135 {offsets = [0, 0], sizes = [64, 32], strides = [1, 1]} : vector<64x128xf32> to vector<64x32xf32>
    %143 = arith.truncf %142 : vector<64x32xf32> to vector<64x32xbf16>
    %cst_44 = arith.constant dense<0.000000e+00> : vector<64x64xf32>
    %144 = tpu.matmul %139, %141, %cst_44 {dimension_numbers = #tpu.dot_dimension_numbers<[1], [1], [0], [0], [0, 0, 1, 0], [], []>} : vector<64x32xbf16>, vector<64x32xbf16>, vector<64x64xf32> -> vector<64x64xf32>
    %145 = vector.broadcast %137 : vector<1x64xf32> to vector<64x64xf32>
    %146 = arith.addf %144, %145 : vector<64x64xf32>
    %cst_45 = arith.constant dense<0xFF800000> : vector<64xf32>
    %147 = vector.multi_reduction <maximumf>, %146, %cst_45 [1] : vector<64x64xf32> to vector<64xf32>
    %148 = vector.shape_cast %147 : vector<64xf32> to vector<64x1xf32>
    %149 = vector.broadcast %148 : vector<64x1xf32> to vector<64x64xf32>
    %150 = arith.subf %146, %149 : vector<64x64xf32>
    %151 = math.exp %150 : vector<64x64xf32>
    %cst_46 = arith.constant dense<0.000000e+00> : vector<64xf32>
    %152 = vector.multi_reduction <add>, %151, %cst_46 [1] : vector<64x64xf32> to vector<64xf32>
    %153 = vector.shape_cast %152 : vector<64xf32> to vector<64x1xf32>
    %154 = tpu.reciprocal %153 {approx = true} : vector<64x1xf32> -> vector<64x1xf32>
    %155 = vector.broadcast %154 : vector<64x1xf32> to vector<64x64xf32>
    %156 = arith.mulf %151, %155 : vector<64x64xf32>
    %157 = arith.truncf %156 : vector<64x64xf32> to vector<64x64xbf16>
    %cst_47 = arith.constant dense<0.000000e+00> : vector<64x32xf32>
    %158 = tpu.matmul %157, %143, %cst_47 {dimension_numbers = #tpu.dot_dimension_numbers<[1], [0], [0], [1], [0, 0, 1, 1], [], []>} : vector<64x64xbf16>, vector<64x32xbf16>, vector<64x32xf32> -> vector<64x32xf32>
    %159 = arith.truncf %158 : vector<64x32xf32> to vector<64x32xbf16>
    %160 = vector.extract_strided_slice %28 {offsets = [0, 0], sizes = [32, 128], strides = [1, 1]} : vector<128x128xbf16> to vector<32x128xbf16>
    %cst_48 = arith.constant dense<0.000000e+00> : vector<64x128xf32>
    %161 = tpu.matmul %159, %160, %cst_48 {dimension_numbers = #tpu.dot_dimension_numbers<[1], [0], [0], [1], [0, 0, 1, 1], [], []>} : vector<64x32xbf16>, vector<32x128xbf16>, vector<64x128xf32> -> vector<64x128xf32>
    %162 = vector.extract_strided_slice %133 {offsets = [0, 32], sizes = [64, 32], strides = [1, 1]} : vector<64x128xf32> to vector<64x32xf32>
    %163 = arith.truncf %162 : vector<64x32xf32> to vector<64x32xbf16>
    %164 = vector.extract_strided_slice %134 {offsets = [0, 32], sizes = [64, 32], strides = [1, 1]} : vector<64x128xf32> to vector<64x32xf32>
    %165 = arith.truncf %164 : vector<64x32xf32> to vector<64x32xbf16>
    %166 = vector.extract_strided_slice %135 {offsets = [0, 32], sizes = [64, 32], strides = [1, 1]} : vector<64x128xf32> to vector<64x32xf32>
    %167 = arith.truncf %166 : vector<64x32xf32> to vector<64x32xbf16>
    %cst_49 = arith.constant dense<0.000000e+00> : vector<64x64xf32>
    %168 = tpu.matmul %163, %165, %cst_49 {dimension_numbers = #tpu.dot_dimension_numbers<[1], [1], [0], [0], [0, 0, 1, 0], [], []>} : vector<64x32xbf16>, vector<64x32xbf16>, vector<64x64xf32> -> vector<64x64xf32>
    %169 = vector.broadcast %137 : vector<1x64xf32> to vector<64x64xf32>
    %170 = arith.addf %168, %169 : vector<64x64xf32>
    %cst_50 = arith.constant dense<0xFF800000> : vector<64xf32>
    %171 = vector.multi_reduction <maximumf>, %170, %cst_50 [1] : vector<64x64xf32> to vector<64xf32>
    %172 = vector.shape_cast %171 : vector<64xf32> to vector<64x1xf32>
    %173 = vector.broadcast %172 : vector<64x1xf32> to vector<64x64xf32>
    %174 = arith.subf %170, %173 : vector<64x64xf32>
    %175 = math.exp %174 : vector<64x64xf32>
    %cst_51 = arith.constant dense<0.000000e+00> : vector<64xf32>
    %176 = vector.multi_reduction <add>, %175, %cst_51 [1] : vector<64x64xf32> to vector<64xf32>
    %177 = vector.shape_cast %176 : vector<64xf32> to vector<64x1xf32>
    %178 = tpu.reciprocal %177 {approx = true} : vector<64x1xf32> -> vector<64x1xf32>
    %179 = vector.broadcast %178 : vector<64x1xf32> to vector<64x64xf32>
    %180 = arith.mulf %175, %179 : vector<64x64xf32>
    %181 = arith.truncf %180 : vector<64x64xf32> to vector<64x64xbf16>
    %cst_52 = arith.constant dense<0.000000e+00> : vector<64x32xf32>
    %182 = tpu.matmul %181, %167, %cst_52 {dimension_numbers = #tpu.dot_dimension_numbers<[1], [0], [0], [1], [0, 0, 1, 1], [], []>} : vector<64x64xbf16>, vector<64x32xbf16>, vector<64x32xf32> -> vector<64x32xf32>
    %183 = arith.truncf %182 : vector<64x32xf32> to vector<64x32xbf16>
    %184 = vector.extract_strided_slice %28 {offsets = [32, 0], sizes = [32, 128], strides = [1, 1]} : vector<128x128xbf16> to vector<32x128xbf16>
    %cst_53 = arith.constant dense<0.000000e+00> : vector<64x128xf32>
    %185 = tpu.matmul %183, %184, %cst_53 {dimension_numbers = #tpu.dot_dimension_numbers<[1], [0], [0], [1], [0, 0, 1, 1], [], []>} : vector<64x32xbf16>, vector<32x128xbf16>, vector<64x128xf32> -> vector<64x128xf32>
    %186 = arith.addf %161, %185 : vector<64x128xf32>
    %187 = vector.extract_strided_slice %133 {offsets = [0, 64], sizes = [64, 32], strides = [1, 1]} : vector<64x128xf32> to vector<64x32xf32>
    %188 = arith.truncf %187 : vector<64x32xf32> to vector<64x32xbf16>
    %189 = vector.extract_strided_slice %134 {offsets = [0, 64], sizes = [64, 32], strides = [1, 1]} : vector<64x128xf32> to vector<64x32xf32>
    %190 = arith.truncf %189 : vector<64x32xf32> to vector<64x32xbf16>
    %191 = vector.extract_strided_slice %135 {offsets = [0, 64], sizes = [64, 32], strides = [1, 1]} : vector<64x128xf32> to vector<64x32xf32>
    %192 = arith.truncf %191 : vector<64x32xf32> to vector<64x32xbf16>
    %cst_54 = arith.constant dense<0.000000e+00> : vector<64x64xf32>
    %193 = tpu.matmul %188, %190, %cst_54 {dimension_numbers = #tpu.dot_dimension_numbers<[1], [1], [0], [0], [0, 0, 1, 0], [], []>} : vector<64x32xbf16>, vector<64x32xbf16>, vector<64x64xf32> -> vector<64x64xf32>
    %194 = vector.broadcast %137 : vector<1x64xf32> to vector<64x64xf32>
    %195 = arith.addf %193, %194 : vector<64x64xf32>
    %cst_55 = arith.constant dense<0xFF800000> : vector<64xf32>
    %196 = vector.multi_reduction <maximumf>, %195, %cst_55 [1] : vector<64x64xf32> to vector<64xf32>
    %197 = vector.shape_cast %196 : vector<64xf32> to vector<64x1xf32>
    %198 = vector.broadcast %197 : vector<64x1xf32> to vector<64x64xf32>
    %199 = arith.subf %195, %198 : vector<64x64xf32>
    %200 = math.exp %199 : vector<64x64xf32>
    %cst_56 = arith.constant dense<0.000000e+00> : vector<64xf32>
    %201 = vector.multi_reduction <add>, %200, %cst_56 [1] : vector<64x64xf32> to vector<64xf32>
    %202 = vector.shape_cast %201 : vector<64xf32> to vector<64x1xf32>
    %203 = tpu.reciprocal %202 {approx = true} : vector<64x1xf32> -> vector<64x1xf32>
    %204 = vector.broadcast %203 : vector<64x1xf32> to vector<64x64xf32>
    %205 = arith.mulf %200, %204 : vector<64x64xf32>
    %206 = arith.truncf %205 : vector<64x64xf32> to vector<64x64xbf16>
    %cst_57 = arith.constant dense<0.000000e+00> : vector<64x32xf32>
    %207 = tpu.matmul %206, %192, %cst_57 {dimension_numbers = #tpu.dot_dimension_numbers<[1], [0], [0], [1], [0, 0, 1, 1], [], []>} : vector<64x64xbf16>, vector<64x32xbf16>, vector<64x32xf32> -> vector<64x32xf32>
    %208 = arith.truncf %207 : vector<64x32xf32> to vector<64x32xbf16>
    %209 = vector.extract_strided_slice %28 {offsets = [64, 0], sizes = [32, 128], strides = [1, 1]} : vector<128x128xbf16> to vector<32x128xbf16>
    %cst_58 = arith.constant dense<0.000000e+00> : vector<64x128xf32>
    %210 = tpu.matmul %208, %209, %cst_58 {dimension_numbers = #tpu.dot_dimension_numbers<[1], [0], [0], [1], [0, 0, 1, 1], [], []>} : vector<64x32xbf16>, vector<32x128xbf16>, vector<64x128xf32> -> vector<64x128xf32>
    %211 = arith.addf %186, %210 : vector<64x128xf32>
    %212 = vector.extract_strided_slice %133 {offsets = [0, 96], sizes = [64, 32], strides = [1, 1]} : vector<64x128xf32> to vector<64x32xf32>
    %213 = arith.truncf %212 : vector<64x32xf32> to vector<64x32xbf16>
    %214 = vector.extract_strided_slice %134 {offsets = [0, 96], sizes = [64, 32], strides = [1, 1]} : vector<64x128xf32> to vector<64x32xf32>
    %215 = arith.truncf %214 : vector<64x32xf32> to vector<64x32xbf16>
    %216 = vector.extract_strided_slice %135 {offsets = [0, 96], sizes = [64, 32], strides = [1, 1]} : vector<64x128xf32> to vector<64x32xf32>
    %217 = arith.truncf %216 : vector<64x32xf32> to vector<64x32xbf16>
    %cst_59 = arith.constant dense<0.000000e+00> : vector<64x64xf32>
    %218 = tpu.matmul %213, %215, %cst_59 {dimension_numbers = #tpu.dot_dimension_numbers<[1], [1], [0], [0], [0, 0, 1, 0], [], []>} : vector<64x32xbf16>, vector<64x32xbf16>, vector<64x64xf32> -> vector<64x64xf32>
    %219 = vector.broadcast %137 : vector<1x64xf32> to vector<64x64xf32>
    %220 = arith.addf %218, %219 : vector<64x64xf32>
    %cst_60 = arith.constant dense<0xFF800000> : vector<64xf32>
    %221 = vector.multi_reduction <maximumf>, %220, %cst_60 [1] : vector<64x64xf32> to vector<64xf32>
    %222 = vector.shape_cast %221 : vector<64xf32> to vector<64x1xf32>
    %223 = vector.broadcast %222 : vector<64x1xf32> to vector<64x64xf32>
    %224 = arith.subf %220, %223 : vector<64x64xf32>
    %225 = math.exp %224 : vector<64x64xf32>
    %cst_61 = arith.constant dense<0.000000e+00> : vector<64xf32>
    %226 = vector.multi_reduction <add>, %225, %cst_61 [1] : vector<64x64xf32> to vector<64xf32>
    %227 = vector.shape_cast %226 : vector<64xf32> to vector<64x1xf32>
    %228 = tpu.reciprocal %227 {approx = true} : vector<64x1xf32> -> vector<64x1xf32>
    %229 = vector.broadcast %228 : vector<64x1xf32> to vector<64x64xf32>
    %230 = arith.mulf %225, %229 : vector<64x64xf32>
    %231 = arith.truncf %230 : vector<64x64xf32> to vector<64x64xbf16>
    %cst_62 = arith.constant dense<0.000000e+00> : vector<64x32xf32>
    %232 = tpu.matmul %231, %217, %cst_62 {dimension_numbers = #tpu.dot_dimension_numbers<[1], [0], [0], [1], [0, 0, 1, 1], [], []>} : vector<64x64xbf16>, vector<64x32xbf16>, vector<64x32xf32> -> vector<64x32xf32>
    %233 = arith.truncf %232 : vector<64x32xf32> to vector<64x32xbf16>
    %234 = vector.extract_strided_slice %28 {offsets = [96, 0], sizes = [32, 128], strides = [1, 1]} : vector<128x128xbf16> to vector<32x128xbf16>
    %cst_63 = arith.constant dense<0.000000e+00> : vector<64x128xf32>
    %235 = tpu.matmul %233, %234, %cst_63 {dimension_numbers = #tpu.dot_dimension_numbers<[1], [0], [0], [1], [0, 0, 1, 1], [], []>} : vector<64x32xbf16>, vector<32x128xbf16>, vector<64x128xf32> -> vector<64x128xf32>
    %236 = arith.addf %211, %235 : vector<64x128xf32>
    %237 = tpu.concatenate %132, %236 in 0 : vector<64x128xf32>, vector<64x128xf32> -> vector<128x128xf32>
    %c0_64 = arith.constant 0 : index
    %c0_65 = arith.constant 0 : index
    %c0_66 = arith.constant 0 : index
    %238 = vector.load %arg9[%c0_64, %c0_65, %c0_66] : memref<1x1x128xf32, #tpu.memory_space<vmem>>, vector<1x1x128xf32>
    %239 = vector.shape_cast %238 : vector<1x1x128xf32> to vector<1x128xf32>
    %240 = vector.broadcast %239 : vector<1x128xf32> to vector<128x128xf32>
    %241 = arith.addf %237, %240 : vector<128x128xf32>
    %242 = arith.addf %3, %241 : vector<128x128xf32>
    %cst_67 = arith.constant dense<0.000000e+00> : vector<128xf32>
    %243 = vector.multi_reduction <add>, %242, %cst_67 [1] : vector<128x128xf32> to vector<128xf32>
    %244 = vector.shape_cast %243 : vector<128xf32> to vector<128x1xf32>
    %cst_68 = arith.constant 1.280000e+02 : f32
    %245 = vector.broadcast %cst_68 : f32 to vector<128x1xf32>
    %246 = arith.divf %244, %245 : vector<128x1xf32>
    %247 = vector.broadcast %246 : vector<128x1xf32> to vector<128x128xf32>
    %248 = arith.subf %242, %247 : vector<128x128xf32>
    %249 = arith.mulf %248, %248 : vector<128x128xf32>
    %cst_69 = arith.constant dense<0.000000e+00> : vector<128xf32>
    %250 = vector.multi_reduction <add>, %249, %cst_69 [1] : vector<128x128xf32> to vector<128xf32>
    %251 = vector.shape_cast %250 : vector<128xf32> to vector<128x1xf32>
    %cst_70 = arith.constant 1.280000e+02 : f32
    %252 = vector.broadcast %cst_70 : f32 to vector<128x1xf32>
    %253 = arith.divf %251, %252 : vector<128x1xf32>
    %254 = vector.broadcast %246 : vector<128x1xf32> to vector<128x128xf32>
    %255 = arith.subf %242, %254 : vector<128x128xf32>
    %cst_71 = arith.constant 9.99999974E-6 : f32
    %256 = vector.broadcast %cst_71 : f32 to vector<128x1xf32>
    %257 = arith.addf %253, %256 : vector<128x1xf32>
    %258 = math.rsqrt %257 : vector<128x1xf32>
    %259 = vector.broadcast %258 : vector<128x1xf32> to vector<128x128xf32>
    %260 = arith.mulf %255, %259 : vector<128x128xf32>
    %c0_72 = arith.constant 0 : index
    %c0_73 = arith.constant 0 : index
    %c0_74 = arith.constant 0 : index
    %261 = vector.load %arg14[%c0_72, %c0_73, %c0_74] : memref<1x1x128xf32, #tpu.memory_space<vmem>>, vector<1x1x128xf32>
    %262 = vector.shape_cast %261 : vector<1x1x128xf32> to vector<1x128xf32>
    %263 = vector.broadcast %262 : vector<1x128xf32> to vector<128x128xf32>
    %264 = arith.mulf %260, %263 : vector<128x128xf32>
    %c0_75 = arith.constant 0 : index
    %c0_76 = arith.constant 0 : index
    %c0_77 = arith.constant 0 : index
    %265 = vector.load %arg15[%c0_75, %c0_76, %c0_77] : memref<1x1x128xf32, #tpu.memory_space<vmem>>, vector<1x1x128xf32>
    %266 = vector.shape_cast %265 : vector<1x1x128xf32> to vector<1x128xf32>
    %267 = vector.broadcast %266 : vector<1x128xf32> to vector<128x128xf32>
    %268 = arith.addf %264, %267 : vector<128x128xf32>
    %269 = arith.truncf %268 : vector<128x128xf32> to vector<128x128xbf16>
    %cst_78 = arith.constant 0.000000e+00 : f32
    %270 = vector.broadcast %cst_78 : f32 to vector<128x128xf32>
    %c0_79 = arith.constant 0 : index
    %c0_80 = arith.constant 0 : index
    %c0_81 = arith.constant 0 : index
    %271 = vector.load %arg10[%c0_79, %c0_80, %c0_81] : memref<1x128x256xbf16, #tpu.memory_space<vmem>>, vector<1x128x256xbf16>
    %272 = vector.shape_cast %271 : vector<1x128x256xbf16> to vector<128x256xbf16>
    %cst_82 = arith.constant dense<0.000000e+00> : vector<128x256xf32>
    %273 = tpu.matmul %269, %272, %cst_82 {dimension_numbers = #tpu.dot_dimension_numbers<[1], [0], [0], [1], [0, 0, 1, 1], [], []>} : vector<128x128xbf16>, vector<128x256xbf16>, vector<128x256xf32> -> vector<128x256xf32>
    %c0_83 = arith.constant 0 : index
    %c0_84 = arith.constant 0 : index
    %c0_85 = arith.constant 0 : index
    %274 = vector.load %arg11[%c0_83, %c0_84, %c0_85] : memref<1x1x256xf32, #tpu.memory_space<vmem>>, vector<1x1x256xf32>
    %275 = vector.shape_cast %274 : vector<1x1x256xf32> to vector<1x256xf32>
    %276 = vector.broadcast %275 : vector<1x256xf32> to vector<128x256xf32>
    %277 = arith.addf %273, %276 : vector<128x256xf32>
    %cst_86 = arith.constant 0.000000e+00 : f32
    %278 = vector.broadcast %cst_86 : f32 to vector<128x256xf32>
    %279 = arith.maximumf %277, %278 : vector<128x256xf32>
    %280 = arith.truncf %279 : vector<128x256xf32> to vector<128x256xbf16>
    %c0_87 = arith.constant 0 : index
    %c0_88 = arith.constant 0 : index
    %c0_89 = arith.constant 0 : index
    %281 = vector.load %arg12[%c0_87, %c0_88, %c0_89] : memref<1x256x128xbf16, #tpu.memory_space<vmem>>, vector<1x256x128xbf16>
    %282 = vector.shape_cast %281 : vector<1x256x128xbf16> to vector<256x128xbf16>
    %cst_90 = arith.constant dense<0.000000e+00> : vector<128x128xf32>
    %283 = tpu.matmul %280, %282, %cst_90 {dimension_numbers = #tpu.dot_dimension_numbers<[1], [0], [0], [1], [0, 0, 1, 1], [], []>} : vector<128x256xbf16>, vector<256x128xbf16>, vector<128x128xf32> -> vector<128x128xf32>
    %284 = arith.addf %270, %283 : vector<128x128xf32>
    %c0_91 = arith.constant 0 : index
    %c0_92 = arith.constant 0 : index
    %c0_93 = arith.constant 0 : index
    %285 = vector.load %arg13[%c0_91, %c0_92, %c0_93] : memref<1x1x128xf32, #tpu.memory_space<vmem>>, vector<1x1x128xf32>
    %286 = vector.shape_cast %285 : vector<1x1x128xf32> to vector<1x128xf32>
    %287 = vector.broadcast %286 : vector<1x128xf32> to vector<128x128xf32>
    %288 = arith.addf %284, %287 : vector<128x128xf32>
    %289 = arith.addf %268, %288 : vector<128x128xf32>
    %cst_94 = arith.constant dense<0.000000e+00> : vector<128xf32>
    %290 = vector.multi_reduction <add>, %289, %cst_94 [1] : vector<128x128xf32> to vector<128xf32>
    %291 = vector.shape_cast %290 : vector<128xf32> to vector<128x1xf32>
    %cst_95 = arith.constant 1.280000e+02 : f32
    %292 = vector.broadcast %cst_95 : f32 to vector<128x1xf32>
    %293 = arith.divf %291, %292 : vector<128x1xf32>
    %294 = vector.broadcast %293 : vector<128x1xf32> to vector<128x128xf32>
    %295 = arith.subf %289, %294 : vector<128x128xf32>
    %296 = arith.mulf %295, %295 : vector<128x128xf32>
    %cst_96 = arith.constant dense<0.000000e+00> : vector<128xf32>
    %297 = vector.multi_reduction <add>, %296, %cst_96 [1] : vector<128x128xf32> to vector<128xf32>
    %298 = vector.shape_cast %297 : vector<128xf32> to vector<128x1xf32>
    %cst_97 = arith.constant 1.280000e+02 : f32
    %299 = vector.broadcast %cst_97 : f32 to vector<128x1xf32>
    %300 = arith.divf %298, %299 : vector<128x1xf32>
    %301 = vector.broadcast %293 : vector<128x1xf32> to vector<128x128xf32>
    %302 = arith.subf %289, %301 : vector<128x128xf32>
    %cst_98 = arith.constant 9.99999974E-6 : f32
    %303 = vector.broadcast %cst_98 : f32 to vector<128x1xf32>
    %304 = arith.addf %300, %303 : vector<128x1xf32>
    %305 = math.rsqrt %304 : vector<128x1xf32>
    %306 = vector.broadcast %305 : vector<128x1xf32> to vector<128x128xf32>
    %307 = arith.mulf %302, %306 : vector<128x128xf32>
    %c0_99 = arith.constant 0 : index
    %c0_100 = arith.constant 0 : index
    %c0_101 = arith.constant 0 : index
    %308 = vector.load %arg16[%c0_99, %c0_100, %c0_101] : memref<1x1x128xf32, #tpu.memory_space<vmem>>, vector<1x1x128xf32>
    %309 = vector.shape_cast %308 : vector<1x1x128xf32> to vector<1x128xf32>
    %310 = vector.broadcast %309 : vector<1x128xf32> to vector<128x128xf32>
    %311 = arith.mulf %307, %310 : vector<128x128xf32>
    %c0_102 = arith.constant 0 : index
    %c0_103 = arith.constant 0 : index
    %c0_104 = arith.constant 0 : index
    %312 = vector.load %arg17[%c0_102, %c0_103, %c0_104] : memref<1x1x128xf32, #tpu.memory_space<vmem>>, vector<1x1x128xf32>
    %313 = vector.shape_cast %312 : vector<1x1x128xf32> to vector<1x128xf32>
    %314 = vector.broadcast %313 : vector<1x128xf32> to vector<128x128xf32>
    %315 = arith.addf %311, %314 : vector<128x128xf32>
    %c0_105 = arith.constant 0 : index
    %c0_106 = arith.constant 0 : index
    %316 = vector.load %arg18[%c0_105, %c0_106] : memref<128x128xf32, #tpu.memory_space<vmem>>, vector<128x128xf32>
    tpu.vector_store %arg18[%c0_105, %c0_106], %315 {strides = array<i32>} : memref<128x128xf32, #tpu.memory_space<vmem>>, vector<128x128xf32>,
    return
  }
  func.func @transform_0(%arg0: i32) -> (i32, i32) {
    %c0_i32 = arith.constant 0 : i32
    %c0_i32_0 = arith.constant 0 : i32
    %c0_i32_1 = arith.constant 0 : i32
    return %c0_i32, %c0_i32_0 : i32, i32
  }
  func.func @transform_1(%arg0: i32) -> (i32, i32) {
    %c0_i32 = arith.constant 0 : i32
    %c0_i32_0 = arith.constant 0 : i32
    %c0_i32_1 = arith.constant 0 : i32
    return %c0_i32, %c0_i32_0 : i32, i32
  }
  func.func @transform_2(%arg0: i32) -> (i32, i32, i32) {
    %c0_i32 = arith.constant 0 : i32
    %c0_i32_0 = arith.constant 0 : i32
    %c0_i32_1 = arith.constant 0 : i32
    %c0_i32_2 = arith.constant 0 : i32
    return %c0_i32, %c0_i32_0, %c0_i32_1 : i32, i32, i32
  }
  func.func @transform_3(%arg0: i32) -> (i32, i32, i32) {
    %c0_i32 = arith.constant 0 : i32
    %c0_i32_0 = arith.constant 0 : i32
    %c0_i32_1 = arith.constant 0 : i32
    return %arg0, %c0_i32, %c0_i32_0 : i32, i32, i32
  }
  func.func @transform_4(%arg0: i32) -> (i32, i32, i32) {
    %c0_i32 = arith.constant 0 : i32
    %c0_i32_0 = arith.constant 0 : i32
    %c0_i32_1 = arith.constant 0 : i32
    return %arg0, %c0_i32, %c0_i32_0 : i32, i32, i32
  }
  func.func @transform_5(%arg0: i32) -> (i32, i32, i32) {
    %c0_i32 = arith.constant 0 : i32
    %c0_i32_0 = arith.constant 0 : i32
    %c0_i32_1 = arith.constant 0 : i32
    return %arg0, %c0_i32, %c0_i32_0 : i32, i32, i32
  }
  func.func @transform_6(%arg0: i32) -> (i32, i32, i32) {
    %c0_i32 = arith.constant 0 : i32
    %c0_i32_0 = arith.constant 0 : i32
    %c0_i32_1 = arith.constant 0 : i32
    return %arg0, %c0_i32, %c0_i32_0 : i32, i32, i32
  }
  func.func @transform_7(%arg0: i32) -> (i32, i32, i32) {
    %c0_i32 = arith.constant 0 : i32
    %c0_i32_0 = arith.constant 0 : i32
    %c0_i32_1 = arith.constant 0 : i32
    return %arg0, %c0_i32, %c0_i32_0 : i32, i32, i32
  }
  func.func @transform_8(%arg0: i32) -> (i32, i32, i32) {
    %c0_i32 = arith.constant 0 : i32
    %c0_i32_0 = arith.constant 0 : i32
    %c0_i32_1 = arith.constant 0 : i32
    return %arg0, %c0_i32, %c0_i32_0 : i32, i32, i32
  }
  func.func @transform_9(%arg0: i32) -> (i32, i32, i32) {
    %c0_i32 = arith.constant 0 : i32
    %c0_i32_0 = arith.constant 0 : i32
    %c0_i32_1 = arith.constant 0 : i32
    return %arg0, %c0_i32, %c0_i32_0 : i32, i32, i32
  }
  func.func @transform_10(%arg0: i32) -> (i32, i32, i32) {
    %c0_i32 = arith.constant 0 : i32
    %c0_i32_0 = arith.constant 0 : i32
    %c0_i32_1 = arith.constant 0 : i32
    return %arg0, %c0_i32, %c0_i32_0 : i32, i32, i32
  }
  func.func @transform_11(%arg0: i32) -> (i32, i32, i32) {
    %c0_i32 = arith.constant 0 : i32
    %c0_i32_0 = arith.constant 0 : i32
    %c0_i32_1 = arith.constant 0 : i32
    return %arg0, %c0_i32, %c0_i32_0 : i32, i32, i32
  }
  func.func @transform_12(%arg0: i32) -> (i32, i32, i32) {
    %c0_i32 = arith.constant 0 : i32
    %c0_i32_0 = arith.constant 0 : i32
    %c0_i32_1 = arith.constant 0 : i32
    return %arg0, %c0_i32, %c0_i32_0 : i32, i32, i32
  }
  func.func @transform_13(%arg0: i32) -> (i32, i32, i32) {
    %c0_i32 = arith.constant 0 : i32
    %c0_i32_0 = arith.constant 0 : i32
    %c0_i32_1 = arith.constant 0 : i32
    return %arg0, %c0_i32, %c0_i32_0 : i32, i32, i32
  }
  func.func @transform_14(%arg0: i32) -> (i32, i32, i32) {
    %c0_i32 = arith.constant 0 : i32
    %c0_i32_0 = arith.constant 0 : i32
    %c0_i32_1 = arith.constant 0 : i32
    return %arg0, %c0_i32, %c0_i32_0 : i32, i32, i32
  }
  func.func @transform_15(%arg0: i32) -> (i32, i32, i32) {
    %c0_i32 = arith.constant 0 : i32
    %c0_i32_0 = arith.constant 0 : i32
    %c0_i32_1 = arith.constant 0 : i32
    return %arg0, %c0_i32, %c0_i32_0 : i32, i32, i32
  }
  func.func @transform_16(%arg0: i32) -> (i32, i32, i32) {
    %c0_i32 = arith.constant 0 : i32
    %c0_i32_0 = arith.constant 0 : i32
    %c0_i32_1 = arith.constant 0 : i32
    return %arg0, %c0_i32, %c0_i32_0 : i32, i32, i32
  }
  func.func @transform_17(%arg0: i32) -> (i32, i32) {
    %c0_i32 = arith.constant 0 : i32
    %c0_i32_0 = arith.constant 0 : i32
    %c0_i32_1 = arith.constant 0 : i32
    return %c0_i32, %c0_i32_0 : i32, i32
  }
}

</mosaic_0001>

<llo_original>
// kernel: tpu_custom_call.1
$region0: #{tpu_custom_call.1}
  #allocation0 [shape = 'u32[]', space=smem, size = 0x4, offset = 0x4, fixed_abs, tag = 'smem constant byte address 0x4 - core index']
  #allocation1 [shape = 'u32[72,128]{1,0:T(1,128)}', space=vmem, size = 0x9000, scoped, tag = 'internal scratch']
  %s0 = inlined_call_operand.hbm [shape: f32[128,128], index: 0, kind: input, shape index: {}]
  %s1 = inlined_call_operand.hbm [shape: f32[128,128], index: 1, kind: input, shape index: {}]
  %s2 = inlined_call_operand.hbm [shape: f32[2,1,64], index: 2, kind: input, shape index: {}]
  %s3 = inlined_call_operand.hbm [shape: bf16[2,128,256], index: 3, kind: input, shape index: {}]
  %s4 = inlined_call_operand.hbm [shape: f32[2,1,256], index: 4, kind: input, shape index: {}]
  %s5 = inlined_call_operand.hbm [shape: bf16[2,128,128], index: 5, kind: input, shape index: {}]
  %s6 = inlined_call_operand.vmem [shape: f32[2,1,128], index: 6, kind: input, shape index: {}]
  %s7 = inlined_call_operand.hbm [shape: bf16[2,128,128], index: 7, kind: input, shape index: {}]
  %s8 = inlined_call_operand.hbm [shape: f32[2,1,128], index: 8, kind: input, shape index: {}]
  %s9 = inlined_call_operand.hbm [shape: bf16[2,128,256], index: 9, kind: input, shape index: {}]
  %s10 = inlined_call_operand.vmem [shape: f32[2,1,256], index: 10, kind: input, shape index: {}]
  %s11 = inlined_call_operand.hbm [shape: bf16[2,256,128], index: 11, kind: input, shape index: {}]
  %s12 = inlined_call_operand.vmem [shape: f32[2,1,128], index: 12, kind: input, shape index: {}]
  %s13 = inlined_call_operand.vmem [shape: f32[2,1,128], index: 13, kind: input, shape index: {}]
  %s14 = inlined_call_operand.vmem [shape: f32[2,1,128], index: 14, kind: input, shape index: {}]
  %s15 = inlined_call_operand.vmem [shape: f32[2,1,128], index: 15, kind: input, shape index: {}]
  %s16 = inlined_call_operand.hbm [shape: f32[2,1,128], index: 16, kind: input, shape index: {}]
  %s17 = inlined_call_operand.hbm [shape: f32[128,128], index: 17, kind: output, shape index: {}]
  %s18 = sld [smem:[#allocation0]]
  $region149: #{tpu_custom_call.1} parent=0
    _
  %s20 = ssub.s32 1, %s18
  %s21 = scalar_select 0, %s20, %s18
  $region1: #{tpu_custom_call.1} parent=0
    #allocation2 [shape = 'u8[65536]{0}', space=vmem, size = 0x10000, scoped, tag = 'input window, operand 0, single buffered']
    #allocation3 [shape = 's32[2]{0}', space=sflag, size = 0x8, scoped, tag = 'scoped memory for tpu_custom_call.1']
    #allocation4 [shape = 's32[2]{0}', space=sflag, size = 0x8, scoped, tag = 'scoped memory for tpu_custom_call.1']
    #allocation5 [shape = 'u8[65536]{0}', space=vmem, size = 0x10000, scoped, tag = 'input window, operand 1, single buffered']
    #allocation6 [shape = 's32[1]{0}', space=sflag, size = 0x4, scoped, tag = 'scoped memory for tpu_custom_call.1']
    #allocation7 [shape = 'u8[1024]{0}', space=vmem, size = 0x400, scoped, tag = 'input window, operand 2, single buffered']
    #allocation8 [shape = 'u8[131072]{0}', space=vmem, size = 0x20000, scoped, tag = 'input window, operand 3']
    #allocation9 [shape = 's32[2]{0}', space=sflag, size = 0x8, scoped, tag = 'scoped memory for tpu_custom_call.1']
    #allocation10 [shape = 'u8[2048]{0}', space=vmem, size = 0x800, scoped, tag = 'input window, operand 4']
    #allocation11 [shape = 'u8[65536]{0}', space=vmem, size = 0x10000, scoped, tag = 'input window, operand 5']
    #allocation12 [shape = 's32[2]{0}', space=sflag, size = 0x8, scoped, tag = 'scoped memory for tpu_custom_call.1']
    #allocation13 [shape = 'u8[65536]{0}', space=vmem, size = 0x10000, scoped, tag = 'input window, operand 7']
    #allocation14 [shape = 'u8[1024]{0}', space=vmem, size = 0x400, scoped, tag = 'input window, operand 8']
    #allocation15 [shape = 's32[2]{0}', space=sflag, size = 0x8, scoped, tag = 'scoped memory for tpu_custom_call.1']
    #allocation16 [shape = 'u8[131072]{0}', space=vmem, size = 0x20000, scoped, tag = 'input window, operand 9']
    #allocation17 [shape = 'u8[131072]{0}', space=vmem, size = 0x20000, scoped, tag = 'input window, operand 11']
    #allocation18 [shape = 's32[2]{0}', space=sflag, size = 0x8, scoped, tag = 'scoped memory for tpu_custom_call.1']
    #allocation19 [shape = 'u8[1024]{0}', space=vmem, size = 0x400, scoped, tag = 'input window, operand 16']
    #allocation20 [shape = 'u8[65536]{0}', space=vmem, size = 0x10000, scoped, tag = 'output window, operand 0, single buffered']
    %22 = vsyncpa [#allocation3], 0
    %23 = vsyncpa [#allocation6], 0
    %24 = vsyncpa [#allocation9], 0
    %s25 = scalar_lea.sflag [#allocation9], 1
    %26 = vsyncpa %s25, 0
    %27 = vsyncpa [#allocation12], 0
    %s28 = scalar_lea.sflag [#allocation12], 1
    %29 = vsyncpa %s28, 0
    %30 = vsyncpa [#allocation15], 0
    %s31 = scalar_lea.sflag [#allocation15], 1
    %32 = vsyncpa %s31, 0
    %33 = vsyncpa [#allocation18], 0
    %s34 = scalar_lea.sflag [#allocation18], 1
    %35 = vsyncpa %s34, 0
    %36 = vsyncpa [#allocation4], 0
    loop: start=0, step=1, limit=4
    $region2: #{tpu_custom_call.1} parent=1 // loop_pre_header
      _
    $region3: #{tpu_custom_call.1} parent=1 // loop_header
      %s38 = sphi 0, %s42
      %p39 = scmp.ge.s32.totalorder %s38, 4
      %s46 = sphi 0, %s46
      %s48 = sphi 0, %s46
      %s49 = sphi 0, %s48
      %s63 = sphi 0, %s49
      %s67 = sphi 0, %s67
      %s69 = sphi 0, %s67
      %s70 = sphi 0, %s69
      %s84 = sphi 0, %s70
      %s88 = sphi 0, %s88
      %s90 = sphi 0, %s88
      %s91 = sphi 0, %s90
      %s105 = sphi 0, %s91
      %s111 = sphi 0, %s113
      %s114 = sphi 0, %s111
      %s115 = sphi 0, %s114
      %s131 = sphi 0, %s115
      %s137 = sphi 0, %s139
      %s140 = sphi 0, %s137
      %s141 = sphi 0, %s140
      %s157 = sphi 0, %s141
      %s163 = sphi 0, %s165
      %s166 = sphi 0, %s163
      %s167 = sphi 0, %s166
      %s183 = sphi 0, %s167
      %s189 = sphi 0, %s191
      %s192 = sphi 0, %s189
      %s193 = sphi 0, %s192
      %s209 = sphi 0, %s193
      %s215 = sphi 0, %s217
      %s218 = sphi 0, %s215
      %s219 = sphi 0, %s218
      %s235 = sphi 0, %s219
      %s241 = sphi 0, %s243
      %s244 = sphi 0, %s241
      %s245 = sphi 0, %s244
      %s261 = sphi 0, %s245
      %s267 = sphi 0, %s269
      %s270 = sphi 0, %s267
      %s271 = sphi 0, %s270
      %s287 = sphi 0, %s271
      %s293 = sphi 0, %s295
      %s296 = sphi 0, %s293
      %s297 = sphi 0, %s296
      %s313 = sphi 0, %s297
      %s319 = sphi 0, %s321
      %s322 = sphi 0, %s319
      %s323 = sphi 0, %s322
      %s339 = sphi 0, %s323
      %s345 = sphi 0, %s347
      %s348 = sphi 0, %s345
      %s349 = sphi 0, %s348
      %s365 = sphi 0, %s349
      %s371 = sphi 0, %s373
      %s374 = sphi 0, %s371
      %s375 = sphi 0, %s374
      %s391 = sphi 0, %s375
      %s397 = sphi 0, %s399
      %s400 = sphi 0, %s397
      %s401 = sphi 0, %s400
      %s417 = sphi 0, %s401
      %s423 = sphi 0, %s425
      %s426 = sphi 0, %s423
      %s427 = sphi 0, %s426
      %s443 = sphi 0, %s427
      %s449 = sphi 0, %s451
      %s452 = sphi 0, %s449
      %s453 = sphi 0, %s452
      %s469 = sphi 0, %s453
      %s473 = sphi 0, %s473
      %s475 = sphi 0, %s473
      %s476 = sphi 0, %s475
      %s490 = sphi 0, %s476
    $region4: #{tpu_custom_call.1} parent=1 // loop_header_branch
      %41 = sbr.rel (%p39) target = $region8
    $region5: #{tpu_custom_call.1} parent=1 // loop_body
      %s43 = ssub.s32 %s38, 1
      %s44 = ssub.s32 %s38, 2
      %s45 = sadd.s32 %s38, 1
      %s47 = sadd.s32 %s46, 1
      %p50 = scmp.eq.s32.totalorder %s38, 1
      %p51 = scmp.ne.s32.totalorder %s46, %s48
      %p52 = scmp.eq.s32.totalorder %s38, 0
      %p53 = por %p51, %p52
      %p54 = scmp.ne.s32.totalorder %s46, %s48
      %p55 = scmp.eq.s32.totalorder %s43, 1
      %p56 = por %p54, %p55
      %p57 = scmp.ne.s32.totalorder %s48, %s49
      %p58 = scmp.eq.s32.totalorder %s43, 0
      %p59 = por %p57, %p58
      %p60 = scmp.ne.s32.totalorder %s48, %s49
      %p61 = scmp.eq.s32.totalorder %s44, 1
      %p62 = por %p60, %p61
      %p64 = scmp.ne.s32.totalorder %s49, %s63
      %p65 = scmp.eq.s32.totalorder %s44, 0
      %p66 = por %p64, %p65
      %s68 = sadd.s32 %s67, 1
      %p71 = scmp.eq.s32.totalorder %s38, 1
      %p72 = scmp.ne.s32.totalorder %s67, %s69
      %p73 = scmp.eq.s32.totalorder %s38, 0
      %p74 = por %p72, %p73
      %p75 = scmp.ne.s32.totalorder %s67, %s69
      %p76 = scmp.eq.s32.totalorder %s43, 1
      %p77 = por %p75, %p76
      %p78 = scmp.ne.s32.totalorder %s69, %s70
      %p79 = scmp.eq.s32.totalorder %s43, 0
      %p80 = por %p78, %p79
      %p81 = scmp.ne.s32.totalorder %s69, %s70
      %p82 = scmp.eq.s32.totalorder %s44, 1
      %p83 = por %p81, %p82
      %p85 = scmp.ne.s32.totalorder %s70, %s84
      %p86 = scmp.eq.s32.totalorder %s44, 0
      %p87 = por %p85, %p86
      %s89 = sadd.s32 %s88, 1
      %p92 = scmp.eq.s32.totalorder %s38, 1
      %p93 = scmp.ne.s32.totalorder %s88, %s90
      %p94 = scmp.eq.s32.totalorder %s38, 0
      %p95 = por %p93, %p94
      %p96 = scmp.ne.s32.totalorder %s88, %s90
      %p97 = scmp.eq.s32.totalorder %s43, 1
      %p98 = por %p96, %p97
      %p99 = scmp.ne.s32.totalorder %s90, %s91
      %p100 = scmp.eq.s32.totalorder %s43, 0
      %p101 = por %p99, %p100
      %p102 = scmp.ne.s32.totalorder %s90, %s91
      %p103 = scmp.eq.s32.totalorder %s44, 1
      %p104 = por %p102, %p103
      %p106 = scmp.ne.s32.totalorder %s91, %s105
      %p107 = scmp.eq.s32.totalorder %s44, 0
      %p108 = por %p106, %p107
      %s109 = ssub.s32 %s38, %s45
      %p110 = scmp.eq.s32.totalorder %s109, 0
      %s112 = sadd.s32 %s111, 1
      %s113 = scalar_select %p110, %s111, %s112
      %p116 = pneg %p110
      %p117 = scmp.eq.s32.totalorder %s38, 1
      %p118 = por %p116, %p117
      %p119 = scmp.ne.s32.totalorder %s111, %s114
      %p120 = scmp.eq.s32.totalorder %s38, 0
      %p121 = por %p119, %p120
      %p122 = scmp.ne.s32.totalorder %s111, %s114
      %p123 = scmp.eq.s32.totalorder %s43, 1
      %p124 = por %p122, %p123
      %p125 = scmp.ne.s32.totalorder %s114, %s115
      %p126 = scmp.eq.s32.totalorder %s43, 0
      %p127 = por %p125, %p126
      %p128 = scmp.ne.s32.totalorder %s114, %s115
      %p129 = scmp.eq.s32.totalorder %s44, 1
      %p130 = por %p128, %p129
      %p132 = scmp.ne.s32.totalorder %s115, %s131
      %p133 = scmp.eq.s32.totalorder %s44, 0
      %p134 = por %p132, %p133
      %s135 = ssub.s32 %s38, %s45
      %p136 = scmp.eq.s32.totalorder %s135, 0
      %s138 = sadd.s32 %s137, 1
      %s139 = scalar_select %p136, %s137, %s138
      %p142 = pneg %p136
      %p143 = scmp.eq.s32.totalorder %s38, 1
      %p144 = por %p142, %p143
      %p145 = scmp.ne.s32.totalorder %s137, %s140
      %p146 = scmp.eq.s32.totalorder %s38, 0
      %p147 = por %p145, %p146
      %p148 = scmp.ne.s32.totalorder %s137, %s140
      %p149 = scmp.eq.s32.totalorder %s43, 1
      %p150 = por %p148, %p149
      %p151 = scmp.ne.s32.totalorder %s140, %s141
      %p152 = scmp.eq.s32.totalorder %s43, 0
      %p153 = por %p151, %p152
      %p154 = scmp.ne.s32.totalorder %s140, %s141
      %p155 = scmp.eq.s32.totalorder %s44, 1
      %p156 = por %p154, %p155
      %p158 = scmp.ne.s32.totalorder %s141, %s157
      %p159 = scmp.eq.s32.totalorder %s44, 0
      %p160 = por %p158, %p159
      %s161 = ssub.s32 %s38, %s45
      %p162 = scmp.eq.s32.totalorder %s161, 0
      %s164 = sadd.s32 %s163, 1
      %s165 = scalar_select %p162, %s163, %s164
      %p168 = pneg %p162
      %p169 = scmp.eq.s32.totalorder %s38, 1
      %p170 = por %p168, %p169
      %p171 = scmp.ne.s32.totalorder %s163, %s166
      %p172 = scmp.eq.s32.totalorder %s38, 0
      %p173 = por %p171, %p172
      %p174 = scmp.ne.s32.totalorder %s163, %s166
      %p175 = scmp.eq.s32.totalorder %s43, 1
      %p176 = por %p174, %p175
      %p177 = scmp.ne.s32.totalorder %s166, %s167
      %p178 = scmp.eq.s32.totalorder %s43, 0
      %p179 = por %p177, %p178
      %p180 = scmp.ne.s32.totalorder %s166, %s167
      %p181 = scmp.eq.s32.totalorder %s44, 1
      %p182 = por %p180, %p181
      %p184 = scmp.ne.s32.totalorder %s167, %s183
      %p185 = scmp.eq.s32.totalorder %s44, 0
      %p186 = por %p184, %p185
      %s187 = ssub.s32 %s38, %s45
      %p188 = scmp.eq.s32.totalorder %s187, 0
      %s190 = sadd.s32 %s189, 1
      %s191 = scalar_select %p188, %s189, %s190
      %p194 = pneg %p188
      %p195 = scmp.eq.s32.totalorder %s38, 1
      %p196 = por %p194, %p195
      %p197 = scmp.ne.s32.totalorder %s189, %s192
      %p198 = scmp.eq.s32.totalorder %s38, 0
      %p199 = por %p197, %p198
      %p200 = scmp.ne.s32.totalorder %s189, %s192
      %p201 = scmp.eq.s32.totalorder %s43, 1
      %p202 = por %p200, %p201
      %p203 = scmp.ne.s32.totalorder %s192, %s193
      %p204 = scmp.eq.s32.totalorder %s43, 0
      %p205 = por %p203, %p204
      %p206 = scmp.ne.s32.totalorder %s192, %s193
      %p207 = scmp.eq.s32.totalorder %s44, 1
      %p208 = por %p206, %p207
      %p210 = scmp.ne.s32.totalorder %s193, %s209
      %p211 = scmp.eq.s32.totalorder %s44, 0
      %p212 = por %p210, %p211
      %s213 = ssub.s32 %s38, %s45
      %p214 = scmp.eq.s32.totalorder %s213, 0
      %s216 = sadd.s32 %s215, 1
      %s217 = scalar_select %p214, %s215, %s216
      %p220 = pneg %p214
      %p221 = scmp.eq.s32.totalorder %s38, 1
      %p222 = por %p220, %p221
      %p223 = scmp.ne.s32.totalorder %s215, %s218
      %p224 = scmp.eq.s32.totalorder %s38, 0
      %p225 = por %p223, %p224
      %p226 = scmp.ne.s32.totalorder %s215, %s218
      %p227 = scmp.eq.s32.totalorder %s43, 1
      %p228 = por %p226, %p227
      %p229 = scmp.ne.s32.totalorder %s218, %s219
      %p230 = scmp.eq.s32.totalorder %s43, 0
      %p231 = por %p229, %p230
      %p232 = scmp.ne.s32.totalorder %s218, %s219
      %p233 = scmp.eq.s32.totalorder %s44, 1
      %p234 = por %p232, %p233
      %p236 = scmp.ne.s32.totalorder %s219, %s235
      %p237 = scmp.eq.s32.totalorder %s44, 0
      %p238 = por %p236, %p237
      %s239 = ssub.s32 %s38, %s45
      %p240 = scmp.eq.s32.totalorder %s239, 0
      %s242 = sadd.s32 %s241, 1
      %s243 = scalar_select %p240, %s241, %s242
      %p246 = pneg %p240
      %p247 = scmp.eq.s32.totalorder %s38, 1
      %p248 = por %p246, %p247
      %p249 = scmp.ne.s32.totalorder %s241, %s244
      %p250 = scmp.eq.s32.totalorder %s38, 0
      %p251 = por %p249, %p250
      %p252 = scmp.ne.s32.totalorder %s241, %s244
      %p253 = scmp.eq.s32.totalorder %s43, 1
      %p254 = por %p252, %p253
      %p255 = scmp.ne.s32.totalorder %s244, %s245
      %p256 = scmp.eq.s32.totalorder %s43, 0
      %p257 = por %p255, %p256
      %p258 = scmp.ne.s32.totalorder %s244, %s245
      %p259 = scmp.eq.s32.totalorder %s44, 1
      %p260 = por %p258, %p259
      %p262 = scmp.ne.s32.totalorder %s245, %s261
      %p263 = scmp.eq.s32.totalorder %s44, 0
      %p264 = por %p262, %p263
      %s265 = ssub.s32 %s38, %s45
      %p266 = scmp.eq.s32.totalorder %s265, 0
      %s268 = sadd.s32 %s267, 1
      %s269 = scalar_select %p266, %s267, %s268
      %p272 = pneg %p266
      %p273 = scmp.eq.s32.totalorder %s38, 1
      %p274 = por %p272, %p273
      %p275 = scmp.ne.s32.totalorder %s267, %s270
      %p276 = scmp.eq.s32.totalorder %s38, 0
      %p277 = por %p275, %p276
      %p278 = scmp.ne.s32.totalorder %s267, %s270
      %p279 = scmp.eq.s32.totalorder %s43, 1
      %p280 = por %p278, %p279
      %p281 = scmp.ne.s32.totalorder %s270, %s271
      %p282 = scmp.eq.s32.totalorder %s43, 0
      %p283 = por %p281, %p282
      %p284 = scmp.ne.s32.totalorder %s270, %s271
      %p285 = scmp.eq.s32.totalorder %s44, 1
      %p286 = por %p284, %p285
      %p288 = scmp.ne.s32.totalorder %s271, %s287
      %p289 = scmp.eq.s32.totalorder %s44, 0
      %p290 = por %p288, %p289
      %s291 = ssub.s32 %s38, %s45
      %p292 = scmp.eq.s32.totalorder %s291, 0
      %s294 = sadd.s32 %s293, 1
      %s295 = scalar_select %p292, %s293, %s294
      %p298 = pneg %p292
      %p299 = scmp.eq.s32.totalorder %s38, 1
      %p300 = por %p298, %p299
      %p301 = scmp.ne.s32.totalorder %s293, %s296
      %p302 = scmp.eq.s32.totalorder %s38, 0
      %p303 = por %p301, %p302
      %p304 = scmp.ne.s32.totalorder %s293, %s296
      %p305 = scmp.eq.s32.totalorder %s43, 1
      %p306 = por %p304, %p305
      %p307 = scmp.ne.s32.totalorder %s296, %s297
      %p308 = scmp.eq.s32.totalorder %s43, 0
      %p309 = por %p307, %p308
      %p310 = scmp.ne.s32.totalorder %s296, %s297
      %p311 = scmp.eq.s32.totalorder %s44, 1
      %p312 = por %p310, %p311
      %p314 = scmp.ne.s32.totalorder %s297, %s313
      %p315 = scmp.eq.s32.totalorder %s44, 0
      %p316 = por %p314, %p315
      %s317 = ssub.s32 %s38, %s45
      %p318 = scmp.eq.s32.totalorder %s317, 0
      %s320 = sadd.s32 %s319, 1
      %s321 = scalar_select %p318, %s319, %s320
      %p324 = pneg %p318
      %p325 = scmp.eq.s32.totalorder %s38, 1
      %p326 = por %p324, %p325
      %p327 = scmp.ne.s32.totalorder %s319, %s322
      %p328 = scmp.eq.s32.totalorder %s38, 0
      %p329 = por %p327, %p328
      %p330 = scmp.ne.s32.totalorder %s319, %s322
      %p331 = scmp.eq.s32.totalorder %s43, 1
      %p332 = por %p330, %p331
      %p333 = scmp.ne.s32.totalorder %s322, %s323
      %p334 = scmp.eq.s32.totalorder %s43, 0
      %p335 = por %p333, %p334
      %p336 = scmp.ne.s32.totalorder %s322, %s323
      %p337 = scmp.eq.s32.totalorder %s44, 1
      %p338 = por %p336, %p337
      %p340 = scmp.ne.s32.totalorder %s323, %s339
      %p341 = scmp.eq.s32.totalorder %s44, 0
      %p342 = por %p340, %p341
      %s343 = ssub.s32 %s38, %s45
      %p344 = scmp.eq.s32.totalorder %s343, 0
      %s346 = sadd.s32 %s345, 1
      %s347 = scalar_select %p344, %s345, %s346
      %p350 = pneg %p344
      %p351 = scmp.eq.s32.totalorder %s38, 1
      %p352 = por %p350, %p351
      %p353 = scmp.ne.s32.totalorder %s345, %s348
      %p354 = scmp.eq.s32.totalorder %s38, 0
      %p355 = por %p353, %p354
      %p356 = scmp.ne.s32.totalorder %s345, %s348
      %p357 = scmp.eq.s32.totalorder %s43, 1
      %p358 = por %p356, %p357
      %p359 = scmp.ne.s32.totalorder %s348, %s349
      %p360 = scmp.eq.s32.totalorder %s43, 0
      %p361 = por %p359, %p360
      %p362 = scmp.ne.s32.totalorder %s348, %s349
      %p363 = scmp.eq.s32.totalorder %s44, 1
      %p364 = por %p362, %p363
      %p366 = scmp.ne.s32.totalorder %s349, %s365
      %p367 = scmp.eq.s32.totalorder %s44, 0
      %p368 = por %p366, %p367
      %s369 = ssub.s32 %s38, %s45
      %p370 = scmp.eq.s32.totalorder %s369, 0
      %s372 = sadd.s32 %s371, 1
      %s373 = scalar_select %p370, %s371, %s372
      %p376 = pneg %p370
      %p377 = scmp.eq.s32.totalorder %s38, 1
      %p378 = por %p376, %p377
      %p379 = scmp.ne.s32.totalorder %s371, %s374
      %p380 = scmp.eq.s32.totalorder %s38, 0
      %p381 = por %p379, %p380
      %p382 = scmp.ne.s32.totalorder %s371, %s374
      %p383 = scmp.eq.s32.totalorder %s43, 1
      %p384 = por %p382, %p383
      %p385 = scmp.ne.s32.totalorder %s374, %s375
      %p386 = scmp.eq.s32.totalorder %s43, 0
      %p387 = por %p385, %p386
      %p388 = scmp.ne.s32.totalorder %s374, %s375
      %p389 = scmp.eq.s32.totalorder %s44, 1
      %p390 = por %p388, %p389
      %p392 = scmp.ne.s32.totalorder %s375, %s391
      %p393 = scmp.eq.s32.totalorder %s44, 0
      %p394 = por %p392, %p393
      %s395 = ssub.s32 %s38, %s45
      %p396 = scmp.eq.s32.totalorder %s395, 0
      %s398 = sadd.s32 %s397, 1
      %s399 = scalar_select %p396, %s397, %s398
      %p402 = pneg %p396
      %p403 = scmp.eq.s32.totalorder %s38, 1
      %p404 = por %p402, %p403
      %p405 = scmp.ne.s32.totalorder %s397, %s400
      %p406 = scmp.eq.s32.totalorder %s38, 0
      %p407 = por %p405, %p406
      %p408 = scmp.ne.s32.totalorder %s397, %s400
      %p409 = scmp.eq.s32.totalorder %s43, 1
      %p410 = por %p408, %p409
      %p411 = scmp.ne.s32.totalorder %s400, %s401
      %p412 = scmp.eq.s32.totalorder %s43, 0
      %p413 = por %p411, %p412
      %p414 = scmp.ne.s32.totalorder %s400, %s401
      %p415 = scmp.eq.s32.totalorder %s44, 1
      %p416 = por %p414, %p415
      %p418 = scmp.ne.s32.totalorder %s401, %s417
      %p419 = scmp.eq.s32.totalorder %s44, 0
      %p420 = por %p418, %p419
      %s421 = ssub.s32 %s38, %s45
      %p422 = scmp.eq.s32.totalorder %s421, 0
      %s424 = sadd.s32 %s423, 1
      %s425 = scalar_select %p422, %s423, %s424
      %p428 = pneg %p422
      %p429 = scmp.eq.s32.totalorder %s38, 1
      %p430 = por %p428, %p429
      %p431 = scmp.ne.s32.totalorder %s423, %s426
      %p432 = scmp.eq.s32.totalorder %s38, 0
      %p433 = por %p431, %p432
      %p434 = scmp.ne.s32.totalorder %s423, %s426
      %p435 = scmp.eq.s32.totalorder %s43, 1
      %p436 = por %p434, %p435
      %p437 = scmp.ne.s32.totalorder %s426, %s427
      %p438 = scmp.eq.s32.totalorder %s43, 0
      %p439 = por %p437, %p438
      %p440 = scmp.ne.s32.totalorder %s426, %s427
      %p441 = scmp.eq.s32.totalorder %s44, 1
      %p442 = por %p440, %p441
      %p444 = scmp.ne.s32.totalorder %s427, %s443
      %p445 = scmp.eq.s32.totalorder %s44, 0
      %p446 = por %p444, %p445
      %s447 = ssub.s32 %s38, %s45
      %p448 = scmp.eq.s32.totalorder %s447, 0
      %s450 = sadd.s32 %s449, 1
      %s451 = scalar_select %p448, %s449, %s450
      %p454 = pneg %p448
      %p455 = scmp.eq.s32.totalorder %s38, 1
      %p456 = por %p454, %p455
      %p457 = scmp.ne.s32.totalorder %s449, %s452
      %p458 = scmp.eq.s32.totalorder %s38, 0
      %p459 = por %p457, %p458
      %p460 = scmp.ne.s32.totalorder %s449, %s452
      %p461 = scmp.eq.s32.totalorder %s43, 1
      %p462 = por %p460, %p461
      %p463 = scmp.ne.s32.totalorder %s452, %s453
      %p464 = scmp.eq.s32.totalorder %s43, 0
      %p465 = por %p463, %p464
      %p466 = scmp.ne.s32.totalorder %s452, %s453
      %p467 = scmp.eq.s32.totalorder %s44, 1
      %p468 = por %p466, %p467
      %p470 = scmp.ne.s32.totalorder %s453, %s469
      %p471 = scmp.eq.s32.totalorder %s44, 0
      %p472 = por %p470, %p471
      %s474 = sadd.s32 %s473, 1
      %p477 = scmp.eq.s32.totalorder %s38, 1
      %p478 = scmp.ne.s32.totalorder %s473, %s475
      %p479 = scmp.eq.s32.totalorder %s38, 0
      %p480 = por %p478, %p479
      %p481 = scmp.ne.s32.totalorder %s473, %s475
      %p482 = scmp.eq.s32.totalorder %s43, 1
      %p483 = por %p481, %p482
      %p484 = scmp.ne.s32.totalorder %s475, %s476
      %p485 = scmp.eq.s32.totalorder %s43, 0
      %p486 = por %p484, %p485
      %p487 = scmp.ne.s32.totalorder %s475, %s476
      %p488 = scmp.eq.s32.totalorder %s44, 1
      %p489 = por %p487, %p488
      %p491 = scmp.ne.s32.totalorder %s476, %s490
      %p492 = scmp.eq.s32.totalorder %s44, 0
      %p493 = por %p491, %p492
      %p494 = scmp.le.s32.totalorder 1, %s38
      %p495 = scmp.lt.s32.totalorder %s38, 3
      %p496 = pnand %p494, %p495
      %p497 = pneg %p496
      // Predicated region
      $region9: #{tpu_custom_call.1} parent=5 // pred_check
        _
      $region10: #{tpu_custom_call.1} parent=5 // pred_check_branch
        %499 = sbr.rel (%p496) target = $region12
      $region11: #{tpu_custom_call.1} parent=5 // pred_region
        %s500 = ssub.s32 %s38, 1
        // Predicated region
        $region13: #{tpu_custom_call.1} parent=11 // pred_check
          %p501 = pneg %p59
        $region14: #{tpu_custom_call.1} parent=11 // pred_check_branch
          %503 = sbr.rel (%p501) target = $region16
        $region15: #{tpu_custom_call.1} parent=11 // pred_region
          %505 = vsyncadd [#allocation3], 0
          %s506 = sshll.u32 %s0, 4
          %s507 = int_to_ptr.hbm [resolvable:$true] %s506
          %s508 = sshll.u32 [#allocation2], 4
          %s509 = int_to_ptr.vmem [resolvable:$true] %s508
          %514 = dma.hbm_to_vmem [thread:$0]  %s507, 2048, %s509, [#allocation3], 128, 128, 8
        $region16: #{tpu_custom_call.1} parent=11 // pred_fallthru
          _
        // Predicated region
        $region17: #{tpu_custom_call.1} parent=11 // pred_check
          %p515 = pneg %p80
        $region18: #{tpu_custom_call.1} parent=11 // pred_check_branch
          %517 = sbr.rel (%p515) target = $region20
        $region19: #{tpu_custom_call.1} parent=11 // pred_region
          %519 = vsyncadd [#allocation6], 0
          %s520 = sshll.u32 %s1, 4
          %s521 = int_to_ptr.hbm [resolvable:$true] %s520
          %s522 = sshll.u32 [#allocation5], 4
          %s523 = int_to_ptr.vmem [resolvable:$true] %s522
          %528 = dma.hbm_to_vmem [thread:$0]  %s521, 2048, %s523, [#allocation6], 128, 128, 8
        $region20: #{tpu_custom_call.1} parent=11 // pred_fallthru
          _
        // Predicated region
        $region21: #{tpu_custom_call.1} parent=11 // pred_check
          %p529 = pneg %p101
        $region22: #{tpu_custom_call.1} parent=11 // pred_check_branch
          %531 = sbr.rel (%p529) target = $region24
        $region23: #{tpu_custom_call.1} parent=11 // pred_region
          %533 = vsyncadd [#allocation6], 0
          %s534 = sshll.u32 %s2, 4
          %s535 = int_to_ptr.hbm [resolvable:$true] %s534
          %s536 = sshll.u32 [#allocation7], 4
          %s537 = int_to_ptr.vmem [resolvable:$true] %s536
          %542 = dma.hbm_to_vmem [thread:$0]  %s535, 32, %s537, [#allocation6], 16, 16, 1
        $region24: #{tpu_custom_call.1} parent=11 // pred_fallthru
          _
      $region12: #{tpu_custom_call.1} parent=5 // pred_fallthru
        _
      %p543 = scmp.lt.s32.totalorder %s38, 2
      // Predicated region
      $region25: #{tpu_custom_call.1} parent=5 // pred_check
        %p544 = pneg %p543
      $region26: #{tpu_custom_call.1} parent=5 // pred_check_branch
        %546 = sbr.rel (%p544) target = $region28
      $region27: #{tpu_custom_call.1} parent=5 // pred_region
        // Predicated region
        $region29: #{tpu_custom_call.1} parent=27 // pred_check
          %p547 = pneg %p121
        $region30: #{tpu_custom_call.1} parent=27 // pred_check_branch
          %549 = sbr.rel (%p547) target = $region32
        $region31: #{tpu_custom_call.1} parent=27 // pred_region
          %s550 = sand.u32 %s38, 1
          %s551 = scalar_lea.sflag [#allocation9], %s550
          %s552 = sand.u32 %s111, 1
          %s553 = smul.addr %s552, 128
          %s554 = scalar_lea.vmem [#allocation8], %s553
          %556 = vsyncadd %s551, 0
          %s557 = smul.addr %s38, 32
          %s558 = smul.addr %s557, 4
          %s559 = scalar_lea.hbm %s3, %s558
          %s560 = sshll.u32 %s559, 4
          %s561 = int_to_ptr.hbm [resolvable:$true] %s560
          %s562 = sshll.u32 %s554, 4
          %s563 = int_to_ptr.vmem [resolvable:$true] %s562
          %568 = dma.hbm_to_vmem [thread:$0]  %s561, 2048, %s563, %s551, 128, 128, 8
        $region32: #{tpu_custom_call.1} parent=27 // pred_fallthru
          _
        // Predicated region
        $region33: #{tpu_custom_call.1} parent=27 // pred_check
          %p569 = pneg %p147
        $region34: #{tpu_custom_call.1} parent=27 // pred_check_branch
          %571 = sbr.rel (%p569) target = $region36
        $region35: #{tpu_custom_call.1} parent=27 // pred_region
          %s572 = sand.u32 %s38, 1
          %s573 = scalar_lea.sflag [#allocation9], %s572
          %s574 = sand.u32 %s137, 1
          %s575 = smul.addr %s574, 2
          %s576 = scalar_lea.vmem [#allocation10], %s575
          %578 = vsyncadd %s573, 0
          %s579 = smul.addr %s38, 2
          %s580 = scalar_lea.hbm %s4, %s579
          %s582 = sshll.u32 %s580, 4
          %s583 = int_to_ptr.hbm [resolvable:$true] %s582
          %s584 = sshll.u32 %s576, 4
          %s585 = int_to_ptr.vmem [resolvable:$true] %s584
          %587 = dma.hbm_to_vmem [thread:$0]  %s583, 32, %s585, %s573
        $region36: #{tpu_custom_call.1} parent=27 // pred_fallthru
          _
        // Predicated region
        $region37: #{tpu_custom_call.1} parent=27 // pred_check
          %p588 = pneg %p173
        $region38: #{tpu_custom_call.1} parent=27 // pred_check_branch
          %590 = sbr.rel (%p588) target = $region40
        $region39: #{tpu_custom_call.1} parent=27 // pred_region
          %s591 = sand.u32 %s38, 1
          %s592 = scalar_lea.sflag [#allocation12], %s591
          %s593 = sand.u32 %s163, 1
          %s594 = smul.addr %s593, 64
          %s595 = scalar_lea.vmem [#allocation11], %s594
          %597 = vsyncadd %s592, 0
          %s598 = smul.addr %s38, 16
          %s599 = smul.addr %s598, 4
          %s600 = scalar_lea.hbm %s5, %s599
          %s601 = sshll.u32 %s600, 4
          %s602 = int_to_ptr.hbm [resolvable:$true] %s601
          %s603 = sshll.u32 %s595, 4
          %s604 = int_to_ptr.vmem [resolvable:$true] %s603
          %609 = dma.hbm_to_vmem [thread:$0]  %s602, 1024, %s604, %s592, 64, 64, 4
        $region40: #{tpu_custom_call.1} parent=27 // pred_fallthru
          _
        // Predicated region
        $region41: #{tpu_custom_call.1} parent=27 // pred_check
          %p610 = pneg %p199
        $region42: #{tpu_custom_call.1} parent=27 // pred_check_branch
          %612 = sbr.rel (%p610) target = $region44
        $region43: #{tpu_custom_call.1} parent=27 // pred_region
          %p613 = scmp.lt.s32.totalorder %s38, 1
          %s614 = scalar_select %p613, %s38, 1
          %s615 = scalar_lea.vmem %s6, %s614
        $region44: #{tpu_custom_call.1} parent=27 // pred_fallthru
          _
        // Predicated region
        $region45: #{tpu_custom_call.1} parent=27 // pred_check
          %p616 = pneg %p225
        $region46: #{tpu_custom_call.1} parent=27 // pred_check_branch
          %618 = sbr.rel (%p616) target = $region48
        $region47: #{tpu_custom_call.1} parent=27 // pred_region
          %s619 = sand.u32 %s38, 1
          %s620 = scalar_lea.sflag [#allocation12], %s619
          %s621 = sand.u32 %s215, 1
          %s622 = smul.addr %s621, 64
          %s623 = scalar_lea.vmem [#allocation13], %s622
          %625 = vsyncadd %s620, 0
          %s626 = smul.addr %s38, 16
          %s627 = smul.addr %s626, 4
          %s628 = scalar_lea.hbm %s7, %s627
          %s629 = sshll.u32 %s628, 4
          %s630 = int_to_ptr.hbm [resolvable:$true] %s629
          %s631 = sshll.u32 %s623, 4
          %s632 = int_to_ptr.vmem [resolvable:$true] %s631
          %637 = dma.hbm_to_vmem [thread:$0]  %s630, 1024, %s632, %s620, 64, 64, 4
        $region48: #{tpu_custom_call.1} parent=27 // pred_fallthru
          _
        // Predicated region
        $region49: #{tpu_custom_call.1} parent=27 // pred_check
          %p638 = pneg %p251
        $region50: #{tpu_custom_call.1} parent=27 // pred_check_branch
          %640 = sbr.rel (%p638) target = $region52
        $region51: #{tpu_custom_call.1} parent=27 // pred_region
          %s641 = sand.u32 %s38, 1
          %s642 = scalar_lea.sflag [#allocation15], %s641
          %s643 = sand.u32 %s241, 1
          %s644 = scalar_lea.vmem [#allocation14], %s643
          %646 = vsyncadd %s642, 0
          %s647 = scalar_lea.hbm %s8, %s38
          %s649 = sshll.u32 %s647, 4
          %s650 = int_to_ptr.hbm [resolvable:$true] %s649
          %s651 = sshll.u32 %s644, 4
          %s652 = int_to_ptr.vmem [resolvable:$true] %s651
          %654 = dma.hbm_to_vmem [thread:$0]  %s650, 16, %s652, %s642
        $region52: #{tpu_custom_call.1} parent=27 // pred_fallthru
          _
        // Predicated region
        $region53: #{tpu_custom_call.1} parent=27 // pred_check
          %p655 = pneg %p277
        $region54: #{tpu_custom_call.1} parent=27 // pred_check_branch
          %657 = sbr.rel (%p655) target = $region56
        $region55: #{tpu_custom_call.1} parent=27 // pred_region
          %s658 = sand.u32 %s38, 1
          %s659 = scalar_lea.sflag [#allocation15], %s658
          %s660 = sand.u32 %s267, 1
          %s661 = smul.addr %s660, 128
          %s662 = scalar_lea.vmem [#allocation16], %s661
          %664 = vsyncadd %s659, 0
          %s665 = smul.addr %s38, 32
          %s666 = smul.addr %s665, 4
          %s667 = scalar_lea.hbm %s9, %s666
          %s668 = sshll.u32 %s667, 4
          %s669 = int_to_ptr.hbm [resolvable:$true] %s668
          %s670 = sshll.u32 %s662, 4
          %s671 = int_to_ptr.vmem [resolvable:$true] %s670
          %676 = dma.hbm_to_vmem [thread:$0]  %s669, 2048, %s671, %s659, 128, 128, 8
        $region56: #{tpu_custom_call.1} parent=27 // pred_fallthru
          _
        // Predicated region
        $region57: #{tpu_custom_call.1} parent=27 // pred_check
          %p677 = pneg %p303
        $region58: #{tpu_custom_call.1} parent=27 // pred_check_branch
          %679 = sbr.rel (%p677) target = $region60
        $region59: #{tpu_custom_call.1} parent=27 // pred_region
          %p680 = scmp.lt.s32.totalorder %s38, 1
          %s681 = scalar_select %p680, %s38, 1
          %s682 = smul.addr %s681, 2
          %s683 = scalar_lea.vmem %s10, %s682
        $region60: #{tpu_custom_call.1} parent=27 // pred_fallthru
          _
        // Predicated region
        $region61: #{tpu_custom_call.1} parent=27 // pred_check
          %p684 = pneg %p329
        $region62: #{tpu_custom_call.1} parent=27 // pred_check_branch
          %686 = sbr.rel (%p684) target = $region64
        $region63: #{tpu_custom_call.1} parent=27 // pred_region
          %s687 = sand.u32 %s38, 1
          %s688 = scalar_lea.sflag [#allocation18], %s687
          %s689 = sand.u32 %s319, 1
          %s690 = smul.addr %s689, 128
          %s691 = scalar_lea.vmem [#allocation17], %s690
          %693 = vsyncadd %s688, 0
          %s694 = smul.addr %s38, 32
          %s695 = smul.addr %s694, 4
          %s696 = scalar_lea.hbm %s11, %s695
          %s697 = sshll.u32 %s696, 4
          %s698 = int_to_ptr.hbm [resolvable:$true] %s697
          %s699 = sshll.u32 %s691, 4
          %s700 = int_to_ptr.vmem [resolvable:$true] %s699
          %705 = dma.hbm_to_vmem [thread:$0]  %s698, 2048, %s700, %s688, 64, 64, 4
        $region64: #{tpu_custom_call.1} parent=27 // pred_fallthru
          _
        // Predicated region
        $region65: #{tpu_custom_call.1} parent=27 // pred_check
          %p706 = pneg %p355
        $region66: #{tpu_custom_call.1} parent=27 // pred_check_branch
          %708 = sbr.rel (%p706) target = $region68
        $region67: #{tpu_custom_call.1} parent=27 // pred_region
          %p709 = scmp.lt.s32.totalorder %s38, 1
          %s710 = scalar_select %p709, %s38, 1
          %s711 = scalar_lea.vmem %s12, %s710
        $region68: #{tpu_custom_call.1} parent=27 // pred_fallthru
          _
        // Predicated region
        $region69: #{tpu_custom_call.1} parent=27 // pred_check
          %p712 = pneg %p381
        $region70: #{tpu_custom_call.1} parent=27 // pred_check_branch
          %714 = sbr.rel (%p712) target = $region72
        $region71: #{tpu_custom_call.1} parent=27 // pred_region
          %p715 = scmp.lt.s32.totalorder %s38, 1
          %s716 = scalar_select %p715, %s38, 1
          %s717 = scalar_lea.vmem %s13, %s716
        $region72: #{tpu_custom_call.1} parent=27 // pred_fallthru
          _
        // Predicated region
        $region73: #{tpu_custom_call.1} parent=27 // pred_check
          %p718 = pneg %p407
        $region74: #{tpu_custom_call.1} parent=27 // pred_check_branch
          %720 = sbr.rel (%p718) target = $region76
        $region75: #{tpu_custom_call.1} parent=27 // pred_region
          %p721 = scmp.lt.s32.totalorder %s38, 1
          %s722 = scalar_select %p721, %s38, 1
          %s723 = scalar_lea.vmem %s14, %s722
        $region76: #{tpu_custom_call.1} parent=27 // pred_fallthru
          _
        // Predicated region
        $region77: #{tpu_custom_call.1} parent=27 // pred_check
          %p724 = pneg %p433
        $region78: #{tpu_custom_call.1} parent=27 // pred_check_branch
          %726 = sbr.rel (%p724) target = $region80
        $region79: #{tpu_custom_call.1} parent=27 // pred_region
          %p727 = scmp.lt.s32.totalorder %s38, 1
          %s728 = scalar_select %p727, %s38, 1
          %s729 = scalar_lea.vmem %s15, %s728
        $region80: #{tpu_custom_call.1} parent=27 // pred_fallthru
          _
        // Predicated region
        $region81: #{tpu_custom_call.1} parent=27 // pred_check
          %p730 = pneg %p459
        $region82: #{tpu_custom_call.1} parent=27 // pred_check_branch
          %732 = sbr.rel (%p730) target = $region84
        $region83: #{tpu_custom_call.1} parent=27 // pred_region
          %s733 = sand.u32 %s38, 1
          %s734 = scalar_lea.sflag [#allocation18], %s733
          %s735 = sand.u32 %s449, 1
          %s736 = scalar_lea.vmem [#allocation19], %s735
          %738 = vsyncadd %s734, 0
          %s739 = scalar_lea.hbm %s16, %s38
          %s741 = sshll.u32 %s739, 4
          %s742 = int_to_ptr.hbm [resolvable:$true] %s741
          %s743 = sshll.u32 %s736, 4
          %s744 = int_to_ptr.vmem [resolvable:$true] %s743
          %746 = dma.hbm_to_vmem [thread:$0]  %s742, 16, %s744, %s734
        $region84: #{tpu_custom_call.1} parent=27 // pred_fallthru
          _
      $region28: #{tpu_custom_call.1} parent=5 // pred_fallthru
        _
      %p747 = scmp.le.s32.totalorder 1, %s38
      %p748 = scmp.lt.s32.totalorder %s38, 3
      %p749 = pnand %p747, %p748
      %p750 = pneg %p749
      // Predicated region
      $region85: #{tpu_custom_call.1} parent=5 // pred_check
        _
      $region86: #{tpu_custom_call.1} parent=5 // pred_check_branch
        %752 = sbr.rel (%p749) target = $region88
      $region87: #{tpu_custom_call.1} parent=5 // pred_region
        %s753 = ssub.s32 %s38, 1
        // Predicated region
        $region89: #{tpu_custom_call.1} parent=87 // pred_check
          %p754 = pneg %p59
        $region90: #{tpu_custom_call.1} parent=87 // pred_check_branch
          %756 = sbr.rel (%p754) target = $region92
        $region91: #{tpu_custom_call.1} parent=87 // pred_region
          %758 = dma.done [#allocation3], 2048
        $region92: #{tpu_custom_call.1} parent=87 // pred_fallthru
          _
        // Predicated region
        $region93: #{tpu_custom_call.1} parent=87 // pred_check
          %p759 = pneg %p80
        $region94: #{tpu_custom_call.1} parent=87 // pred_check_branch
          %761 = sbr.rel (%p759) target = $region96
        $region95: #{tpu_custom_call.1} parent=87 // pred_region
          %763 = dma.done [#allocation6], 2048
        $region96: #{tpu_custom_call.1} parent=87 // pred_fallthru
          _
        // Predicated region
        $region97: #{tpu_custom_call.1} parent=87 // pred_check
          %p764 = pneg %p101
        $region98: #{tpu_custom_call.1} parent=87 // pred_check_branch
          %766 = sbr.rel (%p764) target = $region100
        $region99: #{tpu_custom_call.1} parent=87 // pred_region
          %768 = dma.done [#allocation6], 32
        $region100: #{tpu_custom_call.1} parent=87 // pred_fallthru
          _
        %s769 = sand.u32 %s43, 1
        %s770 = scalar_lea.sflag [#allocation9], %s769
        %s771 = sand.u32 %s114, 1
        %s772 = smul.addr %s771, 128
        %s773 = scalar_lea.vmem [#allocation8], %s772
        // Predicated region
        $region101: #{tpu_custom_call.1} parent=87 // pred_check
          %p774 = pneg %p127
        $region102: #{tpu_custom_call.1} parent=87 // pred_check_branch
          %776 = sbr.rel (%p774) target = $region104
        $region103: #{tpu_custom_call.1} parent=87 // pred_region
          %778 = dma.done %s770, 2048
        $region104: #{tpu_custom_call.1} parent=87 // pred_fallthru
          _
        %s779 = sand.u32 %s43, 1
        %s780 = scalar_lea.sflag [#allocation9], %s779
        %s781 = sand.u32 %s140, 1
        %s782 = smul.addr %s781, 2
        %s783 = scalar_lea.vmem [#allocation10], %s782
        // Predicated region
        $region105: #{tpu_custom_call.1} parent=87 // pred_check
          %p784 = pneg %p153
        $region106: #{tpu_custom_call.1} parent=87 // pred_check_branch
          %786 = sbr.rel (%p784) target = $region108
        $region107: #{tpu_custom_call.1} parent=87 // pred_region
          %788 = dma.done %s780, 32
        $region108: #{tpu_custom_call.1} parent=87 // pred_fallthru
          _
        %s789 = sand.u32 %s43, 1
        %s790 = scalar_lea.sflag [#allocation12], %s789
        %s791 = sand.u32 %s166, 1
        %s792 = smul.addr %s791, 64
        %s793 = scalar_lea.vmem [#allocation11], %s792
        // Predicated region
        $region109: #{tpu_custom_call.1} parent=87 // pred_check
          %p794 = pneg %p179
        $region110: #{tpu_custom_call.1} parent=87 // pred_check_branch
          %796 = sbr.rel (%p794) target = $region112
        $region111: #{tpu_custom_call.1} parent=87 // pred_region
          %798 = dma.done %s790, 1024
        $region112: #{tpu_custom_call.1} parent=87 // pred_fallthru
          _
        %s799 = sand.u32 %s43, 1
        %s800 = scalar_lea.sflag [#allocation12], %s799
        %s801 = sand.u32 %s218, 1
        %s802 = smul.addr %s801, 64
        %s803 = scalar_lea.vmem [#allocation13], %s802
        // Predicated region
        $region113: #{tpu_custom_call.1} parent=87 // pred_check
          %p804 = pneg %p231
        $region114: #{tpu_custom_call.1} parent=87 // pred_check_branch
          %806 = sbr.rel (%p804) target = $region116
        $region115: #{tpu_custom_call.1} parent=87 // pred_region
          %808 = dma.done %s800, 1024
        $region116: #{tpu_custom_call.1} parent=87 // pred_fallthru
          _
        %s809 = sand.u32 %s43, 1
        %s810 = scalar_lea.sflag [#allocation15], %s809
        %s811 = sand.u32 %s244, 1
        %s812 = scalar_lea.vmem [#allocation14], %s811
        // Predicated region
        $region117: #{tpu_custom_call.1} parent=87 // pred_check
          %p813 = pneg %p257
        $region118: #{tpu_custom_call.1} parent=87 // pred_check_branch
          %815 = sbr.rel (%p813) target = $region120
        $region119: #{tpu_custom_call.1} parent=87 // pred_region
          %817 = dma.done %s810, 16
        $region120: #{tpu_custom_call.1} parent=87 // pred_fallthru
          _
        %s818 = sand.u32 %s43, 1
        %s819 = scalar_lea.sflag [#allocation15], %s818
        %s820 = sand.u32 %s270, 1
        %s821 = smul.addr %s820, 128
        %s822 = scalar_lea.vmem [#allocation16], %s821
        // Predicated region
        $region121: #{tpu_custom_call.1} parent=87 // pred_check
          %p823 = pneg %p283
        $region122: #{tpu_custom_call.1} parent=87 // pred_check_branch
          %825 = sbr.rel (%p823) target = $region124
        $region123: #{tpu_custom_call.1} parent=87 // pred_region
          %827 = dma.done %s819, 2048
        $region124: #{tpu_custom_call.1} parent=87 // pred_fallthru
          _
        %s828 = sand.u32 %s43, 1
        %s829 = scalar_lea.sflag [#allocation18], %s828
        %s830 = sand.u32 %s322, 1
        %s831 = smul.addr %s830, 128
        %s832 = scalar_lea.vmem [#allocation17], %s831
        // Predicated region
        $region125: #{tpu_custom_call.1} parent=87 // pred_check
          %p833 = pneg %p335
        $region126: #{tpu_custom_call.1} parent=87 // pred_check_branch
          %835 = sbr.rel (%p833) target = $region128
        $region127: #{tpu_custom_call.1} parent=87 // pred_region
          %837 = dma.done %s829, 2048
        $region128: #{tpu_custom_call.1} parent=87 // pred_fallthru
          _
        %s838 = sand.u32 %s43, 1
        %s839 = scalar_lea.sflag [#allocation18], %s838
        %s840 = sand.u32 %s452, 1
        %s841 = scalar_lea.vmem [#allocation19], %s840
        // Predicated region
        $region129: #{tpu_custom_call.1} parent=87 // pred_check
          %p842 = pneg %p465
        $region130: #{tpu_custom_call.1} parent=87 // pred_check_branch
          %844 = sbr.rel (%p842) target = $region132
        $region131: #{tpu_custom_call.1} parent=87 // pred_region
          %846 = dma.done %s839, 16
        $region132: #{tpu_custom_call.1} parent=87 // pred_fallthru
          _
        %p847 = pneg %p59
        %p848 = pneg %p56
        %p849 = pneg %p80
        %p850 = pneg %p77
        %p851 = pneg %p101
        %p852 = pneg %p98
        %s853 = sand.u32 %s43, 1
        %s854 = scalar_lea.sflag [#allocation9], %s853
        %s855 = sand.u32 %s114, 1
        %s856 = smul.addr %s855, 128
        %s857 = scalar_lea.vmem [#allocation8], %s856
        %p858 = pneg %p127
        %p859 = pneg %p124
        %s860 = sand.u32 %s43, 1
        %s861 = scalar_lea.sflag [#allocation9], %s860
        %s862 = sand.u32 %s140, 1
        %s863 = smul.addr %s862, 2
        %s864 = scalar_lea.vmem [#allocation10], %s863
        %p865 = pneg %p153
        %p866 = pneg %p150
        %s867 = sand.u32 %s43, 1
        %s868 = scalar_lea.sflag [#allocation12], %s867
        %s869 = sand.u32 %s166, 1
        %s870 = smul.addr %s869, 64
        %s871 = scalar_lea.vmem [#allocation11], %s870
        %p872 = pneg %p179
        %p873 = pneg %p176
        %p874 = scmp.lt.s32.totalorder %s43, 1
        %s875 = scalar_select %p874, %s43, 1
        %s876 = scalar_lea.vmem %s6, %s875
        %p877 = pneg %p205
        %p878 = pneg %p202
        %s879 = sand.u32 %s43, 1
        %s880 = scalar_lea.sflag [#allocation12], %s879
        %s881 = sand.u32 %s218, 1
        %s882 = smul.addr %s881, 64
        %s883 = scalar_lea.vmem [#allocation13], %s882
        %p884 = pneg %p231
        %p885 = pneg %p228
        %s886 = sand.u32 %s43, 1
        %s887 = scalar_lea.sflag [#allocation15], %s886
        %s888 = sand.u32 %s244, 1
        %s889 = scalar_lea.vmem [#allocation14], %s888
        %p890 = pneg %p257
        %p891 = pneg %p254
        %s892 = sand.u32 %s43, 1
        %s893 = scalar_lea.sflag [#allocation15], %s892
        %s894 = sand.u32 %s270, 1
        %s895 = smul.addr %s894, 128
        %s896 = scalar_lea.vmem [#allocation16], %s895
        %p897 = pneg %p283
        %p898 = pneg %p280
        %p899 = scmp.lt.s32.totalorder %s43, 1
        %s900 = scalar_select %p899, %s43, 1
        %s901 = smul.addr %s900, 2
        %s902 = scalar_lea.vmem %s10, %s901
        %p903 = pneg %p309
        %p904 = pneg %p306
        %s905 = sand.u32 %s43, 1
        %s906 = scalar_lea.sflag [#allocation18], %s905
        %s907 = sand.u32 %s322, 1
        %s908 = smul.addr %s907, 128
        %s909 = scalar_lea.vmem [#allocation17], %s908
        %p910 = pneg %p335
        %p911 = pneg %p332
        %p912 = scmp.lt.s32.totalorder %s43, 1
        %s913 = scalar_select %p912, %s43, 1
        %s914 = scalar_lea.vmem %s12, %s913
        %p915 = pneg %p361
        %p916 = pneg %p358
        %p917 = scmp.lt.s32.totalorder %s43, 1
        %s918 = scalar_select %p917, %s43, 1
        %s919 = scalar_lea.vmem %s13, %s918
        %p920 = pneg %p387
        %p921 = pneg %p384
        %p922 = scmp.lt.s32.totalorder %s43, 1
        %s923 = scalar_select %p922, %s43, 1
        %s924 = scalar_lea.vmem %s14, %s923
        %p925 = pneg %p413
        %p926 = pneg %p410
        %p927 = scmp.lt.s32.totalorder %s43, 1
        %s928 = scalar_select %p927, %s43, 1
        %s929 = scalar_lea.vmem %s15, %s928
        %p930 = pneg %p439
        %p931 = pneg %p436
        %s932 = sand.u32 %s43, 1
        %s933 = scalar_lea.sflag [#allocation18], %s932
        %s934 = sand.u32 %s452, 1
        %s935 = scalar_lea.vmem [#allocation19], %s934
        %p936 = pneg %p465
        %p937 = pneg %p462
        %p938 = pneg %p486
        %p939 = pneg %p483
        %p940 = scmp.lt.s32.totalorder %s43, 1
        %s941 = scalar_select %p940, %s43, 1
        %s942 = scalar_lea.vmem %s6, %s941
        %p943 = scmp.lt.s32.totalorder %s43, 1
        %s944 = scalar_select %p943, %s43, 1
        %s945 = smul.addr %s944, 2
        %s946 = scalar_lea.vmem %s10, %s945
        %p947 = scmp.lt.s32.totalorder %s43, 1
        %s948 = scalar_select %p947, %s43, 1
        %s949 = scalar_lea.vmem %s12, %s948
        %p950 = scmp.lt.s32.totalorder %s43, 1
        %s951 = scalar_select %p950, %s43, 1
        %s952 = scalar_lea.vmem %s13, %s951
        %p953 = scmp.lt.s32.totalorder %s43, 1
        %s954 = scalar_select %p953, %s43, 1
        %s955 = scalar_lea.vmem %s14, %s954
        %p956 = scmp.lt.s32.totalorder %s43, 1
        %s957 = scalar_select %p956, %s43, 1
        %s958 = scalar_lea.vmem %s15, %s957
        %p960 = scmp.eq.s32.totalorder %s43, 0
        // Predicated region
        $region133: #{tpu_custom_call.1} parent=87 // pred_check
          %p961 = pneg %p960
        $region134: #{tpu_custom_call.1} parent=87 // pred_check_branch
          %963 = sbr.rel (%p961) target = $region136
        $region135: #{tpu_custom_call.1} parent=87 // pred_region
          %v964 = vld [vmem:[#allocation2] sm:$0xff]
          %v965 = vld [vmem:[#allocation2 + $0x8] sm:$0xff]
          %v966 = vld [vmem:[#allocation2 + $0x10] sm:$0xff]
          %v967 = vld [vmem:[#allocation2 + $0x18] sm:$0xff]
          %v968 = vld [vmem:[#allocation2 + $0x20] sm:$0xff]
          %v969 = vld [vmem:[#allocation2 + $0x28] sm:$0xff]
          %v970 = vld [vmem:[#allocation2 + $0x30] sm:$0xff]
          %v971 = vld [vmem:[#allocation2 + $0x38] sm:$0xff]
          %v972 = vld [vmem:[#allocation2 + $0x40] sm:$0xff]
          %v973 = vld [vmem:[#allocation2 + $0x48] sm:$0xff]
          %v974 = vld [vmem:[#allocation2 + $0x50] sm:$0xff]
          %v975 = vld [vmem:[#allocation2 + $0x58] sm:$0xff]
          %v976 = vld [vmem:[#allocation2 + $0x60] sm:$0xff]
          %v977 = vld [vmem:[#allocation2 + $0x68] sm:$0xff]
          %v978 = vld [vmem:[#allocation2 + $0x70] sm:$0xff]
          %v979 = vld [vmem:[#allocation2 + $0x78] sm:$0xff]
          %980 = vst [vmem:[#allocation20] sm:$0xff] %v964
          %981 = vst [vmem:[#allocation20 + $0x8] sm:$0xff] %v965
          %982 = vst [vmem:[#allocation20 + $0x10] sm:$0xff] %v966
          %983 = vst [vmem:[#allocation20 + $0x18] sm:$0xff] %v967
          %984 = vst [vmem:[#allocation20 + $0x20] sm:$0xff] %v968
          %985 = vst [vmem:[#allocation20 + $0x28] sm:$0xff] %v969
          %986 = vst [vmem:[#allocation20 + $0x30] sm:$0xff] %v970
          %987 = vst [vmem:[#allocation20 + $0x38] sm:$0xff] %v971
          %988 = vst [vmem:[#allocation20 + $0x40] sm:$0xff] %v972
          %989 = vst [vmem:[#allocation20 + $0x48] sm:$0xff] %v973
          %990 = vst [vmem:[#allocation20 + $0x50] sm:$0xff] %v974
          %991 = vst [vmem:[#allocation20 + $0x58] sm:$0xff] %v975
          %992 = vst [vmem:[#allocation20 + $0x60] sm:$0xff] %v976
          %993 = vst [vmem:[#allocation20 + $0x68] sm:$0xff] %v977
          %994 = vst [vmem:[#allocation20 + $0x70] sm:$0xff] %v978
          %995 = vst [vmem:[#allocation20 + $0x78] sm:$0xff] %v979
        $region136: #{tpu_custom_call.1} parent=87 // pred_fallthru
          _
        %v996 = vld [vmem:[#allocation20] sm:$0xff]
        %v997 = vld [vmem:[#allocation20 + $0x8] sm:$0xff]
        %v998 = vld [vmem:[#allocation20 + $0x10] sm:$0xff]
        %v999 = vld [vmem:[#allocation20 + $0x18] sm:$0xff]
        %v1000 = vld [vmem:[#allocation20 + $0x20] sm:$0xff]
        %v1001 = vld [vmem:[#allocation20 + $0x28] sm:$0xff]
        %v1002 = vld [vmem:[#allocation20 + $0x30] sm:$0xff]
        %v1003 = vld [vmem:[#allocation20 + $0x38] sm:$0xff]
        %v1004 = vld [vmem:[#allocation20 + $0x40] sm:$0xff]
        %v1005 = vld [vmem:[#allocation20 + $0x48] sm:$0xff]
        %v1006 = vld [vmem:[#allocation20 + $0x50] sm:$0xff]
        %v1007 = vld [vmem:[#allocation20 + $0x58] sm:$0xff]
        %v1008 = vld [vmem:[#allocation20 + $0x60] sm:$0xff]
        %v1009 = vld [vmem:[#allocation20 + $0x68] sm:$0xff]
        %v1010 = vld [vmem:[#allocation20 + $0x70] sm:$0xff]
        %v1011 = vld [vmem:[#allocation20 + $0x78] sm:$0xff]
        %v1012 = vld [vmem:[#allocation5] sm:$0xff]
        %v1013 = vld [vmem:[#allocation5 + $0x8] sm:$0xff]
        %v1014 = vld [vmem:[#allocation5 + $0x10] sm:$0xff]
        %v1015 = vld [vmem:[#allocation5 + $0x18] sm:$0xff]
        %v1016 = vld [vmem:[#allocation5 + $0x20] sm:$0xff]
        %v1017 = vld [vmem:[#allocation5 + $0x28] sm:$0xff]
        %v1018 = vld [vmem:[#allocation5 + $0x30] sm:$0xff]
        %v1019 = vld [vmem:[#allocation5 + $0x38] sm:$0xff]
        %v1020 = vld [vmem:[#allocation5 + $0x40] sm:$0xff]
        %v1021 = vld [vmem:[#allocation5 + $0x48] sm:$0xff]
        %v1022 = vld [vmem:[#allocation5 + $0x50] sm:$0xff]
        %v1023 = vld [vmem:[#allocation5 + $0x58] sm:$0xff]
        %v1024 = vld [vmem:[#allocation5 + $0x60] sm:$0xff]
        %v1025 = vld [vmem:[#allocation5 + $0x68] sm:$0xff]
        %v1026 = vld [vmem:[#allocation5 + $0x70] sm:$0xff]
        %v1027 = vld [vmem:[#allocation5 + $0x78] sm:$0xff]
        %v1028 = vld [vmem:[#allocation7] sm:$0x1]
        %v1029 = vld [vmem:[#allocation7 + $0x1] sm:$0x1]
        %v1030 = vadd.f32 %v996, %v1012
        %v1031 = vadd.f32 %v997, %v1013
        %v1032 = vadd.f32 %v998, %v1014
        %v1033 = vadd.f32 %v999, %v1015
        %v1034 = vadd.f32 %v1000, %v1016
        %v1035 = vadd.f32 %v1001, %v1017
        %v1036 = vadd.f32 %v1002, %v1018
        %v1037 = vadd.f32 %v1003, %v1019
        %v1038 = vadd.f32 %v1004, %v1020
        %v1039 = vadd.f32 %v1005, %v1021
        %v1040 = vadd.f32 %v1006, %v1022
        %v1041 = vadd.f32 %v1007, %v1023
        %v1042 = vadd.f32 %v1008, %v1024
        %v1043 = vadd.f32 %v1009, %v1025
        %v1044 = vadd.f32 %v1010, %v1026
        %v1045 = vadd.f32 %v1011, %v1027
        %v1046 = vpack.c.bf16 %v1031, %v1030
        %v1047 = vpack.c.bf16 %v1033, %v1032
        %v1048 = vpack.c.bf16 %v1035, %v1034
        %v1049 = vpack.c.bf16 %v1037, %v1036
        %v1050 = vpack.c.bf16 %v1039, %v1038
        %v1051 = vpack.c.bf16 %v1041, %v1040
        %v1052 = vpack.c.bf16 %v1043, %v1042
        %v1053 = vpack.c.bf16 %v1045, %v1044
        %v1054 = vpack.c.bf16 %v997, %v996
        %v1055 = vpack.c.bf16 %v999, %v998
        %v1056 = vpack.c.bf16 %v1001, %v1000
        %v1057 = vpack.c.bf16 %v1003, %v1002
        %v1058 = vpack.c.bf16 %v1005, %v1004
        %v1059 = vpack.c.bf16 %v1007, %v1006
        %v1060 = vpack.c.bf16 %v1009, %v1008
        %v1061 = vpack.c.bf16 %v1011, %v1010
        %v1062 = vld [vmem:[%s773] sm:$0xff]
        %v1063 = vld [vmem:[%s773 + $0x8] sm:$0xff]
        %v1064 = vld [vmem:[%s773 + $0x10] sm:$0xff]
        %v1065 = vld [vmem:[%s773 + $0x18] sm:$0xff]
        %v1066 = vld [vmem:[%s773 + $0x20] sm:$0xff]
        %v1067 = vld [vmem:[%s773 + $0x28] sm:$0xff]
        %v1068 = vld [vmem:[%s773 + $0x30] sm:$0xff]
        %v1069 = vld [vmem:[%s773 + $0x38] sm:$0xff]
        %v1070 = vld [vmem:[%s773 + $0x40] sm:$0xff]
        %v1071 = vld [vmem:[%s773 + $0x48] sm:$0xff]
        %v1072 = vld [vmem:[%s773 + $0x50] sm:$0xff]
        %v1073 = vld [vmem:[%s773 + $0x58] sm:$0xff]
        %v1074 = vld [vmem:[%s773 + $0x60] sm:$0xff]
        %v1075 = vld [vmem:[%s773 + $0x68] sm:$0xff]
        %v1076 = vld [vmem:[%s773 + $0x70] sm:$0xff]
        %v1077 = vld [vmem:[%s773 + $0x78] sm:$0xff]
        %v1078 = vld [vmem:[%s783] sm:$0x3]
        %v1080 = vperm.slane %v1078, 0
        %v1081 = vperm.slane %v1078, 1
        %v1100 = vunpack.c.l.b16 %v1062
        %v1101 = vunpack.c.h.b16 %v1062
        %v1102 = vunpack.c.l.b16 %v1063
        %v1103 = vunpack.c.h.b16 %v1063
        %v1104 = vunpack.c.l.b16 %v1064
        %v1105 = vunpack.c.h.b16 %v1064
        %v1106 = vunpack.c.l.b16 %v1065
        %v1107 = vunpack.c.h.b16 %v1065
        %v1108 = vunpack.c.l.b16 %v1066
        %v1109 = vunpack.c.h.b16 %v1066
        %v1110 = vunpack.c.l.b16 %v1067
        %v1111 = vunpack.c.h.b16 %v1067
        %v1112 = vunpack.c.l.b16 %v1068
        %v1113 = vunpack.c.h.b16 %v1068
        %v1114 = vunpack.c.l.b16 %v1069
        %v1115 = vunpack.c.h.b16 %v1069
        %v1116 = vunpack.c.l.b16 %v1070
        %v1117 = vunpack.c.h.b16 %v1070
        %v1118 = vunpack.c.l.b16 %v1071
        %v1119 = vunpack.c.h.b16 %v1071
        %v1120 = vunpack.c.l.b16 %v1072
        %v1121 = vunpack.c.h.b16 %v1072
        %v1122 = vunpack.c.l.b16 %v1073
        %v1123 = vunpack.c.h.b16 %v1073
        %v1124 = vunpack.c.l.b16 %v1074
        %v1125 = vunpack.c.h.b16 %v1074
        %v1126 = vunpack.c.l.b16 %v1075
        %v1127 = vunpack.c.h.b16 %v1075
        %v1128 = vunpack.c.l.b16 %v1076
        %v1129 = vunpack.c.h.b16 %v1076
        %v1130 = vunpack.c.l.b16 %v1077
        %v1131 = vunpack.c.h.b16 %v1077
        %v1132 = vpack.c.b16 %v1102, %v1100
        %v1133 = vpack.c.b16 %v1103, %v1101
        %v1134 = vpack.c.b16 %v1106, %v1104
        %v1135 = vpack.c.b16 %v1107, %v1105
        %v1136 = vpack.c.b16 %v1110, %v1108
        %v1137 = vpack.c.b16 %v1111, %v1109
        %v1138 = vpack.c.b16 %v1114, %v1112
        %v1139 = vpack.c.b16 %v1115, %v1113
        %v1140 = vpack.c.b16 %v1118, %v1116
        %v1141 = vpack.c.b16 %v1119, %v1117
        %v1142 = vpack.c.b16 %v1122, %v1120
        %v1143 = vpack.c.b16 %v1123, %v1121
        %v1144 = vpack.c.b16 %v1126, %v1124
        %v1145 = vpack.c.b16 %v1127, %v1125
        %v1146 = vpack.c.b16 %v1130, %v1128
        %v1147 = vpack.c.b16 %v1131, %v1129
        %1164 = vmatpush.bf16.msra.mxu0 %v1146
        %1165 = vmatpush.bf16.msra.mxu0 %v1144
        %1166 = vmatpush.bf16.msra.mxu0 %v1142
        %1167 = vmatpush.bf16.msra.mxu0 %v1140
        %1168 = vmatpush.bf16.msra.mxu0 %v1138
        %1169 = vmatpush.bf16.msra.mxu0 %v1136
        %1170 = vmatpush.bf16.msra.mxu0 %v1134
        %1171 = vmatpush.bf16.msra.mxu0 %v1132
        %1172 = vmatmul.bf16.gmra.mxu0 %v1046
        %v1173 = vpop.f32.mrf.mxu0
        %v1174 = vadd.f32 %v1080, %v1173
        %v1175 = vpop.f32.mrf.mxu0
        %v1176 = vadd.f32 %v1080, %v1175
        %1177 = vmatmul.bf16.gmra.mxu0 %v1047
        %v1178 = vpop.f32.mrf.mxu0
        %v1179 = vadd.f32 %v1080, %v1178
        %v1180 = vpop.f32.mrf.mxu0
        %v1181 = vadd.f32 %v1080, %v1180
        %1182 = vmatmul.bf16.gmra.mxu0 %v1048
        %v1183 = vpop.f32.mrf.mxu0
        %v1184 = vadd.f32 %v1080, %v1183
        %v1185 = vpop.f32.mrf.mxu0
        %v1186 = vadd.f32 %v1080, %v1185
        %1187 = vmatmul.bf16.gmra.mxu0 %v1049
        %v1188 = vpop.f32.mrf.mxu0
        %v1189 = vadd.f32 %v1080, %v1188
        %v1190 = vpop.f32.mrf.mxu0
        %v1191 = vadd.f32 %v1080, %v1190
        %1192 = vmatmul.bf16.gmra.mxu0 %v1050
        %v1193 = vpop.f32.mrf.mxu0
        %v1194 = vadd.f32 %v1080, %v1193
        %v1195 = vpop.f32.mrf.mxu0
        %v1196 = vadd.f32 %v1080, %v1195
        %1197 = vmatmul.bf16.gmra.mxu0 %v1051
        %v1198 = vpop.f32.mrf.mxu0
        %v1199 = vadd.f32 %v1080, %v1198
        %v1200 = vpop.f32.mrf.mxu0
        %v1201 = vadd.f32 %v1080, %v1200
        %1202 = vmatmul.bf16.gmra.mxu0 %v1052
        %v1203 = vpop.f32.mrf.mxu0
        %v1204 = vadd.f32 %v1080, %v1203
        %v1205 = vpop.f32.mrf.mxu0
        %v1206 = vadd.f32 %v1080, %v1205
        %1207 = vmatmul.bf16.gmra.mxu0 %v1053
        %v1208 = vpop.f32.mrf.mxu0
        %v1209 = vadd.f32 %v1080, %v1208
        %v1210 = vpop.f32.mrf.mxu0
        %v1211 = vadd.f32 %v1080, %v1210
        %1212 = vdwg.mxu0
        %1213 = vmatpush.bf16.msra.mxu0 %v1147
        %1214 = vmatpush.bf16.msra.mxu0 %v1145
        %1215 = vmatpush.bf16.msra.mxu0 %v1143
        %1216 = vmatpush.bf16.msra.mxu0 %v1141
        %1217 = vmatpush.bf16.msra.mxu0 %v1139
        %1218 = vmatpush.bf16.msra.mxu0 %v1137
        %1219 = vmatpush.bf16.msra.mxu0 %v1135
        %1220 = vmatpush.bf16.msra.mxu0 %v1133
        %1221 = vmatmul.bf16.gmra.mxu0 %v1046
        %v1222 = vpop.f32.mrf.mxu0
        %v1223 = vadd.f32 %v1081, %v1222
        %v1224 = vpop.f32.mrf.mxu0
        %v1225 = vadd.f32 %v1081, %v1224
        %1226 = vmatmul.bf16.gmra.mxu0 %v1047
        %v1227 = vpop.f32.mrf.mxu0
        %v1228 = vadd.f32 %v1081, %v1227
        %v1229 = vpop.f32.mrf.mxu0
        %v1230 = vadd.f32 %v1081, %v1229
        %1231 = vmatmul.bf16.gmra.mxu0 %v1048
        %v1232 = vpop.f32.mrf.mxu0
        %v1233 = vadd.f32 %v1081, %v1232
        %v1234 = vpop.f32.mrf.mxu0
        %v1235 = vadd.f32 %v1081, %v1234
        %1236 = vmatmul.bf16.gmra.mxu0 %v1049
        %v1237 = vpop.f32.mrf.mxu0
        %v1238 = vadd.f32 %v1081, %v1237
        %v1239 = vpop.f32.mrf.mxu0
        %v1240 = vadd.f32 %v1081, %v1239
        %1241 = vmatmul.bf16.gmra.mxu0 %v1050
        %v1242 = vpop.f32.mrf.mxu0
        %v1243 = vadd.f32 %v1081, %v1242
        %v1244 = vpop.f32.mrf.mxu0
        %v1245 = vadd.f32 %v1081, %v1244
        %1246 = vmatmul.bf16.gmra.mxu0 %v1051
        %v1247 = vpop.f32.mrf.mxu0
        %v1248 = vadd.f32 %v1081, %v1247
        %v1249 = vpop.f32.mrf.mxu0
        %v1250 = vadd.f32 %v1081, %v1249
        %1251 = vmatmul.bf16.gmra.mxu0 %v1052
        %v1252 = vpop.f32.mrf.mxu0
        %v1253 = vadd.f32 %v1081, %v1252
        %v1254 = vpop.f32.mrf.mxu0
        %v1255 = vadd.f32 %v1081, %v1254
        %1256 = vmatmul.bf16.gmra.mxu0 %v1053
        %v1257 = vpop.f32.mrf.mxu0
        %v1258 = vadd.f32 %v1081, %v1257
        %v1259 = vpop.f32.mrf.mxu0
        %v1260 = vadd.f32 %v1081, %v1259
        %1261 = vdwg.mxu0
        %v1262 = vmul.f32 %v1174, 0.17677669
        %v1263 = vmul.f32 %v1176, 0.17677669
        %v1264 = vmul.f32 %v1179, 0.17677669
        %v1265 = vmul.f32 %v1181, 0.17677669
        %v1266 = vmul.f32 %v1184, 0.17677669
        %v1267 = vmul.f32 %v1186, 0.17677669
        %v1268 = vmul.f32 %v1189, 0.17677669
        %v1269 = vmul.f32 %v1191, 0.17677669
        %v1270 = vmul.f32 %v1194, 0.17677669
        %v1271 = vmul.f32 %v1196, 0.17677669
        %v1272 = vmul.f32 %v1199, 0.17677669
        %v1273 = vmul.f32 %v1201, 0.17677669
        %v1274 = vmul.f32 %v1204, 0.17677669
        %v1275 = vmul.f32 %v1206, 0.17677669
        %v1276 = vmul.f32 %v1209, 0.17677669
        %v1277 = vmul.f32 %v1211, 0.17677669
        %v1278 = vld [vmem:[%s793] sm:$0xf]
        %v1279 = vld [vmem:[%s793 + $0x4] sm:$0xf]
        %v1280 = vld [vmem:[%s793 + $0x8] sm:$0xf]
        %v1281 = vld [vmem:[%s793 + $0xc] sm:$0xf]
        %v1282 = vld [vmem:[%s793 + $0x10] sm:$0xf]
        %v1283 = vld [vmem:[%s793 + $0x14] sm:$0xf]
        %v1284 = vld [vmem:[%s793 + $0x18] sm:$0xf]
        %v1285 = vld [vmem:[%s793 + $0x1c] sm:$0xf]
        %v1286 = vld [vmem:[%s793 + $0x20] sm:$0xf]
        %v1287 = vld [vmem:[%s793 + $0x24] sm:$0xf]
        %v1288 = vld [vmem:[%s793 + $0x28] sm:$0xf]
        %v1289 = vld [vmem:[%s793 + $0x2c] sm:$0xf]
        %v1290 = vld [vmem:[%s793 + $0x30] sm:$0xf]
        %v1291 = vld [vmem:[%s793 + $0x34] sm:$0xf]
        %v1292 = vld [vmem:[%s793 + $0x38] sm:$0xf]
        %v1293 = vld [vmem:[%s793 + $0x3c] sm:$0xf]
        %v1294 = vld [vmem:[%s942] sm:$0x1]
        %v1296 = vperm.slane %v1294, 0
        %v1314 = vunpack.c.l.b16 %v1278
        %v1315 = vunpack.c.l.b16 %v1279
        %v1316 = vunpack.c.l.b16 %v1280
        %v1317 = vunpack.c.l.b16 %v1281
        %v1318 = vunpack.c.l.b16 %v1282
        %v1319 = vunpack.c.l.b16 %v1283
        %v1320 = vunpack.c.l.b16 %v1284
        %v1321 = vunpack.c.l.b16 %v1285
        %v1322 = vunpack.c.l.b16 %v1286
        %v1323 = vunpack.c.l.b16 %v1287
        %v1324 = vunpack.c.l.b16 %v1288
        %v1325 = vunpack.c.l.b16 %v1289
        %v1326 = vunpack.c.l.b16 %v1290
        %v1327 = vunpack.c.l.b16 %v1291
        %v1328 = vunpack.c.l.b16 %v1292
        %v1329 = vunpack.c.l.b16 %v1293
        %v1330 = vpack.c.b16 %v1315, %v1314
        %v1331 = vpack.c.b16 %v1317, %v1316
        %v1332 = vpack.c.b16 %v1319, %v1318
        %v1333 = vpack.c.b16 %v1321, %v1320
        %v1334 = vpack.c.b16 %v1323, %v1322
        %v1335 = vpack.c.b16 %v1325, %v1324
        %v1336 = vpack.c.b16 %v1327, %v1326
        %v1337 = vpack.c.b16 %v1329, %v1328
        %1346 = vmatpush.bf16.msra.mxu0 %v1337
        %1347 = vmatpush.bf16.msra.mxu0 %v1336
        %1348 = vmatpush.bf16.msra.mxu0 %v1335
        %1349 = vmatpush.bf16.msra.mxu0 %v1334
        %1350 = vmatpush.bf16.msra.mxu0 %v1333
        %1351 = vmatpush.bf16.msra.mxu0 %v1332
        %1352 = vmatpush.bf16.msra.mxu0 %v1331
        %1353 = vmatpush.bf16.msra.mxu0 %v1330
        %1354 = vmatmul.bf16.gmra.mxu0 %v1054
        %v1355 = vpop.f32.mrf.mxu0
        %v1356 = vadd.f32 %v1296, %v1355
        %v1357 = vpop.f32.mrf.mxu0
        %v1358 = vadd.f32 %v1296, %v1357
        %1359 = vmatmul.bf16.gmra.mxu0 %v1055
        %v1360 = vpop.f32.mrf.mxu0
        %v1361 = vadd.f32 %v1296, %v1360
        %v1362 = vpop.f32.mrf.mxu0
        %v1363 = vadd.f32 %v1296, %v1362
        %1364 = vmatmul.bf16.gmra.mxu0 %v1056
        %v1365 = vpop.f32.mrf.mxu0
        %v1366 = vadd.f32 %v1296, %v1365
        %v1367 = vpop.f32.mrf.mxu0
        %v1368 = vadd.f32 %v1296, %v1367
        %1369 = vmatmul.bf16.gmra.mxu0 %v1057
        %v1370 = vpop.f32.mrf.mxu0
        %v1371 = vadd.f32 %v1296, %v1370
        %v1372 = vpop.f32.mrf.mxu0
        %v1373 = vadd.f32 %v1296, %v1372
        %1374 = vmatmul.bf16.gmra.mxu0 %v1058
        %v1375 = vpop.f32.mrf.mxu0
        %v1376 = vadd.f32 %v1296, %v1375
        %v1377 = vpop.f32.mrf.mxu0
        %v1378 = vadd.f32 %v1296, %v1377
        %1379 = vmatmul.bf16.gmra.mxu0 %v1059
        %v1380 = vpop.f32.mrf.mxu0
        %v1381 = vadd.f32 %v1296, %v1380
        %v1382 = vpop.f32.mrf.mxu0
        %v1383 = vadd.f32 %v1296, %v1382
        %1384 = vmatmul.bf16.gmra.mxu0 %v1060
        %v1385 = vpop.f32.mrf.mxu0
        %v1386 = vadd.f32 %v1296, %v1385
        %v1387 = vpop.f32.mrf.mxu0
        %v1388 = vadd.f32 %v1296, %v1387
        %1389 = vmatmul.bf16.gmra.mxu0 %v1061
        %v1390 = vpop.f32.mrf.mxu0
        %v1391 = vadd.f32 %v1296, %v1390
        %v1392 = vpop.f32.mrf.mxu0
        %v1393 = vadd.f32 %v1296, %v1392
        %1394 = vdwg.mxu0
        %v1395 = vld [vmem:[%s803] sm:$0xf]
        %v1396 = vld [vmem:[%s803 + $0x4] sm:$0xf]
        %v1397 = vld [vmem:[%s803 + $0x8] sm:$0xf]
        %v1398 = vld [vmem:[%s803 + $0xc] sm:$0xf]
        %v1399 = vld [vmem:[%s803 + $0x10] sm:$0xf]
        %v1400 = vld [vmem:[%s803 + $0x14] sm:$0xf]
        %v1401 = vld [vmem:[%s803 + $0x18] sm:$0xf]
        %v1402 = vld [vmem:[%s803 + $0x1c] sm:$0xf]
        %v1403 = vld [vmem:[%s803 + $0x20] sm:$0xf]
        %v1404 = vld [vmem:[%s803 + $0x24] sm:$0xf]
        %v1405 = vld [vmem:[%s803 + $0x28] sm:$0xf]
        %v1406 = vld [vmem:[%s803 + $0x2c] sm:$0xf]
        %v1407 = vld [vmem:[%s803 + $0x30] sm:$0xf]
        %v1408 = vld [vmem:[%s803 + $0x34] sm:$0xf]
        %v1409 = vld [vmem:[%s803 + $0x38] sm:$0xf]
        %v1410 = vld [vmem:[%s803 + $0x3c] sm:$0xf]
        %v1411 = vpack.c.bf16 %v1263, %v1262
        %v1412 = vpack.c.bf16 %v1265, %v1264
        %v1413 = vpack.c.bf16 %v1267, %v1266
        %v1414 = vpack.c.bf16 %v1269, %v1268
        %v1415 = vpack.c.bf16 %v1225, %v1223
        %v1416 = vpack.c.bf16 %v1230, %v1228
        %v1417 = vpack.c.bf16 %v1235, %v1233
        %v1418 = vpack.c.bf16 %v1240, %v1238
        %v1419 = vpack.c.bf16 %v1358, %v1356
        %v1420 = vpack.c.bf16 %v1363, %v1361
        %v1421 = vpack.c.bf16 %v1368, %v1366
        %v1422 = vpack.c.bf16 %v1373, %v1371
        %v1424 = vperm.slane %v1028, 0
        %vm1426 = vcmask 261120
        %v1428 = vsel %vm1426, %v1411, 0
        %v1431 = vsel %vm1426, %v1412, 0
        %v1434 = vsel %vm1426, %v1413, 0
        %v1437 = vsel %vm1426, %v1414, 0
        %v1440 = vsel %vm1426, %v1415, 0
        %v1443 = vsel %vm1426, %v1416, 0
        %v1446 = vsel %vm1426, %v1417, 0
        %v1449 = vsel %vm1426, %v1418, 0
        %1451 = vmatpush.bf16.xpose.msra.mxu0 0
        %1452 = vmatpush.bf16.xpose.msra.mxu0 0
        %1453 = vmatpush.bf16.xpose.msra.mxu0 0
        %1454 = vmatpush.bf16.xpose.msra.mxu0 0
        %1455 = vmatpush.bf16.xpose.msra.mxu0 %v1449
        %1456 = vmatpush.bf16.xpose.msra.mxu0 %v1446
        %1457 = vmatpush.bf16.xpose.msra.mxu0 %v1443
        %1458 = vmatpush.bf16.xpose.msra.mxu0 %v1440
        %1459 = vmatmul.bf16.gmra.mxu0 %v1428
        %v1460 = vpop.f32.mrf.mxu0
        %v1461 = vadd.f32 %v1424, %v1460
        %v1462 = vpop.f32.mrf.mxu0
        %v1463 = vadd.f32 %v1424, %v1462
        %1464 = vmatmul.bf16.gmra.mxu0 %v1431
        %v1465 = vpop.f32.mrf.mxu0
        %v1466 = vadd.f32 %v1424, %v1465
        %v1467 = vpop.f32.mrf.mxu0
        %v1468 = vadd.f32 %v1424, %v1467
        %1469 = vmatmul.bf16.gmra.mxu0 %v1434
        %v1470 = vpop.f32.mrf.mxu0
        %v1471 = vadd.f32 %v1424, %v1470
        %v1472 = vpop.f32.mrf.mxu0
        %v1473 = vadd.f32 %v1424, %v1472
        %1474 = vmatmul.bf16.gmra.mxu0 %v1437
        %v1475 = vpop.f32.mrf.mxu0
        %v1476 = vadd.f32 %v1424, %v1475
        %v1477 = vpop.f32.mrf.mxu0
        %v1478 = vadd.f32 %v1424, %v1477
        %1479 = vdwg.mxu0
        %vm1480 = vcmask 523264
        %v1481 = vsel %vm1480, %v1461, -inf
        %1482 = vmax.xlane.f32.xlu0 %v1481
        %v1483 = vpop.xlane.xlu0 %1482
        %v1484 = vsel %vm1480, %v1463, -inf
        %1485 = vmax.xlane.f32.xlu0 %v1484
        %v1486 = vpop.xlane.xlu0 %1485
        %v1487 = vsel %vm1480, %v1466, -inf
        %1488 = vmax.xlane.f32.xlu0 %v1487
        %v1489 = vpop.xlane.xlu0 %1488
        %v1490 = vsel %vm1480, %v1468, -inf
        %1491 = vmax.xlane.f32.xlu0 %v1490
        %v1492 = vpop.xlane.xlu0 %1491
        %v1493 = vsel %vm1480, %v1471, -inf
        %1494 = vmax.xlane.f32.xlu0 %v1493
        %v1495 = vpop.xlane.xlu0 %1494
        %v1496 = vsel %vm1480, %v1473, -inf
        %1497 = vmax.xlane.f32.xlu0 %v1496
        %v1498 = vpop.xlane.xlu0 %1497
        %v1499 = vsel %vm1480, %v1476, -inf
        %1500 = vmax.xlane.f32.xlu0 %v1499
        %v1501 = vpop.xlane.xlu0 %1500
        %v1502 = vsel %vm1480, %v1478, -inf
        %1503 = vmax.xlane.f32.xlu0 %v1502
        %v1504 = vpop.xlane.xlu0 %1503
        %v1505 = vsub.f32 %v1461, %v1483
        %v1506 = vsub.f32 %v1463, %v1486
        %v1507 = vsub.f32 %v1466, %v1489
        %v1508 = vsub.f32 %v1468, %v1492
        %v1509 = vsub.f32 %v1471, %v1495
        %v1510 = vsub.f32 %v1473, %v1498
        %v1511 = vsub.f32 %v1476, %v1501
        %v1512 = vsub.f32 %v1478, %v1504
        %v1513 = vmul.f32 %v1505, 1.442695
        %v1514 = vpow.pop %v1513
        %v1515 = vmul.f32 %v1506, 1.442695
        %v1516 = vpow.pop %v1515
        %v1517 = vmul.f32 %v1507, 1.442695
        %v1518 = vpow.pop %v1517
        %v1519 = vmul.f32 %v1508, 1.442695
        %v1520 = vpow.pop %v1519
        %v1521 = vmul.f32 %v1509, 1.442695
        %v1522 = vpow.pop %v1521
        %v1523 = vmul.f32 %v1510, 1.442695
        %v1524 = vpow.pop %v1523
        %v1525 = vmul.f32 %v1511, 1.442695
        %v1526 = vpow.pop %v1525
        %v1527 = vmul.f32 %v1512, 1.442695
        %v1528 = vpow.pop %v1527
        %v1529 = vsel %vm1480, %v1514, 0.0
        %1530 = vadd.xlane.f32.xlu0 %v1529
        %v1531 = vpop.xlane.xlu0 %1530
        %v1532 = vsel %vm1480, %v1516, 0.0
        %1533 = vadd.xlane.f32.xlu0 %v1532
        %v1534 = vpop.xlane.xlu0 %1533
        %v1535 = vsel %vm1480, %v1518, 0.0
        %1536 = vadd.xlane.f32.xlu0 %v1535
        %v1537 = vpop.xlane.xlu0 %1536
        %v1538 = vsel %vm1480, %v1520, 0.0
        %1539 = vadd.xlane.f32.xlu0 %v1538
        %v1540 = vpop.xlane.xlu0 %1539
        %v1541 = vsel %vm1480, %v1522, 0.0
        %1542 = vadd.xlane.f32.xlu0 %v1541
        %v1543 = vpop.xlane.xlu0 %1542
        %v1544 = vsel %vm1480, %v1524, 0.0
        %1545 = vadd.xlane.f32.xlu0 %v1544
        %v1546 = vpop.xlane.xlu0 %1545
        %v1547 = vsel %vm1480, %v1526, 0.0
        %1548 = vadd.xlane.f32.xlu0 %v1547
        %v1549 = vpop.xlane.xlu0 %1548
        %v1550 = vsel %vm1480, %v1528, 0.0
        %1551 = vadd.xlane.f32.xlu0 %v1550
        %v1552 = vpop.xlane.xlu0 %1551
        %v1553 = vrcp.pop %v1531
        %v1554 = vrcp.pop %v1534
        %v1555 = vrcp.pop %v1537
        %v1556 = vrcp.pop %v1540
        %v1557 = vrcp.pop %v1543
        %v1558 = vrcp.pop %v1546
        %v1559 = vrcp.pop %v1549
        %v1560 = vrcp.pop %v1552
        %v1561 = vmul.f32 %v1514, %v1553
        %v1562 = vmul.f32 %v1516, %v1554
        %v1563 = vmul.f32 %v1518, %v1555
        %v1564 = vmul.f32 %v1520, %v1556
        %v1565 = vmul.f32 %v1522, %v1557
        %v1566 = vmul.f32 %v1524, %v1558
        %v1567 = vmul.f32 %v1526, %v1559
        %v1568 = vmul.f32 %v1528, %v1560
        %v1569 = vpack.c.bf16 %v1562, %v1561
        %v1570 = vpack.c.bf16 %v1564, %v1563
        %v1571 = vpack.c.bf16 %v1566, %v1565
        %v1572 = vpack.c.bf16 %v1568, %v1567
        %v1574 = vsel %vm1480, %v1569, 0
        %v1577 = vsel %vm1480, %v1570, 0
        %v1580 = vsel %vm1480, %v1571, 0
        %v1583 = vsel %vm1480, %v1572, 0
        %1585 = vmatpush.bf16.msra.mxu0 0
        %1586 = vmatpush.bf16.msra.mxu0 0
        %1587 = vmatpush.bf16.msra.mxu0 0
        %1588 = vmatpush.bf16.msra.mxu0 0
        %1589 = vmatpush.bf16.msra.mxu0 %v1422
        %1590 = vmatpush.bf16.msra.mxu0 %v1421
        %1591 = vmatpush.bf16.msra.mxu0 %v1420
        %1592 = vmatpush.bf16.msra.mxu0 %v1419
        %1593 = vmatmul.bf16.gmra.mxu0 %v1574
        %v1594 = vpop.f32.mrf.mxu0
        %v1595 = vadd.f32 0.0, %v1594
        %v1596 = vpop.f32.mrf.mxu0
        %v1597 = vadd.f32 0.0, %v1596
        %1598 = vmatmul.bf16.gmra.mxu0 %v1577
        %v1599 = vpop.f32.mrf.mxu0
        %v1600 = vadd.f32 0.0, %v1599
        %v1601 = vpop.f32.mrf.mxu0
        %v1602 = vadd.f32 0.0, %v1601
        %1603 = vmatmul.bf16.gmra.mxu0 %v1580
        %v1604 = vpop.f32.mrf.mxu0
        %v1605 = vadd.f32 0.0, %v1604
        %v1606 = vpop.f32.mrf.mxu0
        %v1607 = vadd.f32 0.0, %v1606
        %1608 = vmatmul.bf16.gmra.mxu0 %v1583
        %v1609 = vpop.f32.mrf.mxu0
        %v1610 = vadd.f32 0.0, %v1609
        %v1611 = vpop.f32.mrf.mxu0
        %v1612 = vadd.f32 0.0, %v1611
        %1613 = vdwg.mxu0
        %v1614 = vpack.c.bf16 %v1597, %v1595
        %v1615 = vpack.c.bf16 %v1602, %v1600
        %v1616 = vpack.c.bf16 %v1607, %v1605
        %v1617 = vpack.c.bf16 %v1612, %v1610
        %1622 = vrot.lane.b32.xlu0 %v1411, 96
        %v1623 = vpop.permute.xlu0 %1622
        %1624 = vrot.lane.b32.xlu0 %v1412, 96
        %v1625 = vpop.permute.xlu0 %1624
        %1626 = vrot.lane.b32.xlu0 %v1413, 96
        %v1627 = vpop.permute.xlu0 %1626
        %1628 = vrot.lane.b32.xlu0 %v1414, 96
        %v1629 = vpop.permute.xlu0 %1628
        %1634 = vrot.lane.b32.xlu0 %v1415, 96
        %v1635 = vpop.permute.xlu0 %1634
        %1636 = vrot.lane.b32.xlu0 %v1416, 96
        %v1637 = vpop.permute.xlu0 %1636
        %1638 = vrot.lane.b32.xlu0 %v1417, 96
        %v1639 = vpop.permute.xlu0 %1638
        %1640 = vrot.lane.b32.xlu0 %v1418, 96
        %v1641 = vpop.permute.xlu0 %1640
        %v1643 = vsel %vm1426, %v1623, 0
        %v1646 = vsel %vm1426, %v1625, 0
        %v1649 = vsel %vm1426, %v1627, 0
        %v1652 = vsel %vm1426, %v1629, 0
        %v1655 = vsel %vm1426, %v1635, 0
        %v1658 = vsel %vm1426, %v1637, 0
        %v1661 = vsel %vm1426, %v1639, 0
        %v1664 = vsel %vm1426, %v1641, 0
        %1666 = vmatpush.bf16.xpose.msra.mxu0 0
        %1667 = vmatpush.bf16.xpose.msra.mxu0 0
        %1668 = vmatpush.bf16.xpose.msra.mxu0 0
        %1669 = vmatpush.bf16.xpose.msra.mxu0 0
        %1670 = vmatpush.bf16.xpose.msra.mxu0 %v1664
        %1671 = vmatpush.bf16.xpose.msra.mxu0 %v1661
        %1672 = vmatpush.bf16.xpose.msra.mxu0 %v1658
        %1673 = vmatpush.bf16.xpose.msra.mxu0 %v1655
        %1674 = vmatmul.bf16.gmra.mxu0 %v1643
        %v1675 = vpop.f32.mrf.mxu0
        %v1676 = vadd.f32 %v1424, %v1675
        %v1677 = vpop.f32.mrf.mxu0
        %v1678 = vadd.f32 %v1424, %v1677
        %1679 = vmatmul.bf16.gmra.mxu0 %v1646
        %v1680 = vpop.f32.mrf.mxu0
        %v1681 = vadd.f32 %v1424, %v1680
        %v1682 = vpop.f32.mrf.mxu0
        %v1683 = vadd.f32 %v1424, %v1682
        %1684 = vmatmul.bf16.gmra.mxu0 %v1649
        %v1685 = vpop.f32.mrf.mxu0
        %v1686 = vadd.f32 %v1424, %v1685
        %v1687 = vpop.f32.mrf.mxu0
        %v1688 = vadd.f32 %v1424, %v1687
        %1689 = vmatmul.bf16.gmra.mxu0 %v1652
        %v1690 = vpop.f32.mrf.mxu0
        %v1691 = vadd.f32 %v1424, %v1690
        %v1692 = vpop.f32.mrf.mxu0
        %v1693 = vadd.f32 %v1424, %v1692
        %1694 = vdwg.mxu0
        %v1695 = vsel %vm1480, %v1676, -inf
        %1696 = vmax.xlane.f32.xlu0 %v1695
        %v1697 = vpop.xlane.xlu0 %1696
        %v1698 = vsel %vm1480, %v1678, -inf
        %1699 = vmax.xlane.f32.xlu0 %v1698
        %v1700 = vpop.xlane.xlu0 %1699
        %v1701 = vsel %vm1480, %v1681, -inf
        %1702 = vmax.xlane.f32.xlu0 %v1701
        %v1703 = vpop.xlane.xlu0 %1702
        %v1704 = vsel %vm1480, %v1683, -inf
        %1705 = vmax.xlane.f32.xlu0 %v1704
        %v1706 = vpop.xlane.xlu0 %1705
        %v1707 = vsel %vm1480, %v1686, -inf
        %1708 = vmax.xlane.f32.xlu0 %v1707
        %v1709 = vpop.xlane.xlu0 %1708
        %v1710 = vsel %vm1480, %v1688, -inf
        %1711 = vmax.xlane.f32.xlu0 %v1710
        %v1712 = vpop.xlane.xlu0 %1711
        %v1713 = vsel %vm1480, %v1691, -inf
        %1714 = vmax.xlane.f32.xlu0 %v1713
        %v1715 = vpop.xlane.xlu0 %1714
        %v1716 = vsel %vm1480, %v1693, -inf
        %1717 = vmax.xlane.f32.xlu0 %v1716
        %v1718 = vpop.xlane.xlu0 %1717
        %v1719 = vsub.f32 %v1676, %v1697
        %v1720 = vsub.f32 %v1678, %v1700
        %v1721 = vsub.f32 %v1681, %v1703
        %v1722 = vsub.f32 %v1683, %v1706
        %v1723 = vsub.f32 %v1686, %v1709
        %v1724 = vsub.f32 %v1688, %v1712
        %v1725 = vsub.f32 %v1691, %v1715
        %v1726 = vsub.f32 %v1693, %v1718
        %v1727 = vmul.f32 %v1719, 1.442695
        %v1728 = vpow.pop %v1727
        %v1729 = vmul.f32 %v1720, 1.442695
        %v1730 = vpow.pop %v1729
        %v1731 = vmul.f32 %v1721, 1.442695
        %v1732 = vpow.pop %v1731
        %v1733 = vmul.f32 %v1722, 1.442695
        %v1734 = vpow.pop %v1733
        %v1735 = vmul.f32 %v1723, 1.442695
        %v1736 = vpow.pop %v1735
        %v1737 = vmul.f32 %v1724, 1.442695
        %v1738 = vpow.pop %v1737
        %v1739 = vmul.f32 %v1725, 1.442695
        %v1740 = vpow.pop %v1739
        %v1741 = vmul.f32 %v1726, 1.442695
        %v1742 = vpow.pop %v1741
        %v1743 = vsel %vm1480, %v1728, 0.0
        %1744 = vadd.xlane.f32.xlu0 %v1743
        %v1745 = vpop.xlane.xlu0 %1744
        %v1746 = vsel %vm1480, %v1730, 0.0
        %1747 = vadd.xlane.f32.xlu0 %v1746
        %v1748 = vpop.xlane.xlu0 %1747
        %v1749 = vsel %vm1480, %v1732, 0.0
        %1750 = vadd.xlane.f32.xlu0 %v1749
        %v1751 = vpop.xlane.xlu0 %1750
        %v1752 = vsel %vm1480, %v1734, 0.0
        %1753 = vadd.xlane.f32.xlu0 %v1752
        %v1754 = vpop.xlane.xlu0 %1753
        %v1755 = vsel %vm1480, %v1736, 0.0
        %1756 = vadd.xlane.f32.xlu0 %v1755
        %v1757 = vpop.xlane.xlu0 %1756
        %v1758 = vsel %vm1480, %v1738, 0.0
        %1759 = vadd.xlane.f32.xlu0 %v1758
        %v1760 = vpop.xlane.xlu0 %1759
        %v1761 = vsel %vm1480, %v1740, 0.0
        %1762 = vadd.xlane.f32.xlu0 %v1761
        %v1763 = vpop.xlane.xlu0 %1762
        %v1764 = vsel %vm1480, %v1742, 0.0
        %1765 = vadd.xlane.f32.xlu0 %v1764
        %v1766 = vpop.xlane.xlu0 %1765
        %v1767 = vrcp.pop %v1745
        %v1768 = vrcp.pop %v1748
        %v1769 = vrcp.pop %v1751
        %v1770 = vrcp.pop %v1754
        %v1771 = vrcp.pop %v1757
        %v1772 = vrcp.pop %v1760
        %v1773 = vrcp.pop %v1763
        %v1774 = vrcp.pop %v1766
        %v1775 = vmul.f32 %v1728, %v1767
        %v1776 = vmul.f32 %v1730, %v1768
        %v1777 = vmul.f32 %v1732, %v1769
        %v1778 = vmul.f32 %v1734, %v1770
        %v1779 = vmul.f32 %v1736, %v1771
        %v1780 = vmul.f32 %v1738, %v1772
        %v1781 = vmul.f32 %v1740, %v1773
        %v1782 = vmul.f32 %v1742, %v1774
        %v1783 = vpack.c.bf16 %v1776, %v1775
        %v1784 = vpack.c.bf16 %v1778, %v1777
        %v1785 = vpack.c.bf16 %v1780, %v1779
        %v1786 = vpack.c.bf16 %v1782, %v1781
        %1791 = vrot.lane.b32.xlu0 %v1419, 96
        %v1792 = vpop.permute.xlu0 %1791
        %1793 = vrot.lane.b32.xlu0 %v1420, 96
        %v1794 = vpop.permute.xlu0 %1793
        %1795 = vrot.lane.b32.xlu0 %v1421, 96
        %v1796 = vpop.permute.xlu0 %1795
        %1797 = vrot.lane.b32.xlu0 %v1422, 96
        %v1798 = vpop.permute.xlu0 %1797
        %v1804 = vsel %vm1480, %v1783, 0
        %v1807 = vsel %vm1480, %v1784, 0
        %v1810 = vsel %vm1480, %v1785, 0
        %v1813 = vsel %vm1480, %v1786, 0
        %1815 = vmatpush.bf16.msra.mxu0 0
        %1816 = vmatpush.bf16.msra.mxu0 0
        %1817 = vmatpush.bf16.msra.mxu0 0
        %1818 = vmatpush.bf16.msra.mxu0 0
        %1819 = vmatpush.bf16.msra.mxu0 %v1798
        %1820 = vmatpush.bf16.msra.mxu0 %v1796
        %1821 = vmatpush.bf16.msra.mxu0 %v1794
        %1822 = vmatpush.bf16.msra.mxu0 %v1792
        %1823 = vmatmul.bf16.gmra.mxu0 %v1804
        %v1824 = vpop.f32.mrf.mxu0
        %v1825 = vadd.f32 0.0, %v1824
        %v1826 = vpop.f32.mrf.mxu0
        %v1827 = vadd.f32 0.0, %v1826
        %1828 = vmatmul.bf16.gmra.mxu0 %v1807
        %v1829 = vpop.f32.mrf.mxu0
        %v1830 = vadd.f32 0.0, %v1829
        %v1831 = vpop.f32.mrf.mxu0
        %v1832 = vadd.f32 0.0, %v1831
        %1833 = vmatmul.bf16.gmra.mxu0 %v1810
        %v1834 = vpop.f32.mrf.mxu0
        %v1835 = vadd.f32 0.0, %v1834
        %v1836 = vpop.f32.mrf.mxu0
        %v1837 = vadd.f32 0.0, %v1836
        %1838 = vmatmul.bf16.gmra.mxu0 %v1813
        %v1839 = vpop.f32.mrf.mxu0
        %v1840 = vadd.f32 0.0, %v1839
        %v1841 = vpop.f32.mrf.mxu0
        %v1842 = vadd.f32 0.0, %v1841
        %1843 = vdwg.mxu0
        %v1844 = vpack.c.bf16 %v1827, %v1825
        %v1845 = vpack.c.bf16 %v1832, %v1830
        %v1846 = vpack.c.bf16 %v1837, %v1835
        %v1847 = vpack.c.bf16 %v1842, %v1840
        %v1852 = vunpack.c.l.b16 %v1399
        %v1853 = vunpack.c.l.b16 %v1400
        %v1854 = vunpack.c.l.b16 %v1401
        %v1855 = vunpack.c.l.b16 %v1402
        %v1856 = vpack.c.b16 %v1853, %v1852
        %v1857 = vpack.c.b16 %v1855, %v1854
        %v1861 = vsel %vm1426, %v1844, 0
        %v1864 = vsel %vm1426, %v1845, 0
        %v1867 = vsel %vm1426, %v1846, 0
        %v1870 = vsel %vm1426, %v1847, 0
        %1872 = vmatpush.bf16.msra.mxu0 0
        %1873 = vmatpush.bf16.msra.mxu0 0
        %1874 = vmatpush.bf16.msra.mxu0 0
        %1875 = vmatpush.bf16.msra.mxu0 0
        %1876 = vmatpush.bf16.msra.mxu0 0
        %1877 = vmatpush.bf16.msra.mxu0 0
        %1878 = vmatpush.bf16.msra.mxu0 %v1857
        %1879 = vmatpush.bf16.msra.mxu0 %v1856
        %1880 = vmatmul.bf16.gmra.mxu0 %v1861
        %v1881 = vpop.f32.mrf.mxu0
        %v1882 = vadd.f32 0.0, %v1881
        %v1883 = vpop.f32.mrf.mxu0
        %v1884 = vadd.f32 0.0, %v1883
        %1885 = vmatmul.bf16.gmra.mxu0 %v1864
        %v1886 = vpop.f32.mrf.mxu0
        %v1887 = vadd.f32 0.0, %v1886
        %v1888 = vpop.f32.mrf.mxu0
        %v1889 = vadd.f32 0.0, %v1888
        %1890 = vmatmul.bf16.gmra.mxu0 %v1867
        %v1891 = vpop.f32.mrf.mxu0
        %v1892 = vadd.f32 0.0, %v1891
        %v1893 = vpop.f32.mrf.mxu0
        %v1894 = vadd.f32 0.0, %v1893
        %1895 = vmatmul.bf16.gmra.mxu0 %v1870
        %v1896 = vpop.f32.mrf.mxu0
        %v1897 = vadd.f32 0.0, %v1896
        %v1898 = vpop.f32.mrf.mxu0
        %v1899 = vadd.f32 0.0, %v1898
        %1900 = vdwg.mxu0
        %v1905 = vunpack.c.l.b16 %v1395
        %v1906 = vunpack.c.l.b16 %v1396
        %v1907 = vunpack.c.l.b16 %v1397
        %v1908 = vunpack.c.l.b16 %v1398
        %v1909 = vpack.c.b16 %v1906, %v1905
        %v1910 = vpack.c.b16 %v1908, %v1907
        %v1914 = vsel %vm1426, %v1614, 0
        %v1917 = vsel %vm1426, %v1615, 0
        %v1920 = vsel %vm1426, %v1616, 0
        %v1923 = vsel %vm1426, %v1617, 0
        %1925 = vmatpush.bf16.msra.mxu0 0
        %1926 = vmatpush.bf16.msra.mxu0 0
        %1927 = vmatpush.bf16.msra.mxu0 0
        %1928 = vmatpush.bf16.msra.mxu0 0
        %1929 = vmatpush.bf16.msra.mxu0 0
        %1930 = vmatpush.bf16.msra.mxu0 0
        %1931 = vmatpush.bf16.msra.mxu0 %v1910
        %1932 = vmatpush.bf16.msra.mxu0 %v1909
        %1933 = vmatmul.bf16.gmra.mxu0 %v1914
        %v1934 = vpop.f32.mrf.mxu0
        %v1935 = vadd.f32 %v1882, %v1934
        %v1936 = vpop.f32.mrf.mxu0
        %v1937 = vadd.f32 %v1884, %v1936
        %1938 = vmatmul.bf16.gmra.mxu0 %v1917
        %v1939 = vpop.f32.mrf.mxu0
        %v1940 = vadd.f32 %v1887, %v1939
        %v1941 = vpop.f32.mrf.mxu0
        %v1942 = vadd.f32 %v1889, %v1941
        %1943 = vmatmul.bf16.gmra.mxu0 %v1920
        %v1944 = vpop.f32.mrf.mxu0
        %v1945 = vadd.f32 %v1892, %v1944
        %v1946 = vpop.f32.mrf.mxu0
        %v1947 = vadd.f32 %v1894, %v1946
        %1948 = vmatmul.bf16.gmra.mxu0 %v1923
        %v1949 = vpop.f32.mrf.mxu0
        %v1950 = vadd.f32 %v1897, %v1949
        %v1951 = vpop.f32.mrf.mxu0
        %v1952 = vadd.f32 %v1899, %v1951
        %1953 = vdwg.mxu0
        %1954 = vrot.lane.b32.xlu0 %v1411, 64
        %v1955 = vpop.permute.xlu0 %1954
        %1956 = vrot.lane.b32.xlu0 %v1412, 64
        %v1957 = vpop.permute.xlu0 %1956
        %1958 = vrot.lane.b32.xlu0 %v1413, 64
        %v1959 = vpop.permute.xlu0 %1958
        %1960 = vrot.lane.b32.xlu0 %v1414, 64
        %v1961 = vpop.permute.xlu0 %1960
        %1962 = vrot.lane.b32.xlu0 %v1415, 64
        %v1963 = vpop.permute.xlu0 %1962
        %1964 = vrot.lane.b32.xlu0 %v1416, 64
        %v1965 = vpop.permute.xlu0 %1964
        %1966 = vrot.lane.b32.xlu0 %v1417, 64
        %v1967 = vpop.permute.xlu0 %1966
        %1968 = vrot.lane.b32.xlu0 %v1418, 64
        %v1969 = vpop.permute.xlu0 %1968
        %v1971 = vsel %vm1426, %v1955, 0
        %v1974 = vsel %vm1426, %v1957, 0
        %v1977 = vsel %vm1426, %v1959, 0
        %v1980 = vsel %vm1426, %v1961, 0
        %v1983 = vsel %vm1426, %v1963, 0
        %v1986 = vsel %vm1426, %v1965, 0
        %v1989 = vsel %vm1426, %v1967, 0
        %v1992 = vsel %vm1426, %v1969, 0
        %1994 = vmatpush.bf16.xpose.msra.mxu0 0
        %1995 = vmatpush.bf16.xpose.msra.mxu0 0
        %1996 = vmatpush.bf16.xpose.msra.mxu0 0
        %1997 = vmatpush.bf16.xpose.msra.mxu0 0
        %1998 = vmatpush.bf16.xpose.msra.mxu0 %v1992
        %1999 = vmatpush.bf16.xpose.msra.mxu0 %v1989
        %2000 = vmatpush.bf16.xpose.msra.mxu0 %v1986
        %2001 = vmatpush.bf16.xpose.msra.mxu0 %v1983
        %2002 = vmatmul.bf16.gmra.mxu0 %v1971
        %v2003 = vpop.f32.mrf.mxu0
        %v2004 = vadd.f32 %v1424, %v2003
        %v2005 = vpop.f32.mrf.mxu0
        %v2006 = vadd.f32 %v1424, %v2005
        %2007 = vmatmul.bf16.gmra.mxu0 %v1974
        %v2008 = vpop.f32.mrf.mxu0
        %v2009 = vadd.f32 %v1424, %v2008
        %v2010 = vpop.f32.mrf.mxu0
        %v2011 = vadd.f32 %v1424, %v2010
        %2012 = vmatmul.bf16.gmra.mxu0 %v1977
        %v2013 = vpop.f32.mrf.mxu0
        %v2014 = vadd.f32 %v1424, %v2013
        %v2015 = vpop.f32.mrf.mxu0
        %v2016 = vadd.f32 %v1424, %v2015
        %2017 = vmatmul.bf16.gmra.mxu0 %v1980
        %v2018 = vpop.f32.mrf.mxu0
        %v2019 = vadd.f32 %v1424, %v2018
        %v2020 = vpop.f32.mrf.mxu0
        %v2021 = vadd.f32 %v1424, %v2020
        %2022 = vdwg.mxu0
        %v2023 = vsel %vm1480, %v2004, -inf
        %2024 = vmax.xlane.f32.xlu0 %v2023
        %v2025 = vpop.xlane.xlu0 %2024
        %v2026 = vsel %vm1480, %v2006, -inf
        %2027 = vmax.xlane.f32.xlu0 %v2026
        %v2028 = vpop.xlane.xlu0 %2027
        %v2029 = vsel %vm1480, %v2009, -inf
        %2030 = vmax.xlane.f32.xlu0 %v2029
        %v2031 = vpop.xlane.xlu0 %2030
        %v2032 = vsel %vm1480, %v2011, -inf
        %2033 = vmax.xlane.f32.xlu0 %v2032
        %v2034 = vpop.xlane.xlu0 %2033
        %v2035 = vsel %vm1480, %v2014, -inf
        %2036 = vmax.xlane.f32.xlu0 %v2035
        %v2037 = vpop.xlane.xlu0 %2036
        %v2038 = vsel %vm1480, %v2016, -inf
        %2039 = vmax.xlane.f32.xlu0 %v2038
        %v2040 = vpop.xlane.xlu0 %2039
        %v2041 = vsel %vm1480, %v2019, -inf
        %2042 = vmax.xlane.f32.xlu0 %v2041
        %v2043 = vpop.xlane.xlu0 %2042
        %v2044 = vsel %vm1480, %v2021, -inf
        %2045 = vmax.xlane.f32.xlu0 %v2044
        %v2046 = vpop.xlane.xlu0 %2045
        %v2047 = vsub.f32 %v2004, %v2025
        %v2048 = vsub.f32 %v2006, %v2028
        %v2049 = vsub.f32 %v2009, %v2031
        %v2050 = vsub.f32 %v2011, %v2034
        %v2051 = vsub.f32 %v2014, %v2037
        %v2052 = vsub.f32 %v2016, %v2040
        %v2053 = vsub.f32 %v2019, %v2043
        %v2054 = vsub.f32 %v2021, %v2046
        %v2055 = vmul.f32 %v2047, 1.442695
        %v2056 = vpow.pop %v2055
        %v2057 = vmul.f32 %v2048, 1.442695
        %v2058 = vpow.pop %v2057
        %v2059 = vmul.f32 %v2049, 1.442695
        %v2060 = vpow.pop %v2059
        %v2061 = vmul.f32 %v2050, 1.442695
        %v2062 = vpow.pop %v2061
        %v2063 = vmul.f32 %v2051, 1.442695
        %v2064 = vpow.pop %v2063
        %v2065 = vmul.f32 %v2052, 1.442695
        %v2066 = vpow.pop %v2065
        %v2067 = vmul.f32 %v2053, 1.442695
        %v2068 = vpow.pop %v2067
        %v2069 = vmul.f32 %v2054, 1.442695
        %v2070 = vpow.pop %v2069
        %v2071 = vsel %vm1480, %v2056, 0.0
        %2072 = vadd.xlane.f32.xlu0 %v2071
        %v2073 = vpop.xlane.xlu0 %2072
        %v2074 = vsel %vm1480, %v2058, 0.0
        %2075 = vadd.xlane.f32.xlu0 %v2074
        %v2076 = vpop.xlane.xlu0 %2075
        %v2077 = vsel %vm1480, %v2060, 0.0
        %2078 = vadd.xlane.f32.xlu0 %v2077
        %v2079 = vpop.xlane.xlu0 %2078
        %v2080 = vsel %vm1480, %v2062, 0.0
        %2081 = vadd.xlane.f32.xlu0 %v2080
        %v2082 = vpop.xlane.xlu0 %2081
        %v2083 = vsel %vm1480, %v2064, 0.0
        %2084 = vadd.xlane.f32.xlu0 %v2083
        %v2085 = vpop.xlane.xlu0 %2084
        %v2086 = vsel %vm1480, %v2066, 0.0
        %2087 = vadd.xlane.f32.xlu0 %v2086
        %v2088 = vpop.xlane.xlu0 %2087
        %v2089 = vsel %vm1480, %v2068, 0.0
        %2090 = vadd.xlane.f32.xlu0 %v2089
        %v2091 = vpop.xlane.xlu0 %2090
        %v2092 = vsel %vm1480, %v2070, 0.0
        %2093 = vadd.xlane.f32.xlu0 %v2092
        %v2094 = vpop.xlane.xlu0 %2093
        %v2095 = vrcp.pop %v2073
        %v2096 = vrcp.pop %v2076
        %v2097 = vrcp.pop %v2079
        %v2098 = vrcp.pop %v2082
        %v2099 = vrcp.pop %v2085
        %v2100 = vrcp.pop %v2088
        %v2101 = vrcp.pop %v2091
        %v2102 = vrcp.pop %v2094
        %v2103 = vmul.f32 %v2056, %v2095
        %v2104 = vmul.f32 %v2058, %v2096
        %v2105 = vmul.f32 %v2060, %v2097
        %v2106 = vmul.f32 %v2062, %v2098
        %v2107 = vmul.f32 %v2064, %v2099
        %v2108 = vmul.f32 %v2066, %v2100
        %v2109 = vmul.f32 %v2068, %v2101
        %v2110 = vmul.f32 %v2070, %v2102
        %v2111 = vpack.c.bf16 %v2104, %v2103
        %v2112 = vpack.c.bf16 %v2106, %v2105
        %v2113 = vpack.c.bf16 %v2108, %v2107
        %v2114 = vpack.c.bf16 %v2110, %v2109
        %2115 = vrot.lane.b32.xlu0 %v1419, 64
        %v2116 = vpop.permute.xlu0 %2115
        %2117 = vrot.lane.b32.xlu0 %v1420, 64
        %v2118 = vpop.permute.xlu0 %2117
        %2119 = vrot.lane.b32.xlu0 %v1421, 64
        %v2120 = vpop.permute.xlu0 %2119
        %2121 = vrot.lane.b32.xlu0 %v1422, 64
        %v2122 = vpop.permute.xlu0 %2121
        %v2128 = vsel %vm1480, %v2111, 0
        %v2131 = vsel %vm1480, %v2112, 0
        %v2134 = vsel %vm1480, %v2113, 0
        %v2137 = vsel %vm1480, %v2114, 0
        %2139 = vmatpush.bf16.msra.mxu0 0
        %2140 = vmatpush.bf16.msra.mxu0 0
        %2141 = vmatpush.bf16.msra.mxu0 0
        %2142 = vmatpush.bf16.msra.mxu0 0
        %2143 = vmatpush.bf16.msra.mxu0 %v2122
        %2144 = vmatpush.bf16.msra.mxu0 %v2120
        %2145 = vmatpush.bf16.msra.mxu0 %v2118
        %2146 = vmatpush.bf16.msra.mxu0 %v2116
        %2147 = vmatmul.bf16.gmra.mxu0 %v2128
        %v2148 = vpop.f32.mrf.mxu0
        %v2149 = vadd.f32 0.0, %v2148
        %v2150 = vpop.f32.mrf.mxu0
        %v2151 = vadd.f32 0.0, %v2150
        %2152 = vmatmul.bf16.gmra.mxu0 %v2131
        %v2153 = vpop.f32.mrf.mxu0
        %v2154 = vadd.f32 0.0, %v2153
        %v2155 = vpop.f32.mrf.mxu0
        %v2156 = vadd.f32 0.0, %v2155
        %2157 = vmatmul.bf16.gmra.mxu0 %v2134
        %v2158 = vpop.f32.mrf.mxu0
        %v2159 = vadd.f32 0.0, %v2158
        %v2160 = vpop.f32.mrf.mxu0
        %v2161 = vadd.f32 0.0, %v2160
        %2162 = vmatmul.bf16.gmra.mxu0 %v2137
        %v2163 = vpop.f32.mrf.mxu0
        %v2164 = vadd.f32 0.0, %v2163
        %v2165 = vpop.f32.mrf.mxu0
        %v2166 = vadd.f32 0.0, %v2165
        %2167 = vdwg.mxu0
        %v2168 = vpack.c.bf16 %v2151, %v2149
        %v2169 = vpack.c.bf16 %v2156, %v2154
        %v2170 = vpack.c.bf16 %v2161, %v2159
        %v2171 = vpack.c.bf16 %v2166, %v2164
        %v2176 = vunpack.c.l.b16 %v1403
        %v2177 = vunpack.c.l.b16 %v1404
        %v2178 = vunpack.c.l.b16 %v1405
        %v2179 = vunpack.c.l.b16 %v1406
        %v2180 = vpack.c.b16 %v2177, %v2176
        %v2181 = vpack.c.b16 %v2179, %v2178
        %v2185 = vsel %vm1426, %v2168, 0
        %v2188 = vsel %vm1426, %v2169, 0
        %v2191 = vsel %vm1426, %v2170, 0
        %v2194 = vsel %vm1426, %v2171, 0
        %2196 = vmatpush.bf16.msra.mxu0 0
        %2197 = vmatpush.bf16.msra.mxu0 0
        %2198 = vmatpush.bf16.msra.mxu0 0
        %2199 = vmatpush.bf16.msra.mxu0 0
        %2200 = vmatpush.bf16.msra.mxu0 0
        %2201 = vmatpush.bf16.msra.mxu0 0
        %2202 = vmatpush.bf16.msra.mxu0 %v2181
        %2203 = vmatpush.bf16.msra.mxu0 %v2180
        %2204 = vmatmul.bf16.gmra.mxu0 %v2185
        %v2205 = vpop.f32.mrf.mxu0
        %v2206 = vadd.f32 0.0, %v2205
        %v2207 = vpop.f32.mrf.mxu0
        %v2208 = vadd.f32 0.0, %v2207
        %2209 = vmatmul.bf16.gmra.mxu0 %v2188
        %v2210 = vpop.f32.mrf.mxu0
        %v2211 = vadd.f32 0.0, %v2210
        %v2212 = vpop.f32.mrf.mxu0
        %v2213 = vadd.f32 0.0, %v2212
        %2214 = vmatmul.bf16.gmra.mxu0 %v2191
        %v2215 = vpop.f32.mrf.mxu0
        %v2216 = vadd.f32 0.0, %v2215
        %v2217 = vpop.f32.mrf.mxu0
        %v2218 = vadd.f32 0.0, %v2217
        %2219 = vmatmul.bf16.gmra.mxu0 %v2194
        %v2220 = vpop.f32.mrf.mxu0
        %v2221 = vadd.f32 0.0, %v2220
        %v2222 = vpop.f32.mrf.mxu0
        %v2223 = vadd.f32 0.0, %v2222
        %2224 = vdwg.mxu0
        %v2225 = vadd.f32 %v1935, %v2206
        %v2226 = vadd.f32 %v1937, %v2208
        %v2227 = vadd.f32 %v1940, %v2211
        %v2228 = vadd.f32 %v1942, %v2213
        %v2229 = vadd.f32 %v1945, %v2216
        %v2230 = vadd.f32 %v1947, %v2218
        %v2231 = vadd.f32 %v1950, %v2221
        %v2232 = vadd.f32 %v1952, %v2223
        %2233 = vrot.lane.b32.xlu0 %v1411, 32
        %v2234 = vpop.permute.xlu0 %2233
        %2235 = vrot.lane.b32.xlu0 %v1412, 32
        %v2236 = vpop.permute.xlu0 %2235
        %2237 = vrot.lane.b32.xlu0 %v1413, 32
        %v2238 = vpop.permute.xlu0 %2237
        %2239 = vrot.lane.b32.xlu0 %v1414, 32
        %v2240 = vpop.permute.xlu0 %2239
        %2241 = vrot.lane.b32.xlu0 %v1415, 32
        %v2242 = vpop.permute.xlu0 %2241
        %2243 = vrot.lane.b32.xlu0 %v1416, 32
        %v2244 = vpop.permute.xlu0 %2243
        %2245 = vrot.lane.b32.xlu0 %v1417, 32
        %v2246 = vpop.permute.xlu0 %2245
        %2247 = vrot.lane.b32.xlu0 %v1418, 32
        %v2248 = vpop.permute.xlu0 %2247
        %v2250 = vsel %vm1426, %v2234, 0
        %v2253 = vsel %vm1426, %v2236, 0
        %v2256 = vsel %vm1426, %v2238, 0
        %v2259 = vsel %vm1426, %v2240, 0
        %v2262 = vsel %vm1426, %v2242, 0
        %v2265 = vsel %vm1426, %v2244, 0
        %v2268 = vsel %vm1426, %v2246, 0
        %v2271 = vsel %vm1426, %v2248, 0
        %2273 = vmatpush.bf16.xpose.msra.mxu0 0
        %2274 = vmatpush.bf16.xpose.msra.mxu0 0
        %2275 = vmatpush.bf16.xpose.msra.mxu0 0
        %2276 = vmatpush.bf16.xpose.msra.mxu0 0
        %2277 = vmatpush.bf16.xpose.msra.mxu0 %v2271
        %2278 = vmatpush.bf16.xpose.msra.mxu0 %v2268
        %2279 = vmatpush.bf16.xpose.msra.mxu0 %v2265
        %2280 = vmatpush.bf16.xpose.msra.mxu0 %v2262
        %2281 = vmatmul.bf16.gmra.mxu0 %v2250
        %v2282 = vpop.f32.mrf.mxu0
        %v2283 = vadd.f32 %v1424, %v2282
        %v2284 = vpop.f32.mrf.mxu0
        %v2285 = vadd.f32 %v1424, %v2284
        %2286 = vmatmul.bf16.gmra.mxu0 %v2253
        %v2287 = vpop.f32.mrf.mxu0
        %v2288 = vadd.f32 %v1424, %v2287
        %v2289 = vpop.f32.mrf.mxu0
        %v2290 = vadd.f32 %v1424, %v2289
        %2291 = vmatmul.bf16.gmra.mxu0 %v2256
        %v2292 = vpop.f32.mrf.mxu0
        %v2293 = vadd.f32 %v1424, %v2292
        %v2294 = vpop.f32.mrf.mxu0
        %v2295 = vadd.f32 %v1424, %v2294
        %2296 = vmatmul.bf16.gmra.mxu0 %v2259
        %v2297 = vpop.f32.mrf.mxu0
        %v2298 = vadd.f32 %v1424, %v2297
        %v2299 = vpop.f32.mrf.mxu0
        %v2300 = vadd.f32 %v1424, %v2299
        %2301 = vdwg.mxu0
        %v2302 = vsel %vm1480, %v2283, -inf
        %2303 = vmax.xlane.f32.xlu0 %v2302
        %v2304 = vpop.xlane.xlu0 %2303
        %v2305 = vsel %vm1480, %v2285, -inf
        %2306 = vmax.xlane.f32.xlu0 %v2305
        %v2307 = vpop.xlane.xlu0 %2306
        %v2308 = vsel %vm1480, %v2288, -inf
        %2309 = vmax.xlane.f32.xlu0 %v2308
        %v2310 = vpop.xlane.xlu0 %2309
        %v2311 = vsel %vm1480, %v2290, -inf
        %2312 = vmax.xlane.f32.xlu0 %v2311
        %v2313 = vpop.xlane.xlu0 %2312
        %v2314 = vsel %vm1480, %v2293, -inf
        %2315 = vmax.xlane.f32.xlu0 %v2314
        %v2316 = vpop.xlane.xlu0 %2315
        %v2317 = vsel %vm1480, %v2295, -inf
        %2318 = vmax.xlane.f32.xlu0 %v2317
        %v2319 = vpop.xlane.xlu0 %2318
        %v2320 = vsel %vm1480, %v2298, -inf
        %2321 = vmax.xlane.f32.xlu0 %v2320
        %v2322 = vpop.xlane.xlu0 %2321
        %v2323 = vsel %vm1480, %v2300, -inf
        %2324 = vmax.xlane.f32.xlu0 %v2323
        %v2325 = vpop.xlane.xlu0 %2324
        %v2326 = vsub.f32 %v2283, %v2304
        %v2327 = vsub.f32 %v2285, %v2307
        %v2328 = vsub.f32 %v2288, %v2310
        %v2329 = vsub.f32 %v2290, %v2313
        %v2330 = vsub.f32 %v2293, %v2316
        %v2331 = vsub.f32 %v2295, %v2319
        %v2332 = vsub.f32 %v2298, %v2322
        %v2333 = vsub.f32 %v2300, %v2325
        %v2334 = vmul.f32 %v2326, 1.442695
        %v2335 = vpow.pop %v2334
        %v2336 = vmul.f32 %v2327, 1.442695
        %v2337 = vpow.pop %v2336
        %v2338 = vmul.f32 %v2328, 1.442695
        %v2339 = vpow.pop %v2338
        %v2340 = vmul.f32 %v2329, 1.442695
        %v2341 = vpow.pop %v2340
        %v2342 = vmul.f32 %v2330, 1.442695
        %v2343 = vpow.pop %v2342
        %v2344 = vmul.f32 %v2331, 1.442695
        %v2345 = vpow.pop %v2344
        %v2346 = vmul.f32 %v2332, 1.442695
        %v2347 = vpow.pop %v2346
        %v2348 = vmul.f32 %v2333, 1.442695
        %v2349 = vpow.pop %v2348
        %v2350 = vsel %vm1480, %v2335, 0.0
        %2351 = vadd.xlane.f32.xlu0 %v2350
        %v2352 = vpop.xlane.xlu0 %2351
        %v2353 = vsel %vm1480, %v2337, 0.0
        %2354 = vadd.xlane.f32.xlu0 %v2353
        %v2355 = vpop.xlane.xlu0 %2354
        %v2356 = vsel %vm1480, %v2339, 0.0
        %2357 = vadd.xlane.f32.xlu0 %v2356
        %v2358 = vpop.xlane.xlu0 %2357
        %v2359 = vsel %vm1480, %v2341, 0.0
        %2360 = vadd.xlane.f32.xlu0 %v2359
        %v2361 = vpop.xlane.xlu0 %2360
        %v2362 = vsel %vm1480, %v2343, 0.0
        %2363 = vadd.xlane.f32.xlu0 %v2362
        %v2364 = vpop.xlane.xlu0 %2363
        %v2365 = vsel %vm1480, %v2345, 0.0
        %2366 = vadd.xlane.f32.xlu0 %v2365
        %v2367 = vpop.xlane.xlu0 %2366
        %v2368 = vsel %vm1480, %v2347, 0.0
        %2369 = vadd.xlane.f32.xlu0 %v2368
        %v2370 = vpop.xlane.xlu0 %2369
        %v2371 = vsel %vm1480, %v2349, 0.0
        %2372 = vadd.xlane.f32.xlu0 %v2371
        %v2373 = vpop.xlane.xlu0 %2372
        %v2374 = vrcp.pop %v2352
        %v2375 = vrcp.pop %v2355
        %v2376 = vrcp.pop %v2358
        %v2377 = vrcp.pop %v2361
        %v2378 = vrcp.pop %v2364
        %v2379 = vrcp.pop %v2367
        %v2380 = vrcp.pop %v2370
        %v2381 = vrcp.pop %v2373
        %v2382 = vmul.f32 %v2335, %v2374
        %v2383 = vmul.f32 %v2337, %v2375
        %v2384 = vmul.f32 %v2339, %v2376
        %v2385 = vmul.f32 %v2341, %v2377
        %v2386 = vmul.f32 %v2343, %v2378
        %v2387 = vmul.f32 %v2345, %v2379
        %v2388 = vmul.f32 %v2347, %v2380
        %v2389 = vmul.f32 %v2349, %v2381
        %v2390 = vpack.c.bf16 %v2383, %v2382
        %v2391 = vpack.c.bf16 %v2385, %v2384
        %v2392 = vpack.c.bf16 %v2387, %v2386
        %v2393 = vpack.c.bf16 %v2389, %v2388
        %2394 = vrot.lane.b32.xlu0 %v1419, 32
        %v2395 = vpop.permute.xlu0 %2394
        %2396 = vrot.lane.b32.xlu0 %v1420, 32
        %v2397 = vpop.permute.xlu0 %2396
        %2398 = vrot.lane.b32.xlu0 %v1421, 32
        %v2399 = vpop.permute.xlu0 %2398
        %2400 = vrot.lane.b32.xlu0 %v1422, 32
        %v2401 = vpop.permute.xlu0 %2400
        %v2407 = vsel %vm1480, %v2390, 0
        %v2410 = vsel %vm1480, %v2391, 0
        %v2413 = vsel %vm1480, %v2392, 0
        %v2416 = vsel %vm1480, %v2393, 0
        %2418 = vmatpush.bf16.msra.mxu0 0
        %2419 = vmatpush.bf16.msra.mxu0 0
        %2420 = vmatpush.bf16.msra.mxu0 0
        %2421 = vmatpush.bf16.msra.mxu0 0
        %2422 = vmatpush.bf16.msra.mxu0 %v2401
        %2423 = vmatpush.bf16.msra.mxu0 %v2399
        %2424 = vmatpush.bf16.msra.mxu0 %v2397
        %2425 = vmatpush.bf16.msra.mxu0 %v2395
        %2426 = vmatmul.bf16.gmra.mxu0 %v2407
        %v2427 = vpop.f32.mrf.mxu0
        %v2428 = vadd.f32 0.0, %v2427
        %v2429 = vpop.f32.mrf.mxu0
        %v2430 = vadd.f32 0.0, %v2429
        %2431 = vmatmul.bf16.gmra.mxu0 %v2410
        %v2432 = vpop.f32.mrf.mxu0
        %v2433 = vadd.f32 0.0, %v2432
        %v2434 = vpop.f32.mrf.mxu0
        %v2435 = vadd.f32 0.0, %v2434
        %2436 = vmatmul.bf16.gmra.mxu0 %v2413
        %v2437 = vpop.f32.mrf.mxu0
        %v2438 = vadd.f32 0.0, %v2437
        %v2439 = vpop.f32.mrf.mxu0
        %v2440 = vadd.f32 0.0, %v2439
        %2441 = vmatmul.bf16.gmra.mxu0 %v2416
        %v2442 = vpop.f32.mrf.mxu0
        %v2443 = vadd.f32 0.0, %v2442
        %v2444 = vpop.f32.mrf.mxu0
        %v2445 = vadd.f32 0.0, %v2444
        %2446 = vdwg.mxu0
        %v2447 = vpack.c.bf16 %v2430, %v2428
        %v2448 = vpack.c.bf16 %v2435, %v2433
        %v2449 = vpack.c.bf16 %v2440, %v2438
        %v2450 = vpack.c.bf16 %v2445, %v2443
        %v2455 = vunpack.c.l.b16 %v1407
        %v2456 = vunpack.c.l.b16 %v1408
        %v2457 = vunpack.c.l.b16 %v1409
        %v2458 = vunpack.c.l.b16 %v1410
        %v2459 = vpack.c.b16 %v2456, %v2455
        %v2460 = vpack.c.b16 %v2458, %v2457
        %v2464 = vsel %vm1426, %v2447, 0
        %v2467 = vsel %vm1426, %v2448, 0
        %v2470 = vsel %vm1426, %v2449, 0
        %v2473 = vsel %vm1426, %v2450, 0
        %2475 = vmatpush.bf16.msra.mxu0 0
        %2476 = vmatpush.bf16.msra.mxu0 0
        %2477 = vmatpush.bf16.msra.mxu0 0
        %2478 = vmatpush.bf16.msra.mxu0 0
        %2479 = vmatpush.bf16.msra.mxu0 0
        %2480 = vmatpush.bf16.msra.mxu0 0
        %2481 = vmatpush.bf16.msra.mxu0 %v2460
        %2482 = vmatpush.bf16.msra.mxu0 %v2459
        %2483 = vmatmul.bf16.gmra.mxu0 %v2464
        %v2484 = vpop.f32.mrf.mxu0
        %v2485 = vadd.f32 0.0, %v2484
        %v2486 = vpop.f32.mrf.mxu0
        %v2487 = vadd.f32 0.0, %v2486
        %2488 = vmatmul.bf16.gmra.mxu0 %v2467
        %v2489 = vpop.f32.mrf.mxu0
        %v2490 = vadd.f32 0.0, %v2489
        %v2491 = vpop.f32.mrf.mxu0
        %v2492 = vadd.f32 0.0, %v2491
        %2493 = vmatmul.bf16.gmra.mxu0 %v2470
        %v2494 = vpop.f32.mrf.mxu0
        %v2495 = vadd.f32 0.0, %v2494
        %v2496 = vpop.f32.mrf.mxu0
        %v2497 = vadd.f32 0.0, %v2496
        %2498 = vmatmul.bf16.gmra.mxu0 %v2473
        %v2499 = vpop.f32.mrf.mxu0
        %v2500 = vadd.f32 0.0, %v2499
        %v2501 = vpop.f32.mrf.mxu0
        %v2502 = vadd.f32 0.0, %v2501
        %2503 = vdwg.mxu0
        %v2504 = vadd.f32 %v2225, %v2485
        %v2505 = vadd.f32 %v2226, %v2487
        %v2506 = vadd.f32 %v2227, %v2490
        %v2507 = vadd.f32 %v2228, %v2492
        %v2508 = vadd.f32 %v2229, %v2495
        %v2509 = vadd.f32 %v2230, %v2497
        %v2510 = vadd.f32 %v2231, %v2500
        %v2511 = vadd.f32 %v2232, %v2502
        %v2512 = vpack.c.bf16 %v1271, %v1270
        %v2513 = vpack.c.bf16 %v1273, %v1272
        %v2514 = vpack.c.bf16 %v1275, %v1274
        %v2515 = vpack.c.bf16 %v1277, %v1276
        %v2516 = vpack.c.bf16 %v1245, %v1243
        %v2517 = vpack.c.bf16 %v1250, %v1248
        %v2518 = vpack.c.bf16 %v1255, %v1253
        %v2519 = vpack.c.bf16 %v1260, %v1258
        %v2520 = vpack.c.bf16 %v1378, %v1376
        %v2521 = vpack.c.bf16 %v1383, %v1381
        %v2522 = vpack.c.bf16 %v1388, %v1386
        %v2523 = vpack.c.bf16 %v1393, %v1391
        %v2525 = vperm.slane %v1029, 0
        %v2528 = vsel %vm1426, %v2512, 0
        %v2531 = vsel %vm1426, %v2513, 0
        %v2534 = vsel %vm1426, %v2514, 0
        %v2537 = vsel %vm1426, %v2515, 0
        %v2540 = vsel %vm1426, %v2516, 0
        %v2543 = vsel %vm1426, %v2517, 0
        %v2546 = vsel %vm1426, %v2518, 0
        %v2549 = vsel %vm1426, %v2519, 0
        %2551 = vmatpush.bf16.xpose.msra.mxu0 0
        %2552 = vmatpush.bf16.xpose.msra.mxu0 0
        %2553 = vmatpush.bf16.xpose.msra.mxu0 0
        %2554 = vmatpush.bf16.xpose.msra.mxu0 0
        %2555 = vmatpush.bf16.xpose.msra.mxu0 %v2549
        %2556 = vmatpush.bf16.xpose.msra.mxu0 %v2546
        %2557 = vmatpush.bf16.xpose.msra.mxu0 %v2543
        %2558 = vmatpush.bf16.xpose.msra.mxu0 %v2540
        %2559 = vmatmul.bf16.gmra.mxu0 %v2528
        %v2560 = vpop.f32.mrf.mxu0
        %v2561 = vadd.f32 %v2525, %v2560
        %v2562 = vpop.f32.mrf.mxu0
        %v2563 = vadd.f32 %v2525, %v2562
        %2564 = vmatmul.bf16.gmra.mxu0 %v2531
        %v2565 = vpop.f32.mrf.mxu0
        %v2566 = vadd.f32 %v2525, %v2565
        %v2567 = vpop.f32.mrf.mxu0
        %v2568 = vadd.f32 %v2525, %v2567
        %2569 = vmatmul.bf16.gmra.mxu0 %v2534
        %v2570 = vpop.f32.mrf.mxu0
        %v2571 = vadd.f32 %v2525, %v2570
        %v2572 = vpop.f32.mrf.mxu0
        %v2573 = vadd.f32 %v2525, %v2572
        %2574 = vmatmul.bf16.gmra.mxu0 %v2537
        %v2575 = vpop.f32.mrf.mxu0
        %v2576 = vadd.f32 %v2525, %v2575
        %v2577 = vpop.f32.mrf.mxu0
        %v2578 = vadd.f32 %v2525, %v2577
        %2579 = vdwg.mxu0
        %v2580 = vsel %vm1480, %v2561, -inf
        %2581 = vmax.xlane.f32.xlu0 %v2580
        %v2582 = vpop.xlane.xlu0 %2581
        %v2583 = vsel %vm1480, %v2563, -inf
        %2584 = vmax.xlane.f32.xlu0 %v2583
        %v2585 = vpop.xlane.xlu0 %2584
        %v2586 = vsel %vm1480, %v2566, -inf
        %2587 = vmax.xlane.f32.xlu0 %v2586
        %v2588 = vpop.xlane.xlu0 %2587
        %v2589 = vsel %vm1480, %v2568, -inf
        %2590 = vmax.xlane.f32.xlu0 %v2589
        %v2591 = vpop.xlane.xlu0 %2590
        %v2592 = vsel %vm1480, %v2571, -inf
        %2593 = vmax.xlane.f32.xlu0 %v2592
        %v2594 = vpop.xlane.xlu0 %2593
        %v2595 = vsel %vm1480, %v2573, -inf
        %2596 = vmax.xlane.f32.xlu0 %v2595
        %v2597 = vpop.xlane.xlu0 %2596
        %v2598 = vsel %vm1480, %v2576, -inf
        %2599 = vmax.xlane.f32.xlu0 %v2598
        %v2600 = vpop.xlane.xlu0 %2599
        %v2601 = vsel %vm1480, %v2578, -inf
        %2602 = vmax.xlane.f32.xlu0 %v2601
        %v2603 = vpop.xlane.xlu0 %2602
        %v2604 = vsub.f32 %v2561, %v2582
        %v2605 = vsub.f32 %v2563, %v2585
        %v2606 = vsub.f32 %v2566, %v2588
        %v2607 = vsub.f32 %v2568, %v2591
        %v2608 = vsub.f32 %v2571, %v2594
        %v2609 = vsub.f32 %v2573, %v2597
        %v2610 = vsub.f32 %v2576, %v2600
        %v2611 = vsub.f32 %v2578, %v2603
        %v2612 = vmul.f32 %v2604, 1.442695
        %v2613 = vpow.pop %v2612
        %v2614 = vmul.f32 %v2605, 1.442695
        %v2615 = vpow.pop %v2614
        %v2616 = vmul.f32 %v2606, 1.442695
        %v2617 = vpow.pop %v2616
        %v2618 = vmul.f32 %v2607, 1.442695
        %v2619 = vpow.pop %v2618
        %v2620 = vmul.f32 %v2608, 1.442695
        %v2621 = vpow.pop %v2620
        %v2622 = vmul.f32 %v2609, 1.442695
        %v2623 = vpow.pop %v2622
        %v2624 = vmul.f32 %v2610, 1.442695
        %v2625 = vpow.pop %v2624
        %v2626 = vmul.f32 %v2611, 1.442695
        %v2627 = vpow.pop %v2626
        %v2628 = vsel %vm1480, %v2613, 0.0
        %2629 = vadd.xlane.f32.xlu0 %v2628
        %v2630 = vpop.xlane.xlu0 %2629
        %v2631 = vsel %vm1480, %v2615, 0.0
        %2632 = vadd.xlane.f32.xlu0 %v2631
        %v2633 = vpop.xlane.xlu0 %2632
        %v2634 = vsel %vm1480, %v2617, 0.0
        %2635 = vadd.xlane.f32.xlu0 %v2634
        %v2636 = vpop.xlane.xlu0 %2635
        %v2637 = vsel %vm1480, %v2619, 0.0
        %2638 = vadd.xlane.f32.xlu0 %v2637
        %v2639 = vpop.xlane.xlu0 %2638
        %v2640 = vsel %vm1480, %v2621, 0.0
        %2641 = vadd.xlane.f32.xlu0 %v2640
        %v2642 = vpop.xlane.xlu0 %2641
        %v2643 = vsel %vm1480, %v2623, 0.0
        %2644 = vadd.xlane.f32.xlu0 %v2643
        %v2645 = vpop.xlane.xlu0 %2644
        %v2646 = vsel %vm1480, %v2625, 0.0
        %2647 = vadd.xlane.f32.xlu0 %v2646
        %v2648 = vpop.xlane.xlu0 %2647
        %v2649 = vsel %vm1480, %v2627, 0.0
        %2650 = vadd.xlane.f32.xlu0 %v2649
        %v2651 = vpop.xlane.xlu0 %2650
        %v2652 = vrcp.pop %v2630
        %v2653 = vrcp.pop %v2633
        %v2654 = vrcp.pop %v2636
        %v2655 = vrcp.pop %v2639
        %v2656 = vrcp.pop %v2642
        %v2657 = vrcp.pop %v2645
        %v2658 = vrcp.pop %v2648
        %v2659 = vrcp.pop %v2651
        %v2660 = vmul.f32 %v2613, %v2652
        %v2661 = vmul.f32 %v2615, %v2653
        %v2662 = vmul.f32 %v2617, %v2654
        %v2663 = vmul.f32 %v2619, %v2655
        %v2664 = vmul.f32 %v2621, %v2656
        %v2665 = vmul.f32 %v2623, %v2657
        %v2666 = vmul.f32 %v2625, %v2658
        %v2667 = vmul.f32 %v2627, %v2659
        %v2668 = vpack.c.bf16 %v2661, %v2660
        %v2669 = vpack.c.bf16 %v2663, %v2662
        %v2670 = vpack.c.bf16 %v2665, %v2664
        %v2671 = vpack.c.bf16 %v2667, %v2666
        %v2673 = vsel %vm1480, %v2668, 0
        %v2676 = vsel %vm1480, %v2669, 0
        %v2679 = vsel %vm1480, %v2670, 0
        %v2682 = vsel %vm1480, %v2671, 0
        %2684 = vmatpush.bf16.msra.mxu0 0
        %2685 = vmatpush.bf16.msra.mxu0 0
        %2686 = vmatpush.bf16.msra.mxu0 0
        %2687 = vmatpush.bf16.msra.mxu0 0
        %2688 = vmatpush.bf16.msra.mxu0 %v2523
        %2689 = vmatpush.bf16.msra.mxu0 %v2522
        %2690 = vmatpush.bf16.msra.mxu0 %v2521
        %2691 = vmatpush.bf16.msra.mxu0 %v2520
        %2692 = vmatmul.bf16.gmra.mxu0 %v2673
        %v2693 = vpop.f32.mrf.mxu0
        %v2694 = vadd.f32 0.0, %v2693
        %v2695 = vpop.f32.mrf.mxu0
        %v2696 = vadd.f32 0.0, %v2695
        %2697 = vmatmul.bf16.gmra.mxu0 %v2676
        %v2698 = vpop.f32.mrf.mxu0
        %v2699 = vadd.f32 0.0, %v2698
        %v2700 = vpop.f32.mrf.mxu0
        %v2701 = vadd.f32 0.0, %v2700
        %2702 = vmatmul.bf16.gmra.mxu0 %v2679
        %v2703 = vpop.f32.mrf.mxu0
        %v2704 = vadd.f32 0.0, %v2703
        %v2705 = vpop.f32.mrf.mxu0
        %v2706 = vadd.f32 0.0, %v2705
        %2707 = vmatmul.bf16.gmra.mxu0 %v2682
        %v2708 = vpop.f32.mrf.mxu0
        %v2709 = vadd.f32 0.0, %v2708
        %v2710 = vpop.f32.mrf.mxu0
        %v2711 = vadd.f32 0.0, %v2710
        %2712 = vdwg.mxu0
        %v2713 = vpack.c.bf16 %v2696, %v2694
        %v2714 = vpack.c.bf16 %v2701, %v2699
        %v2715 = vpack.c.bf16 %v2706, %v2704
        %v2716 = vpack.c.bf16 %v2711, %v2709
        %2721 = vrot.lane.b32.xlu0 %v2512, 96
        %v2722 = vpop.permute.xlu0 %2721
        %2723 = vrot.lane.b32.xlu0 %v2513, 96
        %v2724 = vpop.permute.xlu0 %2723
        %2725 = vrot.lane.b32.xlu0 %v2514, 96
        %v2726 = vpop.permute.xlu0 %2725
        %2727 = vrot.lane.b32.xlu0 %v2515, 96
        %v2728 = vpop.permute.xlu0 %2727
        %2733 = vrot.lane.b32.xlu0 %v2516, 96
        %v2734 = vpop.permute.xlu0 %2733
        %2735 = vrot.lane.b32.xlu0 %v2517, 96
        %v2736 = vpop.permute.xlu0 %2735
        %2737 = vrot.lane.b32.xlu0 %v2518, 96
        %v2738 = vpop.permute.xlu0 %2737
        %2739 = vrot.lane.b32.xlu0 %v2519, 96
        %v2740 = vpop.permute.xlu0 %2739
        %v2742 = vsel %vm1426, %v2722, 0
        %v2745 = vsel %vm1426, %v2724, 0
        %v2748 = vsel %vm1426, %v2726, 0
        %v2751 = vsel %vm1426, %v2728, 0
        %v2754 = vsel %vm1426, %v2734, 0
        %v2757 = vsel %vm1426, %v2736, 0
        %v2760 = vsel %vm1426, %v2738, 0
        %v2763 = vsel %vm1426, %v2740, 0
        %2765 = vmatpush.bf16.xpose.msra.mxu0 0
        %2766 = vmatpush.bf16.xpose.msra.mxu0 0
        %2767 = vmatpush.bf16.xpose.msra.mxu0 0
        %2768 = vmatpush.bf16.xpose.msra.mxu0 0
        %2769 = vmatpush.bf16.xpose.msra.mxu0 %v2763
        %2770 = vmatpush.bf16.xpose.msra.mxu0 %v2760
        %2771 = vmatpush.bf16.xpose.msra.mxu0 %v2757
        %2772 = vmatpush.bf16.xpose.msra.mxu0 %v2754
        %2773 = vmatmul.bf16.gmra.mxu0 %v2742
        %v2774 = vpop.f32.mrf.mxu0
        %v2775 = vadd.f32 %v2525, %v2774
        %v2776 = vpop.f32.mrf.mxu0
        %v2777 = vadd.f32 %v2525, %v2776
        %2778 = vmatmul.bf16.gmra.mxu0 %v2745
        %v2779 = vpop.f32.mrf.mxu0
        %v2780 = vadd.f32 %v2525, %v2779
        %v2781 = vpop.f32.mrf.mxu0
        %v2782 = vadd.f32 %v2525, %v2781
        %2783 = vmatmul.bf16.gmra.mxu0 %v2748
        %v2784 = vpop.f32.mrf.mxu0
        %v2785 = vadd.f32 %v2525, %v2784
        %v2786 = vpop.f32.mrf.mxu0
        %v2787 = vadd.f32 %v2525, %v2786
        %2788 = vmatmul.bf16.gmra.mxu0 %v2751
        %v2789 = vpop.f32.mrf.mxu0
        %v2790 = vadd.f32 %v2525, %v2789
        %v2791 = vpop.f32.mrf.mxu0
        %v2792 = vadd.f32 %v2525, %v2791
        %2793 = vdwg.mxu0
        %v2794 = vsel %vm1480, %v2775, -inf
        %2795 = vmax.xlane.f32.xlu0 %v2794
        %v2796 = vpop.xlane.xlu0 %2795
        %v2797 = vsel %vm1480, %v2777, -inf
        %2798 = vmax.xlane.f32.xlu0 %v2797
        %v2799 = vpop.xlane.xlu0 %2798
        %v2800 = vsel %vm1480, %v2780, -inf
        %2801 = vmax.xlane.f32.xlu0 %v2800
        %v2802 = vpop.xlane.xlu0 %2801
        %v2803 = vsel %vm1480, %v2782, -inf
        %2804 = vmax.xlane.f32.xlu0 %v2803
        %v2805 = vpop.xlane.xlu0 %2804
        %v2806 = vsel %vm1480, %v2785, -inf
        %2807 = vmax.xlane.f32.xlu0 %v2806
        %v2808 = vpop.xlane.xlu0 %2807
        %v2809 = vsel %vm1480, %v2787, -inf
        %2810 = vmax.xlane.f32.xlu0 %v2809
        %v2811 = vpop.xlane.xlu0 %2810
        %v2812 = vsel %vm1480, %v2790, -inf
        %2813 = vmax.xlane.f32.xlu0 %v2812
        %v2814 = vpop.xlane.xlu0 %2813
        %v2815 = vsel %vm1480, %v2792, -inf
        %2816 = vmax.xlane.f32.xlu0 %v2815
        %v2817 = vpop.xlane.xlu0 %2816
        %v2818 = vsub.f32 %v2775, %v2796
        %v2819 = vsub.f32 %v2777, %v2799
        %v2820 = vsub.f32 %v2780, %v2802
        %v2821 = vsub.f32 %v2782, %v2805
        %v2822 = vsub.f32 %v2785, %v2808
        %v2823 = vsub.f32 %v2787, %v2811
        %v2824 = vsub.f32 %v2790, %v2814
        %v2825 = vsub.f32 %v2792, %v2817
        %v2826 = vmul.f32 %v2818, 1.442695
        %v2827 = vpow.pop %v2826
        %v2828 = vmul.f32 %v2819, 1.442695
        %v2829 = vpow.pop %v2828
        %v2830 = vmul.f32 %v2820, 1.442695
        %v2831 = vpow.pop %v2830
        %v2832 = vmul.f32 %v2821, 1.442695
        %v2833 = vpow.pop %v2832
        %v2834 = vmul.f32 %v2822, 1.442695
        %v2835 = vpow.pop %v2834
        %v2836 = vmul.f32 %v2823, 1.442695
        %v2837 = vpow.pop %v2836
        %v2838 = vmul.f32 %v2824, 1.442695
        %v2839 = vpow.pop %v2838
        %v2840 = vmul.f32 %v2825, 1.442695
        %v2841 = vpow.pop %v2840
        %v2842 = vsel %vm1480, %v2827, 0.0
        %2843 = vadd.xlane.f32.xlu0 %v2842
        %v2844 = vpop.xlane.xlu0 %2843
        %v2845 = vsel %vm1480, %v2829, 0.0
        %2846 = vadd.xlane.f32.xlu0 %v2845
        %v2847 = vpop.xlane.xlu0 %2846
        %v2848 = vsel %vm1480, %v2831, 0.0
        %2849 = vadd.xlane.f32.xlu0 %v2848
        %v2850 = vpop.xlane.xlu0 %2849
        %v2851 = vsel %vm1480, %v2833, 0.0
        %2852 = vadd.xlane.f32.xlu0 %v2851
        %v2853 = vpop.xlane.xlu0 %2852
        %v2854 = vsel %vm1480, %v2835, 0.0
        %2855 = vadd.xlane.f32.xlu0 %v2854
        %v2856 = vpop.xlane.xlu0 %2855
        %v2857 = vsel %vm1480, %v2837, 0.0
        %2858 = vadd.xlane.f32.xlu0 %v2857
        %v2859 = vpop.xlane.xlu0 %2858
        %v2860 = vsel %vm1480, %v2839, 0.0
        %2861 = vadd.xlane.f32.xlu0 %v2860
        %v2862 = vpop.xlane.xlu0 %2861
        %v2863 = vsel %vm1480, %v2841, 0.0
        %2864 = vadd.xlane.f32.xlu0 %v2863
        %v2865 = vpop.xlane.xlu0 %2864
        %v2866 = vrcp.pop %v2844
        %v2867 = vrcp.pop %v2847
        %v2868 = vrcp.pop %v2850
        %v2869 = vrcp.pop %v2853
        %v2870 = vrcp.pop %v2856
        %v2871 = vrcp.pop %v2859
        %v2872 = vrcp.pop %v2862
        %v2873 = vrcp.pop %v2865
        %v2874 = vmul.f32 %v2827, %v2866
        %v2875 = vmul.f32 %v2829, %v2867
        %v2876 = vmul.f32 %v2831, %v2868
        %v2877 = vmul.f32 %v2833, %v2869
        %v2878 = vmul.f32 %v2835, %v2870
        %v2879 = vmul.f32 %v2837, %v2871
        %v2880 = vmul.f32 %v2839, %v2872
        %v2881 = vmul.f32 %v2841, %v2873
        %v2882 = vpack.c.bf16 %v2875, %v2874
        %v2883 = vpack.c.bf16 %v2877, %v2876
        %v2884 = vpack.c.bf16 %v2879, %v2878
        %v2885 = vpack.c.bf16 %v2881, %v2880
        %2890 = vrot.lane.b32.xlu0 %v2520, 96
        %v2891 = vpop.permute.xlu0 %2890
        %2892 = vrot.lane.b32.xlu0 %v2521, 96
        %v2893 = vpop.permute.xlu0 %2892
        %2894 = vrot.lane.b32.xlu0 %v2522, 96
        %v2895 = vpop.permute.xlu0 %2894
        %2896 = vrot.lane.b32.xlu0 %v2523, 96
        %v2897 = vpop.permute.xlu0 %2896
        %v2903 = vsel %vm1480, %v2882, 0
        %v2906 = vsel %vm1480, %v2883, 0
        %v2909 = vsel %vm1480, %v2884, 0
        %v2912 = vsel %vm1480, %v2885, 0
        %2914 = vmatpush.bf16.msra.mxu0 0
        %2915 = vmatpush.bf16.msra.mxu0 0
        %2916 = vmatpush.bf16.msra.mxu0 0
        %2917 = vmatpush.bf16.msra.mxu0 0
        %2918 = vmatpush.bf16.msra.mxu0 %v2897
        %2919 = vmatpush.bf16.msra.mxu0 %v2895
        %2920 = vmatpush.bf16.msra.mxu0 %v2893
        %2921 = vmatpush.bf16.msra.mxu0 %v2891
        %2922 = vmatmul.bf16.gmra.mxu0 %v2903
        %v2923 = vpop.f32.mrf.mxu0
        %v2924 = vadd.f32 0.0, %v2923
        %v2925 = vpop.f32.mrf.mxu0
        %v2926 = vadd.f32 0.0, %v2925
        %2927 = vmatmul.bf16.gmra.mxu0 %v2906
        %v2928 = vpop.f32.mrf.mxu0
        %v2929 = vadd.f32 0.0, %v2928
        %v2930 = vpop.f32.mrf.mxu0
        %v2931 = vadd.f32 0.0, %v2930
        %2932 = vmatmul.bf16.gmra.mxu0 %v2909
        %v2933 = vpop.f32.mrf.mxu0
        %v2934 = vadd.f32 0.0, %v2933
        %v2935 = vpop.f32.mrf.mxu0
        %v2936 = vadd.f32 0.0, %v2935
        %2937 = vmatmul.bf16.gmra.mxu0 %v2912
        %v2938 = vpop.f32.mrf.mxu0
        %v2939 = vadd.f32 0.0, %v2938
        %v2940 = vpop.f32.mrf.mxu0
        %v2941 = vadd.f32 0.0, %v2940
        %2942 = vdwg.mxu0
        %v2943 = vpack.c.bf16 %v2926, %v2924
        %v2944 = vpack.c.bf16 %v2931, %v2929
        %v2945 = vpack.c.bf16 %v2936, %v2934
        %v2946 = vpack.c.bf16 %v2941, %v2939
        %v2948 = vsel %vm1426, %v2943, 0
        %v2951 = vsel %vm1426, %v2944, 0
        %v2954 = vsel %vm1426, %v2945, 0
        %v2957 = vsel %vm1426, %v2946, 0
        %2959 = vmatpush.bf16.msra.mxu0 0
        %2960 = vmatpush.bf16.msra.mxu0 0
        %2961 = vmatpush.bf16.msra.mxu0 0
        %2962 = vmatpush.bf16.msra.mxu0 0
        %2963 = vmatpush.bf16.msra.mxu0 0
        %2964 = vmatpush.bf16.msra.mxu0 0
        %2965 = vmatpush.bf16.msra.mxu0 %v1857
        %2966 = vmatpush.bf16.msra.mxu0 %v1856
        %2967 = vmatmul.bf16.gmra.mxu0 %v2948
        %v2968 = vpop.f32.mrf.mxu0
        %v2969 = vadd.f32 0.0, %v2968
        %v2970 = vpop.f32.mrf.mxu0
        %v2971 = vadd.f32 0.0, %v2970
        %2972 = vmatmul.bf16.gmra.mxu0 %v2951
        %v2973 = vpop.f32.mrf.mxu0
        %v2974 = vadd.f32 0.0, %v2973
        %v2975 = vpop.f32.mrf.mxu0
        %v2976 = vadd.f32 0.0, %v2975
        %2977 = vmatmul.bf16.gmra.mxu0 %v2954
        %v2978 = vpop.f32.mrf.mxu0
        %v2979 = vadd.f32 0.0, %v2978
        %v2980 = vpop.f32.mrf.mxu0
        %v2981 = vadd.f32 0.0, %v2980
        %2982 = vmatmul.bf16.gmra.mxu0 %v2957
        %v2983 = vpop.f32.mrf.mxu0
        %v2984 = vadd.f32 0.0, %v2983
        %v2985 = vpop.f32.mrf.mxu0
        %v2986 = vadd.f32 0.0, %v2985
        %2987 = vdwg.mxu0
        %v2989 = vsel %vm1426, %v2713, 0
        %v2992 = vsel %vm1426, %v2714, 0
        %v2995 = vsel %vm1426, %v2715, 0
        %v2998 = vsel %vm1426, %v2716, 0
        %3000 = vmatpush.bf16.msra.mxu0 0
        %3001 = vmatpush.bf16.msra.mxu0 0
        %3002 = vmatpush.bf16.msra.mxu0 0
        %3003 = vmatpush.bf16.msra.mxu0 0
        %3004 = vmatpush.bf16.msra.mxu0 0
        %3005 = vmatpush.bf16.msra.mxu0 0
        %3006 = vmatpush.bf16.msra.mxu0 %v1910
        %3007 = vmatpush.bf16.msra.mxu0 %v1909
        %3008 = vmatmul.bf16.gmra.mxu0 %v2989
        %v3009 = vpop.f32.mrf.mxu0
        %v3010 = vadd.f32 %v2969, %v3009
        %v3011 = vpop.f32.mrf.mxu0
        %v3012 = vadd.f32 %v2971, %v3011
        %3013 = vmatmul.bf16.gmra.mxu0 %v2992
        %v3014 = vpop.f32.mrf.mxu0
        %v3015 = vadd.f32 %v2974, %v3014
        %v3016 = vpop.f32.mrf.mxu0
        %v3017 = vadd.f32 %v2976, %v3016
        %3018 = vmatmul.bf16.gmra.mxu0 %v2995
        %v3019 = vpop.f32.mrf.mxu0
        %v3020 = vadd.f32 %v2979, %v3019
        %v3021 = vpop.f32.mrf.mxu0
        %v3022 = vadd.f32 %v2981, %v3021
        %3023 = vmatmul.bf16.gmra.mxu0 %v2998
        %v3024 = vpop.f32.mrf.mxu0
        %v3025 = vadd.f32 %v2984, %v3024
        %v3026 = vpop.f32.mrf.mxu0
        %v3027 = vadd.f32 %v2986, %v3026
        %3028 = vdwg.mxu0
        %3029 = vrot.lane.b32.xlu0 %v2512, 64
        %v3030 = vpop.permute.xlu0 %3029
        %3031 = vrot.lane.b32.xlu0 %v2513, 64
        %v3032 = vpop.permute.xlu0 %3031
        %3033 = vrot.lane.b32.xlu0 %v2514, 64
        %v3034 = vpop.permute.xlu0 %3033
        %3035 = vrot.lane.b32.xlu0 %v2515, 64
        %v3036 = vpop.permute.xlu0 %3035
        %3037 = vrot.lane.b32.xlu0 %v2516, 64
        %v3038 = vpop.permute.xlu0 %3037
        %3039 = vrot.lane.b32.xlu0 %v2517, 64
        %v3040 = vpop.permute.xlu0 %3039
        %3041 = vrot.lane.b32.xlu0 %v2518, 64
        %v3042 = vpop.permute.xlu0 %3041
        %3043 = vrot.lane.b32.xlu0 %v2519, 64
        %v3044 = vpop.permute.xlu0 %3043
        %v3046 = vsel %vm1426, %v3030, 0
        %v3049 = vsel %vm1426, %v3032, 0
        %v3052 = vsel %vm1426, %v3034, 0
        %v3055 = vsel %vm1426, %v3036, 0
        %v3058 = vsel %vm1426, %v3038, 0
        %v3061 = vsel %vm1426, %v3040, 0
        %v3064 = vsel %vm1426, %v3042, 0
        %v3067 = vsel %vm1426, %v3044, 0
        %3069 = vmatpush.bf16.xpose.msra.mxu0 0
        %3070 = vmatpush.bf16.xpose.msra.mxu0 0
        %3071 = vmatpush.bf16.xpose.msra.mxu0 0
        %3072 = vmatpush.bf16.xpose.msra.mxu0 0
        %3073 = vmatpush.bf16.xpose.msra.mxu0 %v3067
        %3074 = vmatpush.bf16.xpose.msra.mxu0 %v3064
        %3075 = vmatpush.bf16.xpose.msra.mxu0 %v3061
        %3076 = vmatpush.bf16.xpose.msra.mxu0 %v3058
        %3077 = vmatmul.bf16.gmra.mxu0 %v3046
        %v3078 = vpop.f32.mrf.mxu0
        %v3079 = vadd.f32 %v2525, %v3078
        %v3080 = vpop.f32.mrf.mxu0
        %v3081 = vadd.f32 %v2525, %v3080
        %3082 = vmatmul.bf16.gmra.mxu0 %v3049
        %v3083 = vpop.f32.mrf.mxu0
        %v3084 = vadd.f32 %v2525, %v3083
        %v3085 = vpop.f32.mrf.mxu0
        %v3086 = vadd.f32 %v2525, %v3085
        %3087 = vmatmul.bf16.gmra.mxu0 %v3052
        %v3088 = vpop.f32.mrf.mxu0
        %v3089 = vadd.f32 %v2525, %v3088
        %v3090 = vpop.f32.mrf.mxu0
        %v3091 = vadd.f32 %v2525, %v3090
        %3092 = vmatmul.bf16.gmra.mxu0 %v3055
        %v3093 = vpop.f32.mrf.mxu0
        %v3094 = vadd.f32 %v2525, %v3093
        %v3095 = vpop.f32.mrf.mxu0
        %v3096 = vadd.f32 %v2525, %v3095
        %3097 = vdwg.mxu0
        %v3098 = vsel %vm1480, %v3079, -inf
        %3099 = vmax.xlane.f32.xlu0 %v3098
        %v3100 = vpop.xlane.xlu0 %3099
        %v3101 = vsel %vm1480, %v3081, -inf
        %3102 = vmax.xlane.f32.xlu0 %v3101
        %v3103 = vpop.xlane.xlu0 %3102
        %v3104 = vsel %vm1480, %v3084, -inf
        %3105 = vmax.xlane.f32.xlu0 %v3104
        %v3106 = vpop.xlane.xlu0 %3105
        %v3107 = vsel %vm1480, %v3086, -inf
        %3108 = vmax.xlane.f32.xlu0 %v3107
        %v3109 = vpop.xlane.xlu0 %3108
        %v3110 = vsel %vm1480, %v3089, -inf
        %3111 = vmax.xlane.f32.xlu0 %v3110
        %v3112 = vpop.xlane.xlu0 %3111
        %v3113 = vsel %vm1480, %v3091, -inf
        %3114 = vmax.xlane.f32.xlu0 %v3113
        %v3115 = vpop.xlane.xlu0 %3114
        %v3116 = vsel %vm1480, %v3094, -inf
        %3117 = vmax.xlane.f32.xlu0 %v3116
        %v3118 = vpop.xlane.xlu0 %3117
        %v3119 = vsel %vm1480, %v3096, -inf
        %3120 = vmax.xlane.f32.xlu0 %v3119
        %v3121 = vpop.xlane.xlu0 %3120
        %v3122 = vsub.f32 %v3079, %v3100
        %v3123 = vsub.f32 %v3081, %v3103
        %v3124 = vsub.f32 %v3084, %v3106
        %v3125 = vsub.f32 %v3086, %v3109
        %v3126 = vsub.f32 %v3089, %v3112
        %v3127 = vsub.f32 %v3091, %v3115
        %v3128 = vsub.f32 %v3094, %v3118
        %v3129 = vsub.f32 %v3096, %v3121
        %v3130 = vmul.f32 %v3122, 1.442695
        %v3131 = vpow.pop %v3130
        %v3132 = vmul.f32 %v3123, 1.442695
        %v3133 = vpow.pop %v3132
        %v3134 = vmul.f32 %v3124, 1.442695
        %v3135 = vpow.pop %v3134
        %v3136 = vmul.f32 %v3125, 1.442695
        %v3137 = vpow.pop %v3136
        %v3138 = vmul.f32 %v3126, 1.442695
        %v3139 = vpow.pop %v3138
        %v3140 = vmul.f32 %v3127, 1.442695
        %v3141 = vpow.pop %v3140
        %v3142 = vmul.f32 %v3128, 1.442695
        %v3143 = vpow.pop %v3142
        %v3144 = vmul.f32 %v3129, 1.442695
        %v3145 = vpow.pop %v3144
        %v3146 = vsel %vm1480, %v3131, 0.0
        %3147 = vadd.xlane.f32.xlu0 %v3146
        %v3148 = vpop.xlane.xlu0 %3147
        %v3149 = vsel %vm1480, %v3133, 0.0
        %3150 = vadd.xlane.f32.xlu0 %v3149
        %v3151 = vpop.xlane.xlu0 %3150
        %v3152 = vsel %vm1480, %v3135, 0.0
        %3153 = vadd.xlane.f32.xlu0 %v3152
        %v3154 = vpop.xlane.xlu0 %3153
        %v3155 = vsel %vm1480, %v3137, 0.0
        %3156 = vadd.xlane.f32.xlu0 %v3155
        %v3157 = vpop.xlane.xlu0 %3156
        %v3158 = vsel %vm1480, %v3139, 0.0
        %3159 = vadd.xlane.f32.xlu0 %v3158
        %v3160 = vpop.xlane.xlu0 %3159
        %v3161 = vsel %vm1480, %v3141, 0.0
        %3162 = vadd.xlane.f32.xlu0 %v3161
        %v3163 = vpop.xlane.xlu0 %3162
        %v3164 = vsel %vm1480, %v3143, 0.0
        %3165 = vadd.xlane.f32.xlu0 %v3164
        %v3166 = vpop.xlane.xlu0 %3165
        %v3167 = vsel %vm1480, %v3145, 0.0
        %3168 = vadd.xlane.f32.xlu0 %v3167
        %v3169 = vpop.xlane.xlu0 %3168
        %v3170 = vrcp.pop %v3148
        %v3171 = vrcp.pop %v3151
        %v3172 = vrcp.pop %v3154
        %v3173 = vrcp.pop %v3157
        %v3174 = vrcp.pop %v3160
        %v3175 = vrcp.pop %v3163
        %v3176 = vrcp.pop %v3166
        %v3177 = vrcp.pop %v3169
        %v3178 = vmul.f32 %v3131, %v3170
        %v3179 = vmul.f32 %v3133, %v3171
        %v3180 = vmul.f32 %v3135, %v3172
        %v3181 = vmul.f32 %v3137, %v3173
        %v3182 = vmul.f32 %v3139, %v3174
        %v3183 = vmul.f32 %v3141, %v3175
        %v3184 = vmul.f32 %v3143, %v3176
        %v3185 = vmul.f32 %v3145, %v3177
        %v3186 = vpack.c.bf16 %v3179, %v3178
        %v3187 = vpack.c.bf16 %v3181, %v3180
        %v3188 = vpack.c.bf16 %v3183, %v3182
        %v3189 = vpack.c.bf16 %v3185, %v3184
        %3190 = vrot.lane.b32.xlu0 %v2520, 64
        %v3191 = vpop.permute.xlu0 %3190
        %3192 = vrot.lane.b32.xlu0 %v2521, 64
        %v3193 = vpop.permute.xlu0 %3192
        %3194 = vrot.lane.b32.xlu0 %v2522, 64
        %v3195 = vpop.permute.xlu0 %3194
        %3196 = vrot.lane.b32.xlu0 %v2523, 64
        %v3197 = vpop.permute.xlu0 %3196
        %v3203 = vsel %vm1480, %v3186, 0
        %v3206 = vsel %vm1480, %v3187, 0
        %v3209 = vsel %vm1480, %v3188, 0
        %v3212 = vsel %vm1480, %v3189, 0
        %3214 = vmatpush.bf16.msra.mxu0 0
        %3215 = vmatpush.bf16.msra.mxu0 0
        %3216 = vmatpush.bf16.msra.mxu0 0
        %3217 = vmatpush.bf16.msra.mxu0 0
        %3218 = vmatpush.bf16.msra.mxu0 %v3197
        %3219 = vmatpush.bf16.msra.mxu0 %v3195
        %3220 = vmatpush.bf16.msra.mxu0 %v3193
        %3221 = vmatpush.bf16.msra.mxu0 %v3191
        %3222 = vmatmul.bf16.gmra.mxu0 %v3203
        %v3223 = vpop.f32.mrf.mxu0
        %v3224 = vadd.f32 0.0, %v3223
        %v3225 = vpop.f32.mrf.mxu0
        %v3226 = vadd.f32 0.0, %v3225
        %3227 = vmatmul.bf16.gmra.mxu0 %v3206
        %v3228 = vpop.f32.mrf.mxu0
        %v3229 = vadd.f32 0.0, %v3228
        %v3230 = vpop.f32.mrf.mxu0
        %v3231 = vadd.f32 0.0, %v3230
        %3232 = vmatmul.bf16.gmra.mxu0 %v3209
        %v3233 = vpop.f32.mrf.mxu0
        %v3234 = vadd.f32 0.0, %v3233
        %v3235 = vpop.f32.mrf.mxu0
        %v3236 = vadd.f32 0.0, %v3235
        %3237 = vmatmul.bf16.gmra.mxu0 %v3212
        %v3238 = vpop.f32.mrf.mxu0
        %v3239 = vadd.f32 0.0, %v3238
        %v3240 = vpop.f32.mrf.mxu0
        %v3241 = vadd.f32 0.0, %v3240
        %3242 = vdwg.mxu0
        %v3243 = vpack.c.bf16 %v3226, %v3224
        %v3244 = vpack.c.bf16 %v3231, %v3229
        %v3245 = vpack.c.bf16 %v3236, %v3234
        %v3246 = vpack.c.bf16 %v3241, %v3239
        %v3248 = vsel %vm1426, %v3243, 0
        %v3251 = vsel %vm1426, %v3244, 0
        %v3254 = vsel %vm1426, %v3245, 0
        %v3257 = vsel %vm1426, %v3246, 0
        %3259 = vmatpush.bf16.msra.mxu0 0
        %3260 = vmatpush.bf16.msra.mxu0 0
        %3261 = vmatpush.bf16.msra.mxu0 0
        %3262 = vmatpush.bf16.msra.mxu0 0
        %3263 = vmatpush.bf16.msra.mxu0 0
        %3264 = vmatpush.bf16.msra.mxu0 0
        %3265 = vmatpush.bf16.msra.mxu0 %v2181
        %3266 = vmatpush.bf16.msra.mxu0 %v2180
        %3267 = vmatmul.bf16.gmra.mxu0 %v3248
        %v3268 = vpop.f32.mrf.mxu0
        %v3269 = vadd.f32 0.0, %v3268
        %v3270 = vpop.f32.mrf.mxu0
        %v3271 = vadd.f32 0.0, %v3270
        %3272 = vmatmul.bf16.gmra.mxu0 %v3251
        %v3273 = vpop.f32.mrf.mxu0
        %v3274 = vadd.f32 0.0, %v3273
        %v3275 = vpop.f32.mrf.mxu0
        %v3276 = vadd.f32 0.0, %v3275
        %3277 = vmatmul.bf16.gmra.mxu0 %v3254
        %v3278 = vpop.f32.mrf.mxu0
        %v3279 = vadd.f32 0.0, %v3278
        %v3280 = vpop.f32.mrf.mxu0
        %v3281 = vadd.f32 0.0, %v3280
        %3282 = vmatmul.bf16.gmra.mxu0 %v3257
        %v3283 = vpop.f32.mrf.mxu0
        %v3284 = vadd.f32 0.0, %v3283
        %v3285 = vpop.f32.mrf.mxu0
        %v3286 = vadd.f32 0.0, %v3285
        %3287 = vdwg.mxu0
        %v3288 = vadd.f32 %v3010, %v3269
        %v3289 = vadd.f32 %v3012, %v3271
        %v3290 = vadd.f32 %v3015, %v3274
        %v3291 = vadd.f32 %v3017, %v3276
        %v3292 = vadd.f32 %v3020, %v3279
        %v3293 = vadd.f32 %v3022, %v3281
        %v3294 = vadd.f32 %v3025, %v3284
        %v3295 = vadd.f32 %v3027, %v3286
        %3296 = vrot.lane.b32.xlu0 %v2512, 32
        %v3297 = vpop.permute.xlu0 %3296
        %3298 = vrot.lane.b32.xlu0 %v2513, 32
        %v3299 = vpop.permute.xlu0 %3298
        %3300 = vrot.lane.b32.xlu0 %v2514, 32
        %v3301 = vpop.permute.xlu0 %3300
        %3302 = vrot.lane.b32.xlu0 %v2515, 32
        %v3303 = vpop.permute.xlu0 %3302
        %3304 = vrot.lane.b32.xlu0 %v2516, 32
        %v3305 = vpop.permute.xlu0 %3304
        %3306 = vrot.lane.b32.xlu0 %v2517, 32
        %v3307 = vpop.permute.xlu0 %3306
        %3308 = vrot.lane.b32.xlu0 %v2518, 32
        %v3309 = vpop.permute.xlu0 %3308
        %3310 = vrot.lane.b32.xlu0 %v2519, 32
        %v3311 = vpop.permute.xlu0 %3310
        %v3313 = vsel %vm1426, %v3297, 0
        %v3316 = vsel %vm1426, %v3299, 0
        %v3319 = vsel %vm1426, %v3301, 0
        %v3322 = vsel %vm1426, %v3303, 0
        %v3325 = vsel %vm1426, %v3305, 0
        %v3328 = vsel %vm1426, %v3307, 0
        %v3331 = vsel %vm1426, %v3309, 0
        %v3334 = vsel %vm1426, %v3311, 0
        %3336 = vmatpush.bf16.xpose.msra.mxu0 0
        %3337 = vmatpush.bf16.xpose.msra.mxu0 0
        %3338 = vmatpush.bf16.xpose.msra.mxu0 0
        %3339 = vmatpush.bf16.xpose.msra.mxu0 0
        %3340 = vmatpush.bf16.xpose.msra.mxu0 %v3334
        %3341 = vmatpush.bf16.xpose.msra.mxu0 %v3331
        %3342 = vmatpush.bf16.xpose.msra.mxu0 %v3328
        %3343 = vmatpush.bf16.xpose.msra.mxu0 %v3325
        %3344 = vmatmul.bf16.gmra.mxu0 %v3313
        %v3345 = vpop.f32.mrf.mxu0
        %v3346 = vadd.f32 %v2525, %v3345
        %v3347 = vpop.f32.mrf.mxu0
        %v3348 = vadd.f32 %v2525, %v3347
        %3349 = vmatmul.bf16.gmra.mxu0 %v3316
        %v3350 = vpop.f32.mrf.mxu0
        %v3351 = vadd.f32 %v2525, %v3350
        %v3352 = vpop.f32.mrf.mxu0
        %v3353 = vadd.f32 %v2525, %v3352
        %3354 = vmatmul.bf16.gmra.mxu0 %v3319
        %v3355 = vpop.f32.mrf.mxu0
        %v3356 = vadd.f32 %v2525, %v3355
        %v3357 = vpop.f32.mrf.mxu0
        %v3358 = vadd.f32 %v2525, %v3357
        %3359 = vmatmul.bf16.gmra.mxu0 %v3322
        %v3360 = vpop.f32.mrf.mxu0
        %v3361 = vadd.f32 %v2525, %v3360
        %v3362 = vpop.f32.mrf.mxu0
        %v3363 = vadd.f32 %v2525, %v3362
        %3364 = vdwg.mxu0
        %v3365 = vsel %vm1480, %v3346, -inf
        %3366 = vmax.xlane.f32.xlu0 %v3365
        %v3367 = vpop.xlane.xlu0 %3366
        %v3368 = vsel %vm1480, %v3348, -inf
        %3369 = vmax.xlane.f32.xlu0 %v3368
        %v3370 = vpop.xlane.xlu0 %3369
        %v3371 = vsel %vm1480, %v3351, -inf
        %3372 = vmax.xlane.f32.xlu0 %v3371
        %v3373 = vpop.xlane.xlu0 %3372
        %v3374 = vsel %vm1480, %v3353, -inf
        %3375 = vmax.xlane.f32.xlu0 %v3374
        %v3376 = vpop.xlane.xlu0 %3375
        %v3377 = vsel %vm1480, %v3356, -inf
        %3378 = vmax.xlane.f32.xlu0 %v3377
        %v3379 = vpop.xlane.xlu0 %3378
        %v3380 = vsel %vm1480, %v3358, -inf
        %3381 = vmax.xlane.f32.xlu0 %v3380
        %v3382 = vpop.xlane.xlu0 %3381
        %v3383 = vsel %vm1480, %v3361, -inf
        %3384 = vmax.xlane.f32.xlu0 %v3383
        %v3385 = vpop.xlane.xlu0 %3384
        %v3386 = vsel %vm1480, %v3363, -inf
        %3387 = vmax.xlane.f32.xlu0 %v3386
        %v3388 = vpop.xlane.xlu0 %3387
        %v3389 = vsub.f32 %v3346, %v3367
        %v3390 = vsub.f32 %v3348, %v3370
        %v3391 = vsub.f32 %v3351, %v3373
        %v3392 = vsub.f32 %v3353, %v3376
        %v3393 = vsub.f32 %v3356, %v3379
        %v3394 = vsub.f32 %v3358, %v3382
        %v3395 = vsub.f32 %v3361, %v3385
        %v3396 = vsub.f32 %v3363, %v3388
        %v3397 = vmul.f32 %v3389, 1.442695
        %v3398 = vpow.pop %v3397
        %v3399 = vmul.f32 %v3390, 1.442695
        %v3400 = vpow.pop %v3399
        %v3401 = vmul.f32 %v3391, 1.442695
        %v3402 = vpow.pop %v3401
        %v3403 = vmul.f32 %v3392, 1.442695
        %v3404 = vpow.pop %v3403
        %v3405 = vmul.f32 %v3393, 1.442695
        %v3406 = vpow.pop %v3405
        %v3407 = vmul.f32 %v3394, 1.442695
        %v3408 = vpow.pop %v3407
        %v3409 = vmul.f32 %v3395, 1.442695
        %v3410 = vpow.pop %v3409
        %v3411 = vmul.f32 %v3396, 1.442695
        %v3412 = vpow.pop %v3411
        %v3413 = vsel %vm1480, %v3398, 0.0
        %3414 = vadd.xlane.f32.xlu0 %v3413
        %v3415 = vpop.xlane.xlu0 %3414
        %v3416 = vsel %vm1480, %v3400, 0.0
        %3417 = vadd.xlane.f32.xlu0 %v3416
        %v3418 = vpop.xlane.xlu0 %3417
        %v3419 = vsel %vm1480, %v3402, 0.0
        %3420 = vadd.xlane.f32.xlu0 %v3419
        %v3421 = vpop.xlane.xlu0 %3420
        %v3422 = vsel %vm1480, %v3404, 0.0
        %3423 = vadd.xlane.f32.xlu0 %v3422
        %v3424 = vpop.xlane.xlu0 %3423
        %v3425 = vsel %vm1480, %v3406, 0.0
        %3426 = vadd.xlane.f32.xlu0 %v3425
        %v3427 = vpop.xlane.xlu0 %3426
        %v3428 = vsel %vm1480, %v3408, 0.0
        %3429 = vadd.xlane.f32.xlu0 %v3428
        %v3430 = vpop.xlane.xlu0 %3429
        %v3431 = vsel %vm1480, %v3410, 0.0
        %3432 = vadd.xlane.f32.xlu0 %v3431
        %v3433 = vpop.xlane.xlu0 %3432
        %v3434 = vsel %vm1480, %v3412, 0.0
        %3435 = vadd.xlane.f32.xlu0 %v3434
        %v3436 = vpop.xlane.xlu0 %3435
        %v3437 = vrcp.pop %v3415
        %v3438 = vrcp.pop %v3418
        %v3439 = vrcp.pop %v3421
        %v3440 = vrcp.pop %v3424
        %v3441 = vrcp.pop %v3427
        %v3442 = vrcp.pop %v3430
        %v3443 = vrcp.pop %v3433
        %v3444 = vrcp.pop %v3436
        %v3445 = vmul.f32 %v3398, %v3437
        %v3446 = vmul.f32 %v3400, %v3438
        %v3447 = vmul.f32 %v3402, %v3439
        %v3448 = vmul.f32 %v3404, %v3440
        %v3449 = vmul.f32 %v3406, %v3441
        %v3450 = vmul.f32 %v3408, %v3442
        %v3451 = vmul.f32 %v3410, %v3443
        %v3452 = vmul.f32 %v3412, %v3444
        %v3453 = vpack.c.bf16 %v3446, %v3445
        %v3454 = vpack.c.bf16 %v3448, %v3447
        %v3455 = vpack.c.bf16 %v3450, %v3449
        %v3456 = vpack.c.bf16 %v3452, %v3451
        %3457 = vrot.lane.b32.xlu0 %v2520, 32
        %v3458 = vpop.permute.xlu0 %3457
        %3459 = vrot.lane.b32.xlu0 %v2521, 32
        %v3460 = vpop.permute.xlu0 %3459
        %3461 = vrot.lane.b32.xlu0 %v2522, 32
        %v3462 = vpop.permute.xlu0 %3461
        %3463 = vrot.lane.b32.xlu0 %v2523, 32
        %v3464 = vpop.permute.xlu0 %3463
        %v3470 = vsel %vm1480, %v3453, 0
        %v3473 = vsel %vm1480, %v3454, 0
        %v3476 = vsel %vm1480, %v3455, 0
        %v3479 = vsel %vm1480, %v3456, 0
        %3481 = vmatpush.bf16.msra.mxu0 0
        %3482 = vmatpush.bf16.msra.mxu0 0
        %3483 = vmatpush.bf16.msra.mxu0 0
        %3484 = vmatpush.bf16.msra.mxu0 0
        %3485 = vmatpush.bf16.msra.mxu0 %v3464
        %3486 = vmatpush.bf16.msra.mxu0 %v3462
        %3487 = vmatpush.bf16.msra.mxu0 %v3460
        %3488 = vmatpush.bf16.msra.mxu0 %v3458
        %3489 = vmatmul.bf16.gmra.mxu0 %v3470
        %v3490 = vpop.f32.mrf.mxu0
        %v3491 = vadd.f32 0.0, %v3490
        %v3492 = vpop.f32.mrf.mxu0
        %v3493 = vadd.f32 0.0, %v3492
        %3494 = vmatmul.bf16.gmra.mxu0 %v3473
        %v3495 = vpop.f32.mrf.mxu0
        %v3496 = vadd.f32 0.0, %v3495
        %v3497 = vpop.f32.mrf.mxu0
        %v3498 = vadd.f32 0.0, %v3497
        %3499 = vmatmul.bf16.gmra.mxu0 %v3476
        %v3500 = vpop.f32.mrf.mxu0
        %v3501 = vadd.f32 0.0, %v3500
        %v3502 = vpop.f32.mrf.mxu0
        %v3503 = vadd.f32 0.0, %v3502
        %3504 = vmatmul.bf16.gmra.mxu0 %v3479
        %v3505 = vpop.f32.mrf.mxu0
        %v3506 = vadd.f32 0.0, %v3505
        %v3507 = vpop.f32.mrf.mxu0
        %v3508 = vadd.f32 0.0, %v3507
        %3509 = vdwg.mxu0
        %v3510 = vpack.c.bf16 %v3493, %v3491
        %v3511 = vpack.c.bf16 %v3498, %v3496
        %v3512 = vpack.c.bf16 %v3503, %v3501
        %v3513 = vpack.c.bf16 %v3508, %v3506
        %v3515 = vsel %vm1426, %v3510, 0
        %v3518 = vsel %vm1426, %v3511, 0
        %v3521 = vsel %vm1426, %v3512, 0
        %v3524 = vsel %vm1426, %v3513, 0
        %3526 = vmatpush.bf16.msra.mxu0 0
        %3527 = vmatpush.bf16.msra.mxu0 0
        %3528 = vmatpush.bf16.msra.mxu0 0
        %3529 = vmatpush.bf16.msra.mxu0 0
        %3530 = vmatpush.bf16.msra.mxu0 0
        %3531 = vmatpush.bf16.msra.mxu0 0
        %3532 = vmatpush.bf16.msra.mxu0 %v2460
        %3533 = vmatpush.bf16.msra.mxu0 %v2459
        %3534 = vmatmul.bf16.gmra.mxu0 %v3515
        %v3535 = vpop.f32.mrf.mxu0
        %v3536 = vadd.f32 0.0, %v3535
        %v3537 = vpop.f32.mrf.mxu0
        %v3538 = vadd.f32 0.0, %v3537
        %3539 = vmatmul.bf16.gmra.mxu0 %v3518
        %v3540 = vpop.f32.mrf.mxu0
        %v3541 = vadd.f32 0.0, %v3540
        %v3542 = vpop.f32.mrf.mxu0
        %v3543 = vadd.f32 0.0, %v3542
        %3544 = vmatmul.bf16.gmra.mxu0 %v3521
        %v3545 = vpop.f32.mrf.mxu0
        %v3546 = vadd.f32 0.0, %v3545
        %v3547 = vpop.f32.mrf.mxu0
        %v3548 = vadd.f32 0.0, %v3547
        %3549 = vmatmul.bf16.gmra.mxu0 %v3524
        %v3550 = vpop.f32.mrf.mxu0
        %v3551 = vadd.f32 0.0, %v3550
        %v3552 = vpop.f32.mrf.mxu0
        %v3553 = vadd.f32 0.0, %v3552
        %3554 = vdwg.mxu0
        %v3555 = vadd.f32 %v3288, %v3536
        %v3556 = vadd.f32 %v3289, %v3538
        %v3557 = vadd.f32 %v3290, %v3541
        %v3558 = vadd.f32 %v3291, %v3543
        %v3559 = vadd.f32 %v3292, %v3546
        %v3560 = vadd.f32 %v3293, %v3548
        %v3561 = vadd.f32 %v3294, %v3551
        %v3562 = vadd.f32 %v3295, %v3553
        %v3563 = vld [vmem:[%s812] sm:$0x1]
        %v3565 = vperm.slane %v3563, 0
        %v3567 = vadd.f32 %v2504, %v3565
        %v3568 = vadd.f32 %v2505, %v3565
        %v3569 = vadd.f32 %v2506, %v3565
        %v3570 = vadd.f32 %v2507, %v3565
        %v3571 = vadd.f32 %v2508, %v3565
        %v3572 = vadd.f32 %v2509, %v3565
        %v3573 = vadd.f32 %v2510, %v3565
        %v3574 = vadd.f32 %v2511, %v3565
        %v3575 = vadd.f32 %v3555, %v3565
        %v3576 = vadd.f32 %v3556, %v3565
        %v3577 = vadd.f32 %v3557, %v3565
        %v3578 = vadd.f32 %v3558, %v3565
        %v3579 = vadd.f32 %v3559, %v3565
        %v3580 = vadd.f32 %v3560, %v3565
        %v3581 = vadd.f32 %v3561, %v3565
        %v3582 = vadd.f32 %v3562, %v3565
        %v3583 = vadd.f32 %v996, %v3567
        %v3584 = vadd.f32 %v997, %v3568
        %v3585 = vadd.f32 %v998, %v3569
        %v3586 = vadd.f32 %v999, %v3570
        %v3587 = vadd.f32 %v1000, %v3571
        %v3588 = vadd.f32 %v1001, %v3572
        %v3589 = vadd.f32 %v1002, %v3573
        %v3590 = vadd.f32 %v1003, %v3574
        %v3591 = vadd.f32 %v1004, %v3575
        %v3592 = vadd.f32 %v1005, %v3576
        %v3593 = vadd.f32 %v1006, %v3577
        %v3594 = vadd.f32 %v1007, %v3578
        %v3595 = vadd.f32 %v1008, %v3579
        %v3596 = vadd.f32 %v1009, %v3580
        %v3597 = vadd.f32 %v1010, %v3581
        %v3598 = vadd.f32 %v1011, %v3582
        %3599 = vadd.xlane.f32.xlu0 %v3583
        %v3600 = vpop.xlane.xlu0 %3599
        %3601 = vadd.xlane.f32.xlu0 %v3584
        %v3602 = vpop.xlane.xlu0 %3601
        %3603 = vadd.xlane.f32.xlu0 %v3585
        %v3604 = vpop.xlane.xlu0 %3603
        %3605 = vadd.xlane.f32.xlu0 %v3586
        %v3606 = vpop.xlane.xlu0 %3605
        %3607 = vadd.xlane.f32.xlu0 %v3587
        %v3608 = vpop.xlane.xlu0 %3607
        %3609 = vadd.xlane.f32.xlu0 %v3588
        %v3610 = vpop.xlane.xlu0 %3609
        %3611 = vadd.xlane.f32.xlu0 %v3589
        %v3612 = vpop.xlane.xlu0 %3611
        %3613 = vadd.xlane.f32.xlu0 %v3590
        %v3614 = vpop.xlane.xlu0 %3613
        %3615 = vadd.xlane.f32.xlu0 %v3591
        %v3616 = vpop.xlane.xlu0 %3615
        %3617 = vadd.xlane.f32.xlu0 %v3592
        %v3618 = vpop.xlane.xlu0 %3617
        %3619 = vadd.xlane.f32.xlu0 %v3593
        %v3620 = vpop.xlane.xlu0 %3619
        %3621 = vadd.xlane.f32.xlu0 %v3594
        %v3622 = vpop.xlane.xlu0 %3621
        %3623 = vadd.xlane.f32.xlu0 %v3595
        %v3624 = vpop.xlane.xlu0 %3623
        %3625 = vadd.xlane.f32.xlu0 %v3596
        %v3626 = vpop.xlane.xlu0 %3625
        %3627 = vadd.xlane.f32.xlu0 %v3597
        %v3628 = vpop.xlane.xlu0 %3627
        %3629 = vadd.xlane.f32.xlu0 %v3598
        %v3630 = vpop.xlane.xlu0 %3629
        %v3631 = vrcp.pop 128.0
        %v3632 = vmul.f32 128.0, %v3631
        %v3633 = vsub.f32 1.0, %v3632
        %v3634 = vmul.f32 %v3631, %v3633
        %v3635 = vadd.f32 %v3631, %v3634
        %vm3636 = vweird.f32 %v3631
        %v3637 = vsel %vm3636, %v3631, %v3635
        %v3638 = vmul.f32 %v3600, %v3637
        %v3639 = vmul.f32 %v3602, %v3637
        %v3640 = vmul.f32 %v3604, %v3637
        %v3641 = vmul.f32 %v3606, %v3637
        %v3642 = vmul.f32 %v3608, %v3637
        %v3643 = vmul.f32 %v3610, %v3637
        %v3644 = vmul.f32 %v3612, %v3637
        %v3645 = vmul.f32 %v3614, %v3637
        %v3646 = vmul.f32 %v3616, %v3637
        %v3647 = vmul.f32 %v3618, %v3637
        %v3648 = vmul.f32 %v3620, %v3637
        %v3649 = vmul.f32 %v3622, %v3637
        %v3650 = vmul.f32 %v3624, %v3637
        %v3651 = vmul.f32 %v3626, %v3637
        %v3652 = vmul.f32 %v3628, %v3637
        %v3653 = vmul.f32 %v3630, %v3637
        %v3654 = vsub.f32 %v3583, %v3638
        %v3655 = vsub.f32 %v3584, %v3639
        %v3656 = vsub.f32 %v3585, %v3640
        %v3657 = vsub.f32 %v3586, %v3641
        %v3658 = vsub.f32 %v3587, %v3642
        %v3659 = vsub.f32 %v3588, %v3643
        %v3660 = vsub.f32 %v3589, %v3644
        %v3661 = vsub.f32 %v3590, %v3645
        %v3662 = vsub.f32 %v3591, %v3646
        %v3663 = vsub.f32 %v3592, %v3647
        %v3664 = vsub.f32 %v3593, %v3648
        %v3665 = vsub.f32 %v3594, %v3649
        %v3666 = vsub.f32 %v3595, %v3650
        %v3667 = vsub.f32 %v3596, %v3651
        %v3668 = vsub.f32 %v3597, %v3652
        %v3669 = vsub.f32 %v3598, %v3653
        %v3670 = vmul.f32 %v3654, %v3654
        %v3671 = vmul.f32 %v3655, %v3655
        %v3672 = vmul.f32 %v3656, %v3656
        %v3673 = vmul.f32 %v3657, %v3657
        %v3674 = vmul.f32 %v3658, %v3658
        %v3675 = vmul.f32 %v3659, %v3659
        %v3676 = vmul.f32 %v3660, %v3660
        %v3677 = vmul.f32 %v3661, %v3661
        %v3678 = vmul.f32 %v3662, %v3662
        %v3679 = vmul.f32 %v3663, %v3663
        %v3680 = vmul.f32 %v3664, %v3664
        %v3681 = vmul.f32 %v3665, %v3665
        %v3682 = vmul.f32 %v3666, %v3666
        %v3683 = vmul.f32 %v3667, %v3667
        %v3684 = vmul.f32 %v3668, %v3668
        %v3685 = vmul.f32 %v3669, %v3669
        %3686 = vadd.xlane.f32.xlu0 %v3670
        %v3687 = vpop.xlane.xlu0 %3686
        %3688 = vadd.xlane.f32.xlu0 %v3671
        %v3689 = vpop.xlane.xlu0 %3688
        %3690 = vadd.xlane.f32.xlu0 %v3672
        %v3691 = vpop.xlane.xlu0 %3690
        %3692 = vadd.xlane.f32.xlu0 %v3673
        %v3693 = vpop.xlane.xlu0 %3692
        %3694 = vadd.xlane.f32.xlu0 %v3674
        %v3695 = vpop.xlane.xlu0 %3694
        %3696 = vadd.xlane.f32.xlu0 %v3675
        %v3697 = vpop.xlane.xlu0 %3696
        %3698 = vadd.xlane.f32.xlu0 %v3676
        %v3699 = vpop.xlane.xlu0 %3698
        %3700 = vadd.xlane.f32.xlu0 %v3677
        %v3701 = vpop.xlane.xlu0 %3700
        %3702 = vadd.xlane.f32.xlu0 %v3678
        %v3703 = vpop.xlane.xlu0 %3702
        %3704 = vadd.xlane.f32.xlu0 %v3679
        %v3705 = vpop.xlane.xlu0 %3704
        %3706 = vadd.xlane.f32.xlu0 %v3680
        %v3707 = vpop.xlane.xlu0 %3706
        %3708 = vadd.xlane.f32.xlu0 %v3681
        %v3709 = vpop.xlane.xlu0 %3708
        %3710 = vadd.xlane.f32.xlu0 %v3682
        %v3711 = vpop.xlane.xlu0 %3710
        %3712 = vadd.xlane.f32.xlu0 %v3683
        %v3713 = vpop.xlane.xlu0 %3712
        %3714 = vadd.xlane.f32.xlu0 %v3684
        %v3715 = vpop.xlane.xlu0 %3714
        %3716 = vadd.xlane.f32.xlu0 %v3685
        %v3717 = vpop.xlane.xlu0 %3716
        %v3718 = vmul.f32 %v3687, %v3637
        %v3719 = vmul.f32 %v3689, %v3637
        %v3720 = vmul.f32 %v3691, %v3637
        %v3721 = vmul.f32 %v3693, %v3637
        %v3722 = vmul.f32 %v3695, %v3637
        %v3723 = vmul.f32 %v3697, %v3637
        %v3724 = vmul.f32 %v3699, %v3637
        %v3725 = vmul.f32 %v3701, %v3637
        %v3726 = vmul.f32 %v3703, %v3637
        %v3727 = vmul.f32 %v3705, %v3637
        %v3728 = vmul.f32 %v3707, %v3637
        %v3729 = vmul.f32 %v3709, %v3637
        %v3730 = vmul.f32 %v3711, %v3637
        %v3731 = vmul.f32 %v3713, %v3637
        %v3732 = vmul.f32 %v3715, %v3637
        %v3733 = vmul.f32 %v3717, %v3637
        %v3734 = vadd.f32 %v3718, 1e-05
        %v3735 = vadd.f32 %v3719, 1e-05
        %v3736 = vadd.f32 %v3720, 1e-05
        %v3737 = vadd.f32 %v3721, 1e-05
        %v3738 = vadd.f32 %v3722, 1e-05
        %v3739 = vadd.f32 %v3723, 1e-05
        %v3740 = vadd.f32 %v3724, 1e-05
        %v3741 = vadd.f32 %v3725, 1e-05
        %v3742 = vadd.f32 %v3726, 1e-05
        %v3743 = vadd.f32 %v3727, 1e-05
        %v3744 = vadd.f32 %v3728, 1e-05
        %v3745 = vadd.f32 %v3729, 1e-05
        %v3746 = vadd.f32 %v3730, 1e-05
        %v3747 = vadd.f32 %v3731, 1e-05
        %v3748 = vadd.f32 %v3732, 1e-05
        %v3749 = vadd.f32 %v3733, 1e-05
        %v3750 = vrsqrt.pop %v3734
        %v3751 = vmul.f32 %v3750, %v3734
        %v3752 = vmul.f32 %v3751, %v3750
        %v3753 = vmul.f32 0.5, %v3752
        %v3754 = vsub.f32 1.5, %v3753
        %v3755 = vmul.f32 %v3750, %v3754
        %vm3756 = vweird.f32 %v3734
        %vm3757 = vweird.f32 %v3750
        %vm3758 = vmor %vm3756, %vm3757
        %v3759 = vsel %vm3758, %v3750, %v3755
        %v3760 = vrsqrt.pop %v3735
        %v3761 = vmul.f32 %v3760, %v3735
        %v3762 = vmul.f32 %v3761, %v3760
        %v3763 = vmul.f32 0.5, %v3762
        %v3764 = vsub.f32 1.5, %v3763
        %v3765 = vmul.f32 %v3760, %v3764
        %vm3766 = vweird.f32 %v3735
        %vm3767 = vweird.f32 %v3760
        %vm3768 = vmor %vm3766, %vm3767
        %v3769 = vsel %vm3768, %v3760, %v3765
        %v3770 = vrsqrt.pop %v3736
        %v3771 = vmul.f32 %v3770, %v3736
        %v3772 = vmul.f32 %v3771, %v3770
        %v3773 = vmul.f32 0.5, %v3772
        %v3774 = vsub.f32 1.5, %v3773
        %v3775 = vmul.f32 %v3770, %v3774
        %vm3776 = vweird.f32 %v3736
        %vm3777 = vweird.f32 %v3770
        %vm3778 = vmor %vm3776, %vm3777
        %v3779 = vsel %vm3778, %v3770, %v3775
        %v3780 = vrsqrt.pop %v3737
        %v3781 = vmul.f32 %v3780, %v3737
        %v3782 = vmul.f32 %v3781, %v3780
        %v3783 = vmul.f32 0.5, %v3782
        %v3784 = vsub.f32 1.5, %v3783
        %v3785 = vmul.f32 %v3780, %v3784
        %vm3786 = vweird.f32 %v3737
        %vm3787 = vweird.f32 %v3780
        %vm3788 = vmor %vm3786, %vm3787
        %v3789 = vsel %vm3788, %v3780, %v3785
        %v3790 = vrsqrt.pop %v3738
        %v3791 = vmul.f32 %v3790, %v3738
        %v3792 = vmul.f32 %v3791, %v3790
        %v3793 = vmul.f32 0.5, %v3792
        %v3794 = vsub.f32 1.5, %v3793
        %v3795 = vmul.f32 %v3790, %v3794
        %vm3796 = vweird.f32 %v3738
        %vm3797 = vweird.f32 %v3790
        %vm3798 = vmor %vm3796, %vm3797
        %v3799 = vsel %vm3798, %v3790, %v3795
        %v3800 = vrsqrt.pop %v3739
        %v3801 = vmul.f32 %v3800, %v3739
        %v3802 = vmul.f32 %v3801, %v3800
        %v3803 = vmul.f32 0.5, %v3802
        %v3804 = vsub.f32 1.5, %v3803
        %v3805 = vmul.f32 %v3800, %v3804
        %vm3806 = vweird.f32 %v3739
        %vm3807 = vweird.f32 %v3800
        %vm3808 = vmor %vm3806, %vm3807
        %v3809 = vsel %vm3808, %v3800, %v3805
        %v3810 = vrsqrt.pop %v3740
        %v3811 = vmul.f32 %v3810, %v3740
        %v3812 = vmul.f32 %v3811, %v3810
        %v3813 = vmul.f32 0.5, %v3812
        %v3814 = vsub.f32 1.5, %v3813
        %v3815 = vmul.f32 %v3810, %v3814
        %vm3816 = vweird.f32 %v3740
        %vm3817 = vweird.f32 %v3810
        %vm3818 = vmor %vm3816, %vm3817
        %v3819 = vsel %vm3818, %v3810, %v3815
        %v3820 = vrsqrt.pop %v3741
        %v3821 = vmul.f32 %v3820, %v3741
        %v3822 = vmul.f32 %v3821, %v3820
        %v3823 = vmul.f32 0.5, %v3822
        %v3824 = vsub.f32 1.5, %v3823
        %v3825 = vmul.f32 %v3820, %v3824
        %vm3826 = vweird.f32 %v3741
        %vm3827 = vweird.f32 %v3820
        %vm3828 = vmor %vm3826, %vm3827
        %v3829 = vsel %vm3828, %v3820, %v3825
        %v3830 = vrsqrt.pop %v3742
        %v3831 = vmul.f32 %v3830, %v3742
        %v3832 = vmul.f32 %v3831, %v3830
        %v3833 = vmul.f32 0.5, %v3832
        %v3834 = vsub.f32 1.5, %v3833
        %v3835 = vmul.f32 %v3830, %v3834
        %vm3836 = vweird.f32 %v3742
        %vm3837 = vweird.f32 %v3830
        %vm3838 = vmor %vm3836, %vm3837
        %v3839 = vsel %vm3838, %v3830, %v3835
        %v3840 = vrsqrt.pop %v3743
        %v3841 = vmul.f32 %v3840, %v3743
        %v3842 = vmul.f32 %v3841, %v3840
        %v3843 = vmul.f32 0.5, %v3842
        %v3844 = vsub.f32 1.5, %v3843
        %v3845 = vmul.f32 %v3840, %v3844
        %vm3846 = vweird.f32 %v3743
        %vm3847 = vweird.f32 %v3840
        %vm3848 = vmor %vm3846, %vm3847
        %v3849 = vsel %vm3848, %v3840, %v3845
        %v3850 = vrsqrt.pop %v3744
        %v3851 = vmul.f32 %v3850, %v3744
        %v3852 = vmul.f32 %v3851, %v3850
        %v3853 = vmul.f32 0.5, %v3852
        %v3854 = vsub.f32 1.5, %v3853
        %v3855 = vmul.f32 %v3850, %v3854
        %vm3856 = vweird.f32 %v3744
        %vm3857 = vweird.f32 %v3850
        %vm3858 = vmor %vm3856, %vm3857
        %v3859 = vsel %vm3858, %v3850, %v3855
        %v3860 = vrsqrt.pop %v3745
        %v3861 = vmul.f32 %v3860, %v3745
        %v3862 = vmul.f32 %v3861, %v3860
        %v3863 = vmul.f32 0.5, %v3862
        %v3864 = vsub.f32 1.5, %v3863
        %v3865 = vmul.f32 %v3860, %v3864
        %vm3866 = vweird.f32 %v3745
        %vm3867 = vweird.f32 %v3860
        %vm3868 = vmor %vm3866, %vm3867
        %v3869 = vsel %vm3868, %v3860, %v3865
        %v3870 = vrsqrt.pop %v3746
        %v3871 = vmul.f32 %v3870, %v3746
        %v3872 = vmul.f32 %v3871, %v3870
        %v3873 = vmul.f32 0.5, %v3872
        %v3874 = vsub.f32 1.5, %v3873
        %v3875 = vmul.f32 %v3870, %v3874
        %vm3876 = vweird.f32 %v3746
        %vm3877 = vweird.f32 %v3870
        %vm3878 = vmor %vm3876, %vm3877
        %v3879 = vsel %vm3878, %v3870, %v3875
        %v3880 = vrsqrt.pop %v3747
        %v3881 = vmul.f32 %v3880, %v3747
        %v3882 = vmul.f32 %v3881, %v3880
        %v3883 = vmul.f32 0.5, %v3882
        %v3884 = vsub.f32 1.5, %v3883
        %v3885 = vmul.f32 %v3880, %v3884
        %vm3886 = vweird.f32 %v3747
        %vm3887 = vweird.f32 %v3880
        %vm3888 = vmor %vm3886, %vm3887
        %v3889 = vsel %vm3888, %v3880, %v3885
        %v3890 = vrsqrt.pop %v3748
        %v3891 = vmul.f32 %v3890, %v3748
        %v3892 = vmul.f32 %v3891, %v3890
        %v3893 = vmul.f32 0.5, %v3892
        %v3894 = vsub.f32 1.5, %v3893
        %v3895 = vmul.f32 %v3890, %v3894
        %vm3896 = vweird.f32 %v3748
        %vm3897 = vweird.f32 %v3890
        %vm3898 = vmor %vm3896, %vm3897
        %v3899 = vsel %vm3898, %v3890, %v3895
        %v3900 = vrsqrt.pop %v3749
        %v3901 = vmul.f32 %v3900, %v3749
        %v3902 = vmul.f32 %v3901, %v3900
        %v3903 = vmul.f32 0.5, %v3902
        %v3904 = vsub.f32 1.5, %v3903
        %v3905 = vmul.f32 %v3900, %v3904
        %vm3906 = vweird.f32 %v3749
        %vm3907 = vweird.f32 %v3900
        %vm3908 = vmor %vm3906, %vm3907
        %v3909 = vsel %vm3908, %v3900, %v3905
        %v3910 = vmul.f32 %v3654, %v3759
        %v3911 = vmul.f32 %v3655, %v3769
        %v3912 = vmul.f32 %v3656, %v3779
        %v3913 = vmul.f32 %v3657, %v3789
        %v3914 = vmul.f32 %v3658, %v3799
        %v3915 = vmul.f32 %v3659, %v3809
        %v3916 = vmul.f32 %v3660, %v3819
        %v3917 = vmul.f32 %v3661, %v3829
        %v3918 = vmul.f32 %v3662, %v3839
        %v3919 = vmul.f32 %v3663, %v3849
        %v3920 = vmul.f32 %v3664, %v3859
        %v3921 = vmul.f32 %v3665, %v3869
        %v3922 = vmul.f32 %v3666, %v3879
        %v3923 = vmul.f32 %v3667, %v3889
        %v3924 = vmul.f32 %v3668, %v3899
        %v3925 = vmul.f32 %v3669, %v3909
        %v3926 = vld [vmem:[%s952] sm:$0x1]
        %v3928 = vperm.slane %v3926, 0
        %v3930 = vmul.f32 %v3910, %v3928
        %v3931 = vmul.f32 %v3911, %v3928
        %v3932 = vmul.f32 %v3912, %v3928
        %v3933 = vmul.f32 %v3913, %v3928
        %v3934 = vmul.f32 %v3914, %v3928
        %v3935 = vmul.f32 %v3915, %v3928
        %v3936 = vmul.f32 %v3916, %v3928
        %v3937 = vmul.f32 %v3917, %v3928
        %v3938 = vmul.f32 %v3918, %v3928
        %v3939 = vmul.f32 %v3919, %v3928
        %v3940 = vmul.f32 %v3920, %v3928
        %v3941 = vmul.f32 %v3921, %v3928
        %v3942 = vmul.f32 %v3922, %v3928
        %v3943 = vmul.f32 %v3923, %v3928
        %v3944 = vmul.f32 %v3924, %v3928
        %v3945 = vmul.f32 %v3925, %v3928
        %v3946 = vld [vmem:[%s955] sm:$0x1]
        %v3948 = vperm.slane %v3946, 0
        %v3950 = vadd.f32 %v3930, %v3948
        %v3951 = vadd.f32 %v3931, %v3948
        %v3952 = vadd.f32 %v3932, %v3948
        %v3953 = vadd.f32 %v3933, %v3948
        %v3954 = vadd.f32 %v3934, %v3948
        %v3955 = vadd.f32 %v3935, %v3948
        %v3956 = vadd.f32 %v3936, %v3948
        %v3957 = vadd.f32 %v3937, %v3948
        %v3958 = vadd.f32 %v3938, %v3948
        %v3959 = vadd.f32 %v3939, %v3948
        %v3960 = vadd.f32 %v3940, %v3948
        %v3961 = vadd.f32 %v3941, %v3948
        %v3962 = vadd.f32 %v3942, %v3948
        %v3963 = vadd.f32 %v3943, %v3948
        %v3964 = vadd.f32 %v3944, %v3948
        %v3965 = vadd.f32 %v3945, %v3948
        %v3966 = vpack.c.bf16 %v3951, %v3950
        %v3967 = vpack.c.bf16 %v3953, %v3952
        %v3968 = vpack.c.bf16 %v3955, %v3954
        %v3969 = vpack.c.bf16 %v3957, %v3956
        %v3970 = vpack.c.bf16 %v3959, %v3958
        %v3971 = vpack.c.bf16 %v3961, %v3960
        %v3972 = vpack.c.bf16 %v3963, %v3962
        %v3973 = vpack.c.bf16 %v3965, %v3964
        %v3974 = vld [vmem:[%s822] sm:$0xff]
        %v3975 = vld [vmem:[%s822 + $0x8] sm:$0xff]
        %v3976 = vld [vmem:[%s822 + $0x10] sm:$0xff]
        %v3977 = vld [vmem:[%s822 + $0x18] sm:$0xff]
        %v3978 = vld [vmem:[%s822 + $0x20] sm:$0xff]
        %v3979 = vld [vmem:[%s822 + $0x28] sm:$0xff]
        %v3980 = vld [vmem:[%s822 + $0x30] sm:$0xff]
        %v3981 = vld [vmem:[%s822 + $0x38] sm:$0xff]
        %v3982 = vld [vmem:[%s822 + $0x40] sm:$0xff]
        %v3983 = vld [vmem:[%s822 + $0x48] sm:$0xff]
        %v3984 = vld [vmem:[%s822 + $0x50] sm:$0xff]
        %v3985 = vld [vmem:[%s822 + $0x58] sm:$0xff]
        %v3986 = vld [vmem:[%s822 + $0x60] sm:$0xff]
        %v3987 = vld [vmem:[%s822 + $0x68] sm:$0xff]
        %v3988 = vld [vmem:[%s822 + $0x70] sm:$0xff]
        %v3989 = vld [vmem:[%s822 + $0x78] sm:$0xff]
        %v3990 = vld [vmem:[%s946] sm:$0x3]
        %v3992 = vperm.slane %v3990, 0
        %v3993 = vperm.slane %v3990, 1
        %v4012 = vunpack.c.l.b16 %v3974
        %v4013 = vunpack.c.h.b16 %v3974
        %v4014 = vunpack.c.l.b16 %v3975
        %v4015 = vunpack.c.h.b16 %v3975
        %v4016 = vunpack.c.l.b16 %v3976
        %v4017 = vunpack.c.h.b16 %v3976
        %v4018 = vunpack.c.l.b16 %v3977
        %v4019 = vunpack.c.h.b16 %v3977
        %v4020 = vunpack.c.l.b16 %v3978
        %v4021 = vunpack.c.h.b16 %v3978
        %v4022 = vunpack.c.l.b16 %v3979
        %v4023 = vunpack.c.h.b16 %v3979
        %v4024 = vunpack.c.l.b16 %v3980
        %v4025 = vunpack.c.h.b16 %v3980
        %v4026 = vunpack.c.l.b16 %v3981
        %v4027 = vunpack.c.h.b16 %v3981
        %v4028 = vunpack.c.l.b16 %v3982
        %v4029 = vunpack.c.h.b16 %v3982
        %v4030 = vunpack.c.l.b16 %v3983
        %v4031 = vunpack.c.h.b16 %v3983
        %v4032 = vunpack.c.l.b16 %v3984
        %v4033 = vunpack.c.h.b16 %v3984
        %v4034 = vunpack.c.l.b16 %v3985
        %v4035 = vunpack.c.h.b16 %v3985
        %v4036 = vunpack.c.l.b16 %v3986
        %v4037 = vunpack.c.h.b16 %v3986
        %v4038 = vunpack.c.l.b16 %v3987
        %v4039 = vunpack.c.h.b16 %v3987
        %v4040 = vunpack.c.l.b16 %v3988
        %v4041 = vunpack.c.h.b16 %v3988
        %v4042 = vunpack.c.l.b16 %v3989
        %v4043 = vunpack.c.h.b16 %v3989
        %v4044 = vpack.c.b16 %v4014, %v4012
        %v4045 = vpack.c.b16 %v4015, %v4013
        %v4046 = vpack.c.b16 %v4018, %v4016
        %v4047 = vpack.c.b16 %v4019, %v4017
        %v4048 = vpack.c.b16 %v4022, %v4020
        %v4049 = vpack.c.b16 %v4023, %v4021
        %v4050 = vpack.c.b16 %v4026, %v4024
        %v4051 = vpack.c.b16 %v4027, %v4025
        %v4052 = vpack.c.b16 %v4030, %v4028
        %v4053 = vpack.c.b16 %v4031, %v4029
        %v4054 = vpack.c.b16 %v4034, %v4032
        %v4055 = vpack.c.b16 %v4035, %v4033
        %v4056 = vpack.c.b16 %v4038, %v4036
        %v4057 = vpack.c.b16 %v4039, %v4037
        %v4058 = vpack.c.b16 %v4042, %v4040
        %v4059 = vpack.c.b16 %v4043, %v4041
        %4076 = vmatpush.bf16.msra.mxu0 %v4058
        %4077 = vmatpush.bf16.msra.mxu0 %v4056
        %4078 = vmatpush.bf16.msra.mxu0 %v4054
        %4079 = vmatpush.bf16.msra.mxu0 %v4052
        %4080 = vmatpush.bf16.msra.mxu0 %v4050
        %4081 = vmatpush.bf16.msra.mxu0 %v4048
        %4082 = vmatpush.bf16.msra.mxu0 %v4046
        %4083 = vmatpush.bf16.msra.mxu0 %v4044
        %4084 = vmatmul.bf16.gmra.mxu0 %v3966
        %v4085 = vpop.f32.mrf.mxu0
        %v4086 = vadd.f32 %v3992, %v4085
        %v4087 = vpop.f32.mrf.mxu0
        %v4088 = vadd.f32 %v3992, %v4087
        %4089 = vmatmul.bf16.gmra.mxu0 %v3967
        %v4090 = vpop.f32.mrf.mxu0
        %v4091 = vadd.f32 %v3992, %v4090
        %v4092 = vpop.f32.mrf.mxu0
        %v4093 = vadd.f32 %v3992, %v4092
        %4094 = vmatmul.bf16.gmra.mxu0 %v3968
        %v4095 = vpop.f32.mrf.mxu0
        %v4096 = vadd.f32 %v3992, %v4095
        %v4097 = vpop.f32.mrf.mxu0
        %v4098 = vadd.f32 %v3992, %v4097
        %4099 = vmatmul.bf16.gmra.mxu0 %v3969
        %v4100 = vpop.f32.mrf.mxu0
        %v4101 = vadd.f32 %v3992, %v4100
        %v4102 = vpop.f32.mrf.mxu0
        %v4103 = vadd.f32 %v3992, %v4102
        %4104 = vmatmul.bf16.gmra.mxu0 %v3970
        %v4105 = vpop.f32.mrf.mxu0
        %v4106 = vadd.f32 %v3992, %v4105
        %v4107 = vpop.f32.mrf.mxu0
        %v4108 = vadd.f32 %v3992, %v4107
        %4109 = vmatmul.bf16.gmra.mxu0 %v3971
        %v4110 = vpop.f32.mrf.mxu0
        %v4111 = vadd.f32 %v3992, %v4110
        %v4112 = vpop.f32.mrf.mxu0
        %v4113 = vadd.f32 %v3992, %v4112
        %4114 = vmatmul.bf16.gmra.mxu0 %v3972
        %v4115 = vpop.f32.mrf.mxu0
        %v4116 = vadd.f32 %v3992, %v4115
        %v4117 = vpop.f32.mrf.mxu0
        %v4118 = vadd.f32 %v3992, %v4117
        %4119 = vmatmul.bf16.gmra.mxu0 %v3973
        %v4120 = vpop.f32.mrf.mxu0
        %v4121 = vadd.f32 %v3992, %v4120
        %v4122 = vpop.f32.mrf.mxu0
        %v4123 = vadd.f32 %v3992, %v4122
        %4124 = vdwg.mxu0
        %4125 = vmatpush.bf16.msra.mxu0 %v4059
        %4126 = vmatpush.bf16.msra.mxu0 %v4057
        %4127 = vmatpush.bf16.msra.mxu0 %v4055
        %4128 = vmatpush.bf16.msra.mxu0 %v4053
        %4129 = vmatpush.bf16.msra.mxu0 %v4051
        %4130 = vmatpush.bf16.msra.mxu0 %v4049
        %4131 = vmatpush.bf16.msra.mxu0 %v4047
        %4132 = vmatpush.bf16.msra.mxu0 %v4045
        %4133 = vmatmul.bf16.gmra.mxu0 %v3966
        %v4134 = vpop.f32.mrf.mxu0
        %v4135 = vadd.f32 %v3993, %v4134
        %v4136 = vpop.f32.mrf.mxu0
        %v4137 = vadd.f32 %v3993, %v4136
        %4138 = vmatmul.bf16.gmra.mxu0 %v3967
        %v4139 = vpop.f32.mrf.mxu0
        %v4140 = vadd.f32 %v3993, %v4139
        %v4141 = vpop.f32.mrf.mxu0
        %v4142 = vadd.f32 %v3993, %v4141
        %4143 = vmatmul.bf16.gmra.mxu0 %v3968
        %v4144 = vpop.f32.mrf.mxu0
        %v4145 = vadd.f32 %v3993, %v4144
        %v4146 = vpop.f32.mrf.mxu0
        %v4147 = vadd.f32 %v3993, %v4146
        %4148 = vmatmul.bf16.gmra.mxu0 %v3969
        %v4149 = vpop.f32.mrf.mxu0
        %v4150 = vadd.f32 %v3993, %v4149
        %v4151 = vpop.f32.mrf.mxu0
        %v4152 = vadd.f32 %v3993, %v4151
        %4153 = vmatmul.bf16.gmra.mxu0 %v3970
        %v4154 = vpop.f32.mrf.mxu0
        %v4155 = vadd.f32 %v3993, %v4154
        %v4156 = vpop.f32.mrf.mxu0
        %v4157 = vadd.f32 %v3993, %v4156
        %4158 = vmatmul.bf16.gmra.mxu0 %v3971
        %v4159 = vpop.f32.mrf.mxu0
        %v4160 = vadd.f32 %v3993, %v4159
        %v4161 = vpop.f32.mrf.mxu0
        %v4162 = vadd.f32 %v3993, %v4161
        %4163 = vmatmul.bf16.gmra.mxu0 %v3972
        %v4164 = vpop.f32.mrf.mxu0
        %v4165 = vadd.f32 %v3993, %v4164
        %v4166 = vpop.f32.mrf.mxu0
        %v4167 = vadd.f32 %v3993, %v4166
        %4168 = vmatmul.bf16.gmra.mxu0 %v3973
        %v4169 = vpop.f32.mrf.mxu0
        %v4170 = vadd.f32 %v3993, %v4169
        %v4171 = vpop.f32.mrf.mxu0
        %v4172 = vadd.f32 %v3993, %v4171
        %4173 = vdwg.mxu0
        %v4174 = vmax.f32 %v4086, 0.0
        %v4175 = vmax.f32 %v4135, 0.0
        %v4176 = vmax.f32 %v4088, 0.0
        %v4177 = vmax.f32 %v4137, 0.0
        %v4178 = vmax.f32 %v4091, 0.0
        %v4179 = vmax.f32 %v4140, 0.0
        %v4180 = vmax.f32 %v4093, 0.0
        %v4181 = vmax.f32 %v4142, 0.0
        %v4182 = vmax.f32 %v4096, 0.0
        %v4183 = vmax.f32 %v4145, 0.0
        %v4184 = vmax.f32 %v4098, 0.0
        %v4185 = vmax.f32 %v4147, 0.0
        %v4186 = vmax.f32 %v4101, 0.0
        %v4187 = vmax.f32 %v4150, 0.0
        %v4188 = vmax.f32 %v4103, 0.0
        %v4189 = vmax.f32 %v4152, 0.0
        %v4190 = vmax.f32 %v4106, 0.0
        %v4191 = vmax.f32 %v4155, 0.0
        %v4192 = vmax.f32 %v4108, 0.0
        %v4193 = vmax.f32 %v4157, 0.0
        %v4194 = vmax.f32 %v4111, 0.0
        %v4195 = vmax.f32 %v4160, 0.0
        %v4196 = vmax.f32 %v4113, 0.0
        %v4197 = vmax.f32 %v4162, 0.0
        %v4198 = vmax.f32 %v4116, 0.0
        %v4199 = vmax.f32 %v4165, 0.0
        %v4200 = vmax.f32 %v4118, 0.0
        %v4201 = vmax.f32 %v4167, 0.0
        %v4202 = vmax.f32 %v4121, 0.0
        %v4203 = vmax.f32 %v4170, 0.0
        %v4204 = vmax.f32 %v4123, 0.0
        %v4205 = vmax.f32 %v4172, 0.0
        %v4206 = vpack.c.bf16 %v4176, %v4174
        %v4207 = vpack.c.bf16 %v4177, %v4175
        %v4208 = vpack.c.bf16 %v4180, %v4178
        %v4209 = vpack.c.bf16 %v4181, %v4179
        %v4210 = vpack.c.bf16 %v4184, %v4182
        %v4211 = vpack.c.bf16 %v4185, %v4183
        %v4212 = vpack.c.bf16 %v4188, %v4186
        %v4213 = vpack.c.bf16 %v4189, %v4187
        %v4214 = vpack.c.bf16 %v4192, %v4190
        %v4215 = vpack.c.bf16 %v4193, %v4191
        %v4216 = vpack.c.bf16 %v4196, %v4194
        %v4217 = vpack.c.bf16 %v4197, %v4195
        %v4218 = vpack.c.bf16 %v4200, %v4198
        %v4219 = vpack.c.bf16 %v4201, %v4199
        %v4220 = vpack.c.bf16 %v4204, %v4202
        %v4221 = vpack.c.bf16 %v4205, %v4203
        %v4222 = vld [vmem:[%s832] sm:$0xf]
        %v4223 = vld [vmem:[%s832 + $0x4] sm:$0xf]
        %v4224 = vld [vmem:[%s832 + $0x8] sm:$0xf]
        %v4225 = vld [vmem:[%s832 + $0xc] sm:$0xf]
        %v4226 = vld [vmem:[%s832 + $0x10] sm:$0xf]
        %v4227 = vld [vmem:[%s832 + $0x14] sm:$0xf]
        %v4228 = vld [vmem:[%s832 + $0x18] sm:$0xf]
        %v4229 = vld [vmem:[%s832 + $0x1c] sm:$0xf]
        %v4230 = vld [vmem:[%s832 + $0x20] sm:$0xf]
        %v4231 = vld [vmem:[%s832 + $0x24] sm:$0xf]
        %v4232 = vld [vmem:[%s832 + $0x28] sm:$0xf]
        %v4233 = vld [vmem:[%s832 + $0x2c] sm:$0xf]
        %v4234 = vld [vmem:[%s832 + $0x30] sm:$0xf]
        %v4235 = vld [vmem:[%s832 + $0x34] sm:$0xf]
        %v4236 = vld [vmem:[%s832 + $0x38] sm:$0xf]
        %v4237 = vld [vmem:[%s832 + $0x3c] sm:$0xf]
        %v4238 = vld [vmem:[%s832 + $0x40] sm:$0xf]
        %v4239 = vld [vmem:[%s832 + $0x44] sm:$0xf]
        %v4240 = vld [vmem:[%s832 + $0x48] sm:$0xf]
        %v4241 = vld [vmem:[%s832 + $0x4c] sm:$0xf]
        %v4242 = vld [vmem:[%s832 + $0x50] sm:$0xf]
        %v4243 = vld [vmem:[%s832 + $0x54] sm:$0xf]
        %v4244 = vld [vmem:[%s832 + $0x58] sm:$0xf]
        %v4245 = vld [vmem:[%s832 + $0x5c] sm:$0xf]
        %v4246 = vld [vmem:[%s832 + $0x60] sm:$0xf]
        %v4247 = vld [vmem:[%s832 + $0x64] sm:$0xf]
        %v4248 = vld [vmem:[%s832 + $0x68] sm:$0xf]
        %v4249 = vld [vmem:[%s832 + $0x6c] sm:$0xf]
        %v4250 = vld [vmem:[%s832 + $0x70] sm:$0xf]
        %v4251 = vld [vmem:[%s832 + $0x74] sm:$0xf]
        %v4252 = vld [vmem:[%s832 + $0x78] sm:$0xf]
        %v4253 = vld [vmem:[%s832 + $0x7c] sm:$0xf]
        %v4254 = vld [vmem:[%s949] sm:$0x1]
        %v4256 = vperm.slane %v4254, 0
        %v4290 = vunpack.c.l.b16 %v4222
        %v4291 = vunpack.c.l.b16 %v4223
        %v4292 = vunpack.c.l.b16 %v4224
        %v4293 = vunpack.c.l.b16 %v4225
        %v4294 = vunpack.c.l.b16 %v4226
        %v4295 = vunpack.c.l.b16 %v4227
        %v4296 = vunpack.c.l.b16 %v4228
        %v4297 = vunpack.c.l.b16 %v4229
        %v4298 = vunpack.c.l.b16 %v4230
        %v4299 = vunpack.c.l.b16 %v4231
        %v4300 = vunpack.c.l.b16 %v4232
        %v4301 = vunpack.c.l.b16 %v4233
        %v4302 = vunpack.c.l.b16 %v4234
        %v4303 = vunpack.c.l.b16 %v4235
        %v4304 = vunpack.c.l.b16 %v4236
        %v4305 = vunpack.c.l.b16 %v4237
        %v4306 = vunpack.c.l.b16 %v4238
        %v4307 = vunpack.c.l.b16 %v4239
        %v4308 = vunpack.c.l.b16 %v4240
        %v4309 = vunpack.c.l.b16 %v4241
        %v4310 = vunpack.c.l.b16 %v4242
        %v4311 = vunpack.c.l.b16 %v4243
        %v4312 = vunpack.c.l.b16 %v4244
        %v4313 = vunpack.c.l.b16 %v4245
        %v4314 = vunpack.c.l.b16 %v4246
        %v4315 = vunpack.c.l.b16 %v4247
        %v4316 = vunpack.c.l.b16 %v4248
        %v4317 = vunpack.c.l.b16 %v4249
        %v4318 = vunpack.c.l.b16 %v4250
        %v4319 = vunpack.c.l.b16 %v4251
        %v4320 = vunpack.c.l.b16 %v4252
        %v4321 = vunpack.c.l.b16 %v4253
        %v4322 = vpack.c.b16 %v4291, %v4290
        %v4323 = vpack.c.b16 %v4293, %v4292
        %v4324 = vpack.c.b16 %v4295, %v4294
        %v4325 = vpack.c.b16 %v4297, %v4296
        %v4326 = vpack.c.b16 %v4299, %v4298
        %v4327 = vpack.c.b16 %v4301, %v4300
        %v4328 = vpack.c.b16 %v4303, %v4302
        %v4329 = vpack.c.b16 %v4305, %v4304
        %v4330 = vpack.c.b16 %v4307, %v4306
        %v4331 = vpack.c.b16 %v4309, %v4308
        %v4332 = vpack.c.b16 %v4311, %v4310
        %v4333 = vpack.c.b16 %v4313, %v4312
        %v4334 = vpack.c.b16 %v4315, %v4314
        %v4335 = vpack.c.b16 %v4317, %v4316
        %v4336 = vpack.c.b16 %v4319, %v4318
        %v4337 = vpack.c.b16 %v4321, %v4320
        %4354 = vmatpush.bf16.msra.mxu0 %v4329
        %4355 = vmatpush.bf16.msra.mxu0 %v4328
        %4356 = vmatpush.bf16.msra.mxu0 %v4327
        %4357 = vmatpush.bf16.msra.mxu0 %v4326
        %4358 = vmatpush.bf16.msra.mxu0 %v4325
        %4359 = vmatpush.bf16.msra.mxu0 %v4324
        %4360 = vmatpush.bf16.msra.mxu0 %v4323
        %4361 = vmatpush.bf16.msra.mxu0 %v4322
        %4362 = vmatmul.bf16.gmra.mxu0 %v4206
        %v4363 = vpop.f32.mrf.mxu0
        %v4364 = vadd.f32 %v4256, %v4363
        %v4365 = vpop.f32.mrf.mxu0
        %v4366 = vadd.f32 %v4256, %v4365
        %4367 = vmatmul.bf16.gmra.mxu0 %v4208
        %v4368 = vpop.f32.mrf.mxu0
        %v4369 = vadd.f32 %v4256, %v4368
        %v4370 = vpop.f32.mrf.mxu0
        %v4371 = vadd.f32 %v4256, %v4370
        %4372 = vmatmul.bf16.gmra.mxu0 %v4210
        %v4373 = vpop.f32.mrf.mxu0
        %v4374 = vadd.f32 %v4256, %v4373
        %v4375 = vpop.f32.mrf.mxu0
        %v4376 = vadd.f32 %v4256, %v4375
        %4377 = vmatmul.bf16.gmra.mxu0 %v4212
        %v4378 = vpop.f32.mrf.mxu0
        %v4379 = vadd.f32 %v4256, %v4378
        %v4380 = vpop.f32.mrf.mxu0
        %v4381 = vadd.f32 %v4256, %v4380
        %4382 = vmatmul.bf16.gmra.mxu0 %v4214
        %v4383 = vpop.f32.mrf.mxu0
        %v4384 = vadd.f32 %v4256, %v4383
        %v4385 = vpop.f32.mrf.mxu0
        %v4386 = vadd.f32 %v4256, %v4385
        %4387 = vmatmul.bf16.gmra.mxu0 %v4216
        %v4388 = vpop.f32.mrf.mxu0
        %v4389 = vadd.f32 %v4256, %v4388
        %v4390 = vpop.f32.mrf.mxu0
        %v4391 = vadd.f32 %v4256, %v4390
        %4392 = vmatmul.bf16.gmra.mxu0 %v4218
        %v4393 = vpop.f32.mrf.mxu0
        %v4394 = vadd.f32 %v4256, %v4393
        %v4395 = vpop.f32.mrf.mxu0
        %v4396 = vadd.f32 %v4256, %v4395
        %4397 = vmatmul.bf16.gmra.mxu0 %v4220
        %v4398 = vpop.f32.mrf.mxu0
        %v4399 = vadd.f32 %v4256, %v4398
        %v4400 = vpop.f32.mrf.mxu0
        %v4401 = vadd.f32 %v4256, %v4400
        %4402 = vdwg.mxu0
        %4403 = vmatpush.bf16.msra.mxu0 %v4337
        %4404 = vmatpush.bf16.msra.mxu0 %v4336
        %4405 = vmatpush.bf16.msra.mxu0 %v4335
        %4406 = vmatpush.bf16.msra.mxu0 %v4334
        %4407 = vmatpush.bf16.msra.mxu0 %v4333
        %4408 = vmatpush.bf16.msra.mxu0 %v4332
        %4409 = vmatpush.bf16.msra.mxu0 %v4331
        %4410 = vmatpush.bf16.msra.mxu0 %v4330
        %4411 = vmatmul.bf16.gmra.mxu0 %v4207
        %v4412 = vpop.f32.mrf.mxu0
        %v4413 = vadd.f32 %v4364, %v4412
        %v4414 = vpop.f32.mrf.mxu0
        %v4415 = vadd.f32 %v4366, %v4414
        %4416 = vmatmul.bf16.gmra.mxu0 %v4209
        %v4417 = vpop.f32.mrf.mxu0
        %v4418 = vadd.f32 %v4369, %v4417
        %v4419 = vpop.f32.mrf.mxu0
        %v4420 = vadd.f32 %v4371, %v4419
        %4421 = vmatmul.bf16.gmra.mxu0 %v4211
        %v4422 = vpop.f32.mrf.mxu0
        %v4423 = vadd.f32 %v4374, %v4422
        %v4424 = vpop.f32.mrf.mxu0
        %v4425 = vadd.f32 %v4376, %v4424
        %4426 = vmatmul.bf16.gmra.mxu0 %v4213
        %v4427 = vpop.f32.mrf.mxu0
        %v4428 = vadd.f32 %v4379, %v4427
        %v4429 = vpop.f32.mrf.mxu0
        %v4430 = vadd.f32 %v4381, %v4429
        %4431 = vmatmul.bf16.gmra.mxu0 %v4215
        %v4432 = vpop.f32.mrf.mxu0
        %v4433 = vadd.f32 %v4384, %v4432
        %v4434 = vpop.f32.mrf.mxu0
        %v4435 = vadd.f32 %v4386, %v4434
        %4436 = vmatmul.bf16.gmra.mxu0 %v4217
        %v4437 = vpop.f32.mrf.mxu0
        %v4438 = vadd.f32 %v4389, %v4437
        %v4439 = vpop.f32.mrf.mxu0
        %v4440 = vadd.f32 %v4391, %v4439
        %4441 = vmatmul.bf16.gmra.mxu0 %v4219
        %v4442 = vpop.f32.mrf.mxu0
        %v4443 = vadd.f32 %v4394, %v4442
        %v4444 = vpop.f32.mrf.mxu0
        %v4445 = vadd.f32 %v4396, %v4444
        %4446 = vmatmul.bf16.gmra.mxu0 %v4221
        %v4447 = vpop.f32.mrf.mxu0
        %v4448 = vadd.f32 %v4399, %v4447
        %v4449 = vpop.f32.mrf.mxu0
        %v4450 = vadd.f32 %v4401, %v4449
        %4451 = vdwg.mxu0
        %v4452 = vadd.f32 %v3950, %v4413
        %v4453 = vadd.f32 %v3951, %v4415
        %v4454 = vadd.f32 %v3952, %v4418
        %v4455 = vadd.f32 %v3953, %v4420
        %v4456 = vadd.f32 %v3954, %v4423
        %v4457 = vadd.f32 %v3955, %v4425
        %v4458 = vadd.f32 %v3956, %v4428
        %v4459 = vadd.f32 %v3957, %v4430
        %v4460 = vadd.f32 %v3958, %v4433
        %v4461 = vadd.f32 %v3959, %v4435
        %v4462 = vadd.f32 %v3960, %v4438
        %v4463 = vadd.f32 %v3961, %v4440
        %v4464 = vadd.f32 %v3962, %v4443
        %v4465 = vadd.f32 %v3963, %v4445
        %v4466 = vadd.f32 %v3964, %v4448
        %v4467 = vadd.f32 %v3965, %v4450
        %4468 = vadd.xlane.f32.xlu0 %v4452
        %v4469 = vpop.xlane.xlu0 %4468
        %4470 = vadd.xlane.f32.xlu0 %v4453
        %v4471 = vpop.xlane.xlu0 %4470
        %4472 = vadd.xlane.f32.xlu0 %v4454
        %v4473 = vpop.xlane.xlu0 %4472
        %4474 = vadd.xlane.f32.xlu0 %v4455
        %v4475 = vpop.xlane.xlu0 %4474
        %4476 = vadd.xlane.f32.xlu0 %v4456
        %v4477 = vpop.xlane.xlu0 %4476
        %4478 = vadd.xlane.f32.xlu0 %v4457
        %v4479 = vpop.xlane.xlu0 %4478
        %4480 = vadd.xlane.f32.xlu0 %v4458
        %v4481 = vpop.xlane.xlu0 %4480
        %4482 = vadd.xlane.f32.xlu0 %v4459
        %v4483 = vpop.xlane.xlu0 %4482
        %4484 = vadd.xlane.f32.xlu0 %v4460
        %v4485 = vpop.xlane.xlu0 %4484
        %4486 = vadd.xlane.f32.xlu0 %v4461
        %v4487 = vpop.xlane.xlu0 %4486
        %4488 = vadd.xlane.f32.xlu0 %v4462
        %v4489 = vpop.xlane.xlu0 %4488
        %4490 = vadd.xlane.f32.xlu0 %v4463
        %v4491 = vpop.xlane.xlu0 %4490
        %4492 = vadd.xlane.f32.xlu0 %v4464
        %v4493 = vpop.xlane.xlu0 %4492
        %4494 = vadd.xlane.f32.xlu0 %v4465
        %v4495 = vpop.xlane.xlu0 %4494
        %4496 = vadd.xlane.f32.xlu0 %v4466
        %v4497 = vpop.xlane.xlu0 %4496
        %4498 = vadd.xlane.f32.xlu0 %v4467
        %v4499 = vpop.xlane.xlu0 %4498
        %v4500 = vmul.f32 %v4469, %v3637
        %v4501 = vmul.f32 %v4471, %v3637
        %v4502 = vmul.f32 %v4473, %v3637
        %v4503 = vmul.f32 %v4475, %v3637
        %v4504 = vmul.f32 %v4477, %v3637
        %v4505 = vmul.f32 %v4479, %v3637
        %v4506 = vmul.f32 %v4481, %v3637
        %v4507 = vmul.f32 %v4483, %v3637
        %v4508 = vmul.f32 %v4485, %v3637
        %v4509 = vmul.f32 %v4487, %v3637
        %v4510 = vmul.f32 %v4489, %v3637
        %v4511 = vmul.f32 %v4491, %v3637
        %v4512 = vmul.f32 %v4493, %v3637
        %v4513 = vmul.f32 %v4495, %v3637
        %v4514 = vmul.f32 %v4497, %v3637
        %v4515 = vmul.f32 %v4499, %v3637
        %v4516 = vsub.f32 %v4452, %v4500
        %v4517 = vsub.f32 %v4453, %v4501
        %v4518 = vsub.f32 %v4454, %v4502
        %v4519 = vsub.f32 %v4455, %v4503
        %v4520 = vsub.f32 %v4456, %v4504
        %v4521 = vsub.f32 %v4457, %v4505
        %v4522 = vsub.f32 %v4458, %v4506
        %v4523 = vsub.f32 %v4459, %v4507
        %v4524 = vsub.f32 %v4460, %v4508
        %v4525 = vsub.f32 %v4461, %v4509
        %v4526 = vsub.f32 %v4462, %v4510
        %v4527 = vsub.f32 %v4463, %v4511
        %v4528 = vsub.f32 %v4464, %v4512
        %v4529 = vsub.f32 %v4465, %v4513
        %v4530 = vsub.f32 %v4466, %v4514
        %v4531 = vsub.f32 %v4467, %v4515
        %v4532 = vmul.f32 %v4516, %v4516
        %v4533 = vmul.f32 %v4517, %v4517
        %v4534 = vmul.f32 %v4518, %v4518
        %v4535 = vmul.f32 %v4519, %v4519
        %v4536 = vmul.f32 %v4520, %v4520
        %v4537 = vmul.f32 %v4521, %v4521
        %v4538 = vmul.f32 %v4522, %v4522
        %v4539 = vmul.f32 %v4523, %v4523
        %v4540 = vmul.f32 %v4524, %v4524
        %v4541 = vmul.f32 %v4525, %v4525
        %v4542 = vmul.f32 %v4526, %v4526
        %v4543 = vmul.f32 %v4527, %v4527
        %v4544 = vmul.f32 %v4528, %v4528
        %v4545 = vmul.f32 %v4529, %v4529
        %v4546 = vmul.f32 %v4530, %v4530
        %v4547 = vmul.f32 %v4531, %v4531
        %4548 = vadd.xlane.f32.xlu0 %v4532
        %v4549 = vpop.xlane.xlu0 %4548
        %4550 = vadd.xlane.f32.xlu0 %v4533
        %v4551 = vpop.xlane.xlu0 %4550
        %4552 = vadd.xlane.f32.xlu0 %v4534
        %v4553 = vpop.xlane.xlu0 %4552
        %4554 = vadd.xlane.f32.xlu0 %v4535
        %v4555 = vpop.xlane.xlu0 %4554
        %4556 = vadd.xlane.f32.xlu0 %v4536
        %v4557 = vpop.xlane.xlu0 %4556
        %4558 = vadd.xlane.f32.xlu0 %v4537
        %v4559 = vpop.xlane.xlu0 %4558
        %4560 = vadd.xlane.f32.xlu0 %v4538
        %v4561 = vpop.xlane.xlu0 %4560
        %4562 = vadd.xlane.f32.xlu0 %v4539
        %v4563 = vpop.xlane.xlu0 %4562
        %4564 = vadd.xlane.f32.xlu0 %v4540
        %v4565 = vpop.xlane.xlu0 %4564
        %4566 = vadd.xlane.f32.xlu0 %v4541
        %v4567 = vpop.xlane.xlu0 %4566
        %4568 = vadd.xlane.f32.xlu0 %v4542
        %v4569 = vpop.xlane.xlu0 %4568
        %4570 = vadd.xlane.f32.xlu0 %v4543
        %v4571 = vpop.xlane.xlu0 %4570
        %4572 = vadd.xlane.f32.xlu0 %v4544
        %v4573 = vpop.xlane.xlu0 %4572
        %4574 = vadd.xlane.f32.xlu0 %v4545
        %v4575 = vpop.xlane.xlu0 %4574
        %4576 = vadd.xlane.f32.xlu0 %v4546
        %v4577 = vpop.xlane.xlu0 %4576
        %4578 = vadd.xlane.f32.xlu0 %v4547
        %v4579 = vpop.xlane.xlu0 %4578
        %v4580 = vmul.f32 %v4549, %v3637
        %v4581 = vmul.f32 %v4551, %v3637
        %v4582 = vmul.f32 %v4553, %v3637
        %v4583 = vmul.f32 %v4555, %v3637
        %v4584 = vmul.f32 %v4557, %v3637
        %v4585 = vmul.f32 %v4559, %v3637
        %v4586 = vmul.f32 %v4561, %v3637
        %v4587 = vmul.f32 %v4563, %v3637
        %v4588 = vmul.f32 %v4565, %v3637
        %v4589 = vmul.f32 %v4567, %v3637
        %v4590 = vmul.f32 %v4569, %v3637
        %v4591 = vmul.f32 %v4571, %v3637
        %v4592 = vmul.f32 %v4573, %v3637
        %v4593 = vmul.f32 %v4575, %v3637
        %v4594 = vmul.f32 %v4577, %v3637
        %v4595 = vmul.f32 %v4579, %v3637
        %v4596 = vadd.f32 %v4580, 1e-05
        %v4597 = vadd.f32 %v4581, 1e-05
        %v4598 = vadd.f32 %v4582, 1e-05
        %v4599 = vadd.f32 %v4583, 1e-05
        %v4600 = vadd.f32 %v4584, 1e-05
        %v4601 = vadd.f32 %v4585, 1e-05
        %v4602 = vadd.f32 %v4586, 1e-05
        %v4603 = vadd.f32 %v4587, 1e-05
        %v4604 = vadd.f32 %v4588, 1e-05
        %v4605 = vadd.f32 %v4589, 1e-05
        %v4606 = vadd.f32 %v4590, 1e-05
        %v4607 = vadd.f32 %v4591, 1e-05
        %v4608 = vadd.f32 %v4592, 1e-05
        %v4609 = vadd.f32 %v4593, 1e-05
        %v4610 = vadd.f32 %v4594, 1e-05
        %v4611 = vadd.f32 %v4595, 1e-05
        %v4612 = vrsqrt.pop %v4596
        %v4613 = vmul.f32 %v4612, %v4596
        %v4614 = vmul.f32 %v4613, %v4612
        %v4615 = vmul.f32 0.5, %v4614
        %v4616 = vsub.f32 1.5, %v4615
        %v4617 = vmul.f32 %v4612, %v4616
        %vm4618 = vweird.f32 %v4596
        %vm4619 = vweird.f32 %v4612
        %vm4620 = vmor %vm4618, %vm4619
        %v4621 = vsel %vm4620, %v4612, %v4617
        %v4622 = vrsqrt.pop %v4597
        %v4623 = vmul.f32 %v4622, %v4597
        %v4624 = vmul.f32 %v4623, %v4622
        %v4625 = vmul.f32 0.5, %v4624
        %v4626 = vsub.f32 1.5, %v4625
        %v4627 = vmul.f32 %v4622, %v4626
        %vm4628 = vweird.f32 %v4597
        %vm4629 = vweird.f32 %v4622
        %vm4630 = vmor %vm4628, %vm4629
        %v4631 = vsel %vm4630, %v4622, %v4627
        %v4632 = vrsqrt.pop %v4598
        %v4633 = vmul.f32 %v4632, %v4598
        %v4634 = vmul.f32 %v4633, %v4632
        %v4635 = vmul.f32 0.5, %v4634
        %v4636 = vsub.f32 1.5, %v4635
        %v4637 = vmul.f32 %v4632, %v4636
        %vm4638 = vweird.f32 %v4598
        %vm4639 = vweird.f32 %v4632
        %vm4640 = vmor %vm4638, %vm4639
        %v4641 = vsel %vm4640, %v4632, %v4637
        %v4642 = vrsqrt.pop %v4599
        %v4643 = vmul.f32 %v4642, %v4599
        %v4644 = vmul.f32 %v4643, %v4642
        %v4645 = vmul.f32 0.5, %v4644
        %v4646 = vsub.f32 1.5, %v4645
        %v4647 = vmul.f32 %v4642, %v4646
        %vm4648 = vweird.f32 %v4599
        %vm4649 = vweird.f32 %v4642
        %vm4650 = vmor %vm4648, %vm4649
        %v4651 = vsel %vm4650, %v4642, %v4647
        %v4652 = vrsqrt.pop %v4600
        %v4653 = vmul.f32 %v4652, %v4600
        %v4654 = vmul.f32 %v4653, %v4652
        %v4655 = vmul.f32 0.5, %v4654
        %v4656 = vsub.f32 1.5, %v4655
        %v4657 = vmul.f32 %v4652, %v4656
        %vm4658 = vweird.f32 %v4600
        %vm4659 = vweird.f32 %v4652
        %vm4660 = vmor %vm4658, %vm4659
        %v4661 = vsel %vm4660, %v4652, %v4657
        %v4662 = vrsqrt.pop %v4601
        %v4663 = vmul.f32 %v4662, %v4601
        %v4664 = vmul.f32 %v4663, %v4662
        %v4665 = vmul.f32 0.5, %v4664
        %v4666 = vsub.f32 1.5, %v4665
        %v4667 = vmul.f32 %v4662, %v4666
        %vm4668 = vweird.f32 %v4601
        %vm4669 = vweird.f32 %v4662
        %vm4670 = vmor %vm4668, %vm4669
        %v4671 = vsel %vm4670, %v4662, %v4667
        %v4672 = vrsqrt.pop %v4602
        %v4673 = vmul.f32 %v4672, %v4602
        %v4674 = vmul.f32 %v4673, %v4672
        %v4675 = vmul.f32 0.5, %v4674
        %v4676 = vsub.f32 1.5, %v4675
        %v4677 = vmul.f32 %v4672, %v4676
        %vm4678 = vweird.f32 %v4602
        %vm4679 = vweird.f32 %v4672
        %vm4680 = vmor %vm4678, %vm4679
        %v4681 = vsel %vm4680, %v4672, %v4677
        %v4682 = vrsqrt.pop %v4603
        %v4683 = vmul.f32 %v4682, %v4603
        %v4684 = vmul.f32 %v4683, %v4682
        %v4685 = vmul.f32 0.5, %v4684
        %v4686 = vsub.f32 1.5, %v4685
        %v4687 = vmul.f32 %v4682, %v4686
        %vm4688 = vweird.f32 %v4603
        %vm4689 = vweird.f32 %v4682
        %vm4690 = vmor %vm4688, %vm4689
        %v4691 = vsel %vm4690, %v4682, %v4687
        %v4692 = vrsqrt.pop %v4604
        %v4693 = vmul.f32 %v4692, %v4604
        %v4694 = vmul.f32 %v4693, %v4692
        %v4695 = vmul.f32 0.5, %v4694
        %v4696 = vsub.f32 1.5, %v4695
        %v4697 = vmul.f32 %v4692, %v4696
        %vm4698 = vweird.f32 %v4604
        %vm4699 = vweird.f32 %v4692
        %vm4700 = vmor %vm4698, %vm4699
        %v4701 = vsel %vm4700, %v4692, %v4697
        %v4702 = vrsqrt.pop %v4605
        %v4703 = vmul.f32 %v4702, %v4605
        %v4704 = vmul.f32 %v4703, %v4702
        %v4705 = vmul.f32 0.5, %v4704
        %v4706 = vsub.f32 1.5, %v4705
        %v4707 = vmul.f32 %v4702, %v4706
        %vm4708 = vweird.f32 %v4605
        %vm4709 = vweird.f32 %v4702
        %vm4710 = vmor %vm4708, %vm4709
        %v4711 = vsel %vm4710, %v4702, %v4707
        %v4712 = vrsqrt.pop %v4606
        %v4713 = vmul.f32 %v4712, %v4606
        %v4714 = vmul.f32 %v4713, %v4712
        %v4715 = vmul.f32 0.5, %v4714
        %v4716 = vsub.f32 1.5, %v4715
        %v4717 = vmul.f32 %v4712, %v4716
        %vm4718 = vweird.f32 %v4606
        %vm4719 = vweird.f32 %v4712
        %vm4720 = vmor %vm4718, %vm4719
        %v4721 = vsel %vm4720, %v4712, %v4717
        %v4722 = vrsqrt.pop %v4607
        %v4723 = vmul.f32 %v4722, %v4607
        %v4724 = vmul.f32 %v4723, %v4722
        %v4725 = vmul.f32 0.5, %v4724
        %v4726 = vsub.f32 1.5, %v4725
        %v4727 = vmul.f32 %v4722, %v4726
        %vm4728 = vweird.f32 %v4607
        %vm4729 = vweird.f32 %v4722
        %vm4730 = vmor %vm4728, %vm4729
        %v4731 = vsel %vm4730, %v4722, %v4727
        %v4732 = vrsqrt.pop %v4608
        %v4733 = vmul.f32 %v4732, %v4608
        %v4734 = vmul.f32 %v4733, %v4732
        %v4735 = vmul.f32 0.5, %v4734
        %v4736 = vsub.f32 1.5, %v4735
        %v4737 = vmul.f32 %v4732, %v4736
        %vm4738 = vweird.f32 %v4608
        %vm4739 = vweird.f32 %v4732
        %vm4740 = vmor %vm4738, %vm4739
        %v4741 = vsel %vm4740, %v4732, %v4737
        %v4742 = vrsqrt.pop %v4609
        %v4743 = vmul.f32 %v4742, %v4609
        %v4744 = vmul.f32 %v4743, %v4742
        %v4745 = vmul.f32 0.5, %v4744
        %v4746 = vsub.f32 1.5, %v4745
        %v4747 = vmul.f32 %v4742, %v4746
        %vm4748 = vweird.f32 %v4609
        %vm4749 = vweird.f32 %v4742
        %vm4750 = vmor %vm4748, %vm4749
        %v4751 = vsel %vm4750, %v4742, %v4747
        %v4752 = vrsqrt.pop %v4610
        %v4753 = vmul.f32 %v4752, %v4610
        %v4754 = vmul.f32 %v4753, %v4752
        %v4755 = vmul.f32 0.5, %v4754
        %v4756 = vsub.f32 1.5, %v4755
        %v4757 = vmul.f32 %v4752, %v4756
        %vm4758 = vweird.f32 %v4610
        %vm4759 = vweird.f32 %v4752
        %vm4760 = vmor %vm4758, %vm4759
        %v4761 = vsel %vm4760, %v4752, %v4757
        %v4762 = vrsqrt.pop %v4611
        %v4763 = vmul.f32 %v4762, %v4611
        %v4764 = vmul.f32 %v4763, %v4762
        %v4765 = vmul.f32 0.5, %v4764
        %v4766 = vsub.f32 1.5, %v4765
        %v4767 = vmul.f32 %v4762, %v4766
        %vm4768 = vweird.f32 %v4611
        %vm4769 = vweird.f32 %v4762
        %vm4770 = vmor %vm4768, %vm4769
        %v4771 = vsel %vm4770, %v4762, %v4767
        %v4772 = vmul.f32 %v4516, %v4621
        %v4773 = vmul.f32 %v4517, %v4631
        %v4774 = vmul.f32 %v4518, %v4641
        %v4775 = vmul.f32 %v4519, %v4651
        %v4776 = vmul.f32 %v4520, %v4661
        %v4777 = vmul.f32 %v4521, %v4671
        %v4778 = vmul.f32 %v4522, %v4681
        %v4779 = vmul.f32 %v4523, %v4691
        %v4780 = vmul.f32 %v4524, %v4701
        %v4781 = vmul.f32 %v4525, %v4711
        %v4782 = vmul.f32 %v4526, %v4721
        %v4783 = vmul.f32 %v4527, %v4731
        %v4784 = vmul.f32 %v4528, %v4741
        %v4785 = vmul.f32 %v4529, %v4751
        %v4786 = vmul.f32 %v4530, %v4761
        %v4787 = vmul.f32 %v4531, %v4771
        %v4788 = vld [vmem:[%s958] sm:$0x1]
        %v4790 = vperm.slane %v4788, 0
        %v4792 = vmul.f32 %v4772, %v4790
        %v4793 = vmul.f32 %v4773, %v4790
        %v4794 = vmul.f32 %v4774, %v4790
        %v4795 = vmul.f32 %v4775, %v4790
        %v4796 = vmul.f32 %v4776, %v4790
        %v4797 = vmul.f32 %v4777, %v4790
        %v4798 = vmul.f32 %v4778, %v4790
        %v4799 = vmul.f32 %v4779, %v4790
        %v4800 = vmul.f32 %v4780, %v4790
        %v4801 = vmul.f32 %v4781, %v4790
        %v4802 = vmul.f32 %v4782, %v4790
        %v4803 = vmul.f32 %v4783, %v4790
        %v4804 = vmul.f32 %v4784, %v4790
        %v4805 = vmul.f32 %v4785, %v4790
        %v4806 = vmul.f32 %v4786, %v4790
        %v4807 = vmul.f32 %v4787, %v4790
        %v4808 = vld [vmem:[%s841] sm:$0x1]
        %v4810 = vperm.slane %v4808, 0
        %v4812 = vadd.f32 %v4792, %v4810
        %v4813 = vadd.f32 %v4793, %v4810
        %v4814 = vadd.f32 %v4794, %v4810
        %v4815 = vadd.f32 %v4795, %v4810
        %v4816 = vadd.f32 %v4796, %v4810
        %v4817 = vadd.f32 %v4797, %v4810
        %v4818 = vadd.f32 %v4798, %v4810
        %v4819 = vadd.f32 %v4799, %v4810
        %v4820 = vadd.f32 %v4800, %v4810
        %v4821 = vadd.f32 %v4801, %v4810
        %v4822 = vadd.f32 %v4802, %v4810
        %v4823 = vadd.f32 %v4803, %v4810
        %v4824 = vadd.f32 %v4804, %v4810
        %v4825 = vadd.f32 %v4805, %v4810
        %v4826 = vadd.f32 %v4806, %v4810
        %v4827 = vadd.f32 %v4807, %v4810
        %4828 = vst [vmem:[#allocation20] sm:$0xff] %v4812
        %4829 = vst [vmem:[#allocation20 + $0x8] sm:$0xff] %v4813
        %4830 = vst [vmem:[#allocation20 + $0x10] sm:$0xff] %v4814
        %4831 = vst [vmem:[#allocation20 + $0x18] sm:$0xff] %v4815
        %4832 = vst [vmem:[#allocation20 + $0x20] sm:$0xff] %v4816
        %4833 = vst [vmem:[#allocation20 + $0x28] sm:$0xff] %v4817
        %4834 = vst [vmem:[#allocation20 + $0x30] sm:$0xff] %v4818
        %4835 = vst [vmem:[#allocation20 + $0x38] sm:$0xff] %v4819
        %4836 = vst [vmem:[#allocation20 + $0x40] sm:$0xff] %v4820
        %4837 = vst [vmem:[#allocation20 + $0x48] sm:$0xff] %v4821
        %4838 = vst [vmem:[#allocation20 + $0x50] sm:$0xff] %v4822
        %4839 = vst [vmem:[#allocation20 + $0x58] sm:$0xff] %v4823
        %4840 = vst [vmem:[#allocation20 + $0x60] sm:$0xff] %v4824
        %4841 = vst [vmem:[#allocation20 + $0x68] sm:$0xff] %v4825
        %4842 = vst [vmem:[#allocation20 + $0x70] sm:$0xff] %v4826
        %4843 = vst [vmem:[#allocation20 + $0x78] sm:$0xff] %v4827
        // Predicated region
        $region137: #{tpu_custom_call.1} parent=87 // pred_check
          %p4844 = pneg %p483
        $region138: #{tpu_custom_call.1} parent=87 // pred_check_branch
          %4846 = sbr.rel (%p4844) target = $region140
        $region139: #{tpu_custom_call.1} parent=87 // pred_region
          %4848 = vsyncadd [#allocation4], 0
          %s4849 = sshll.u32 [#allocation20], 4
          %s4850 = int_to_ptr.vmem [resolvable:$true] %s4849
          %s4851 = sshll.u32 %s17, 4
          %s4852 = int_to_ptr.hbm [resolvable:$true] %s4851
          %4857 = dma.vmem_to_hbm [thread:$0]  %s4850, 2048, %s4852, [#allocation4], 128, 128, 8
        $region140: #{tpu_custom_call.1} parent=87 // pred_fallthru
          _
        // Predicated region
        $region141: #{tpu_custom_call.1} parent=87 // pred_check
          %p4858 = pneg %p483
        $region142: #{tpu_custom_call.1} parent=87 // pred_check_branch
          %4860 = sbr.rel (%p4858) target = $region144
        $region143: #{tpu_custom_call.1} parent=87 // pred_region
          %4862 = dma.done [#allocation4], 2048
        $region144: #{tpu_custom_call.1} parent=87 // pred_fallthru
          _
      $region88: #{tpu_custom_call.1} parent=5 // pred_fallthru
        _
      %p4863 = scmp.le.s32.totalorder 2, %s38
      // Predicated region
      $region145: #{tpu_custom_call.1} parent=5 // pred_check
        %p4864 = pneg %p4863
      $region146: #{tpu_custom_call.1} parent=5 // pred_check_branch
        %4866 = sbr.rel (%p4864) target = $region148
      $region147: #{tpu_custom_call.1} parent=5 // pred_region
        %s4867 = ssub.s32 %s38, 2
      $region148: #{tpu_custom_call.1} parent=5 // pred_fallthru
        _
    $region6: #{tpu_custom_call.1} parent=1 // loop_footer
      %s42 = sadd.s32 1, %s38
    $region7: #{tpu_custom_call.1} parent=1 // loop_footer_branch
      %37 = sbr.rel target = $region3
    $region8: #{tpu_custom_call.1} parent=1 // loop_exit
      _
    %4868 = vsyncpa [#allocation3], 1
    %s4869 = scalar_lea.sflag [#allocation3], 1
    %4870 = vsyncpa %s4869, 1
    %4871 = vsyncpa [#allocation6], 1
    %4872 = vsyncpa [#allocation9], 1
    %s4873 = scalar_lea.sflag [#allocation9], 1
    %4874 = vsyncpa %s4873, 1
    %4875 = vsyncpa [#allocation12], 1
    %s4876 = scalar_lea.sflag [#allocation12], 1
    %4877 = vsyncpa %s4876, 1
    %4878 = vsyncpa [#allocation15], 1
    %s4879 = scalar_lea.sflag [#allocation15], 1
    %4880 = vsyncpa %s4879, 1
    %4881 = vsyncpa [#allocation18], 1
    %s4882 = scalar_lea.sflag [#allocation18], 1
    %4883 = vsyncpa %s4882, 1
    %4884 = vsyncpa [#allocation4], 1
    %s4885 = scalar_lea.sflag [#allocation4], 1
    %4886 = vsyncpa %s4885, 1

</llo_original>
